<compile_context>
chip_gen: v7x
topology: tpu7x:2x2x1
jax: 0.10.0
libtpu: 0.0.40
codegen_flags: <defaults>
</compile_context>

<pallas_src>
import jax
import jax.numpy as jnp
from jax.experimental import pallas as pl
from jax.experimental.pallas import tpu as pltpu

# --- small synthetic config (original: F=332, N=332, D=1024, heads=16, mlp=2048, tasks=28) ---
B, N, F = 2, 8, 32          # batch, fmri tokens, fmri feature dim
D, HEADS, MLP = 32, 4, 64   # transformer dim / heads / mlp dim
T = 8                       # text sequence length
HID = 32                    # multi-task shared hidden dim
NUM_TASKS = 28
S = N + 1                   # +1 cls token
S_PAD = ((S + 7) // 8) * 8  # token axis padded to a sublane multiple (16 here)
HD = D // HEADS
NT_PAD = 128                # lane-dense prediction width (sliced back to NUM_TASKS on host)


def _layernorm(x, g, b, eps=1e-5):
    mu = jnp.mean(x, axis=-1, keepdims=True)
    var = jnp.mean((x - mu) ** 2, axis=-1, keepdims=True)
    return (x - mu) * jax.lax.rsqrt(var + eps) * g + b


# ------------------- fused kernel: ViT block + multitask regression -------------------
def combined_kernel(fmri_ref, text_ref,
                    cls_ref, pos_ref, we_ref, be_ref,
                    ln1g_ref, ln1b_ref, wqkv_ref, wohm_ref, bo_ref,
                    ln2g_ref, ln2b_ref, w1_ref, b1_ref, w2_ref, b2_ref,
                    lnfg_ref, lnfb_ref,
                    wshf_ref, wsht_ref, bsh_ref, wh_ref, bh_ref,
                    pred_ref):
    bf16 = jnp.bfloat16

    # --- token embedding: (S_PAD, F) @ (F, D).  Row 0 of fmri_pad is a dummy zero row
    #     that is replaced by the cls token with a row-select (no concat). ---
    tok = jnp.dot(fmri_ref[...].astype(bf16), we_ref[...],
                  preferred_element_type=jnp.float32) + be_ref[...]         # (S_PAD, D)
    row_id = jax.lax.broadcasted_iota(jnp.int32, (S_PAD, 1), 0)
    is_cls = row_id == 0
    x = jnp.where(is_cls, cls_ref[...], tok) + pos_ref[...]                 # (S_PAD, D) f32

    # --- multi-head self-attention (pre-norm, residual) ---
    h = _layernorm(x, ln1g_ref[...], ln1b_ref[...])
    qkv = jnp.dot(h.astype(bf16), wqkv_ref[...],
                  preferred_element_type=jnp.float32)                       # (S_PAD, 3D) f32
    qkv_b = qkv.astype(bf16)
    key_valid = jax.lax.broadcasted_iota(jnp.int32, (1, S_PAD), 1) < S      # mask pad keys
    scale = 1.0 / (HD ** 0.5)

    attn_acc = None
    for hh in range(HEADS):                                                 # static unroll
        lo = hh * HD
        qh = qkv_b[:, lo:lo + HD]
        kh = qkv_b[:, D + lo:D + lo + HD]
        vh = qkv_b[:, 2 * D + lo:2 * D + lo + HD]
        s = jax.lax.dot_general(qh, kh, (((1,), (1,)), ((), ())),
                                preferred_element_type=jnp.float32) * scale  # (S_PAD, S_PAD)
        s = jnp.where(key_valid, s, -1e30)
        s = s - jnp.max(s, axis=-1, keepdims=True)
        p = jnp.exp(s)
        p = p * pl.reciprocal(jnp.sum(p, axis=-1, keepdims=True), approx=True)
        oh = jnp.dot(p.astype(bf16), vh, preferred_element_type=jnp.float32)  # (S_PAD, HD)
        # fold through this head's slab of Wo (leading-dim ref index, no concat)
        contrib = jnp.dot(oh.astype(bf16), wohm_ref[hh],
                          preferred_element_type=jnp.float32)               # (S_PAD, D)
        attn_acc = contrib if attn_acc is None else attn_acc + contrib
    x = x + attn_acc + bo_ref[...]

    # --- feed-forward (pre-norm, residual) ---
    h = _layernorm(x, ln2g_ref[...], ln2b_ref[...])
    m = jnp.dot(h.astype(bf16), w1_ref[...], preferred_element_type=jnp.float32) + b1_ref[...]
    m = jax.nn.gelu(m, approximate=True)  # TODO(synk): PyTorch nn.GELU default is exact erf GELU
    m = jnp.dot(m.astype(bf16), w2_ref[...], preferred_element_type=jnp.float32) + b2_ref[...]
    x = x + m
    feat = _layernorm(x, lnfg_ref[...], lnfb_ref[...])                      # (S_PAD, D)

    # --- fused multitask head (torch.mean over tokens, tile over text, shared ReLU trunk) ---
    token_valid = (row_id < S).astype(jnp.float32)                          # (S_PAD, 1)
    fmean = jnp.sum(feat * token_valid, axis=0, keepdims=True) * (1.0 / S)  # (1, D)
    # combine @ W_shared == fmean @ W_f + text_row @ W_t  (concat eliminated)
    hf = jnp.dot(fmean.astype(bf16), wshf_ref[...], preferred_element_type=jnp.float32)   # (1, HID)
    ht = jnp.dot(text_ref[...].astype(bf16), wsht_ref[...], preferred_element_type=jnp.float32)  # (T, HID)
    hsh = jnp.maximum(hf + ht + bsh_ref[...], 0.0)                          # (T, HID)
    pooled = jnp.sum(hsh, axis=0, keepdims=True) * (1.0 / T)                # (1, HID)
    pred = jnp.dot(pooled.astype(bf16), wh_ref[...],
                   preferred_element_type=jnp.float32) + bh_ref[...]        # (1, NT_PAD)
    pred_ref[...] = pred.astype(pred_ref.dtype)


# ------------------------------- wrappers / glue -------------------------------
def _const_spec(shape):
    """Full-array block, constant index map -> fetched once (grid-invariant)."""
    nd = len(shape)
    return pl.BlockSpec(shape, lambda b, _nd=nd: (0,) * _nd)


def combined_model_forward(fmri, text, params):
    f32, bf16 = jnp.float32, jnp.bfloat16

    # host-side layout prep (done once, outside the kernel)
    fmri_pad = jnp.zeros((B, S_PAD, F), f32).at[:, 1:1 + N, :].set(fmri)   # row 0 = cls slot
    pos_pad = jnp.zeros((S_PAD, D), f32).at[:S, :].set(params["pos"])
    text_row = text[1, :, :]                                               # (T, D), torch text[1]

    wo_hm = params["wo"].reshape(HEADS, HD, D).astype(bf16)                # head-major Wo slabs
    w_sh = params["mt_w_shared"]
    wh_pad = jnp.zeros((HID, NT_PAD), f32).at[:, :NUM_TASKS].set(params["mt_w_heads"]).astype(bf16)
    bh_pad = jnp.zeros((1, NT_PAD), f32).at[:, :NUM_TASKS].set(params["mt_b_heads"])

    weights = [
        params["cls"], pos_pad,
        params["we"].astype(bf16), params["be"],
        params["ln1g"], params["ln1b"],
        params["wqkv"].astype(bf16), wo_hm, params["bo"],
        params["ln2g"], params["ln2b"],
        params["w1"].astype(bf16), params["b1"],
        params["w2"].astype(bf16), params["b2"],
        params["lnfg"], params["lnfb"],
        w_sh[:D, :].astype(bf16), w_sh[D:, :].astype(bf16), params["mt_b_shared"],
        wh_pad, bh_pad,
    ]

    in_specs = [pl.BlockSpec((None, S_PAD, F), lambda b: (b, 0, 0)),
                _const_spec(text_row.shape)] + [_const_spec(w.shape) for w in weights]

    pred_pad = pl.pallas_call(
        combined_kernel,
        out_shape=jax.ShapeDtypeStruct((B, 1, NT_PAD), jnp.float32),
        grid=(B,),
        in_specs=in_specs,
        out_specs=pl.BlockSpec((None, 1, NT_PAD), lambda b: (b, 0, 0)),
        compiler_params=pltpu.CompilerParams(
            dimension_semantics=("parallel",),
            vmem_limit_bytes=32 * 1024 * 1024),
    )(fmri_pad, text_row, *weights)

    prediction = pred_pad[:, 0, :NUM_TASKS]                                # (B, NUM_TASKS)
    regress_para = params["mt_w_heads"].T                                  # (NUM_TASKS, HID)
    return prediction, regress_para


def init_params(key):
    ks = jax.random.split(key, 10)

    def nrm(k, shape, scale=0.02):
        return (scale * jax.random.normal(k, shape)).astype(jnp.float32)

    p = {}
    p["cls"] = nrm(ks[0], (1, D))
    p["pos"] = nrm(ks[1], (S, D))
    p["we"] = nrm(ks[2], (F, D))
    p["be"] = jnp.zeros((1, D), jnp.float32)
    p["ln1g"] = jnp.ones((1, D), jnp.float32)
    p["ln1b"] = jnp.zeros((1, D), jnp.float32)
    p["wqkv"] = nrm(ks[3], (D, 3 * D))
    p["wo"] = nrm(ks[4], (D, D))
    p["bo"] = jnp.zeros((1, D), jnp.float32)
    p["ln2g"] = jnp.ones((1, D), jnp.float32)
    p["ln2b"] = jnp.zeros((1, D), jnp.float32)
    p["w1"] = nrm(ks[5], (D, MLP))
    p["b1"] = jnp.zeros((1, MLP), jnp.float32)
    p["w2"] = nrm(ks[6], (MLP, D))
    p["b2"] = jnp.zeros((1, D), jnp.float32)
    p["lnfg"] = jnp.ones((1, D), jnp.float32)
    p["lnfb"] = jnp.zeros((1, D), jnp.float32)
    p["mt_w_shared"] = nrm(ks[7], (2 * D, HID))
    p["mt_b_shared"] = jnp.zeros((1, HID), jnp.float32)
    p["mt_w_heads"] = nrm(ks[8], (HID, NUM_TASKS))
    p["mt_b_heads"] = jnp.zeros((1, NUM_TASKS), jnp.float32)
    return p


if __name__ == "__main__":
    key = jax.random.PRNGKey(0)
    k1, k2, k3 = jax.random.split(key, 3)
    fmri = jax.random.normal(k1, (B, N, F), dtype=jnp.float32)
    text = jax.random.normal(k2, (2, T, D), dtype=jnp.float32)
    params = init_params(k3)

    prediction, regress_para = combined_model_forward(fmri, text, params)
    jax.block_until_ready((prediction, regress_para))

    assert prediction.shape == (B, NUM_TASKS)
    assert regress_para.shape == (NUM_TASKS, HID)
    assert bool(jnp.all(jnp.isfinite(prediction)))
    print("KERNEL_OK")
</pallas_src>

<mosaic_0001>
module attributes {stable_mosaic.version = 11 : i64} {
  func.func @combined_kernel(%arg0: i32, %arg1: memref<1x16x32xf32, #tpu.memory_space<vmem>>, %arg2: memref<8x32xf32, #tpu.memory_space<vmem>>, %arg3: memref<1x32xf32, #tpu.memory_space<vmem>>, %arg4: memref<16x32xf32, #tpu.memory_space<vmem>>, %arg5: memref<32x32xbf16, #tpu.memory_space<vmem>>, %arg6: memref<1x32xf32, #tpu.memory_space<vmem>>, %arg7: memref<1x32xf32, #tpu.memory_space<vmem>>, %arg8: memref<1x32xf32, #tpu.memory_space<vmem>>, %arg9: memref<32x96xbf16, #tpu.memory_space<vmem>>, %arg10: memref<4x8x32xbf16, #tpu.memory_space<vmem>>, %arg11: memref<1x32xf32, #tpu.memory_space<vmem>>, %arg12: memref<1x32xf32, #tpu.memory_space<vmem>>, %arg13: memref<1x32xf32, #tpu.memory_space<vmem>>, %arg14: memref<32x64xbf16, #tpu.memory_space<vmem>>, %arg15: memref<1x64xf32, #tpu.memory_space<vmem>>, %arg16: memref<64x32xbf16, #tpu.memory_space<vmem>>, %arg17: memref<1x32xf32, #tpu.memory_space<vmem>>, %arg18: memref<1x32xf32, #tpu.memory_space<vmem>>, %arg19: memref<1x32xf32, #tpu.memory_space<vmem>>, %arg20: memref<32x32xbf16, #tpu.memory_space<vmem>>, %arg21: memref<32x32xbf16, #tpu.memory_space<vmem>>, %arg22: memref<1x32xf32, #tpu.memory_space<vmem>>, %arg23: memref<32x128xbf16, #tpu.memory_space<vmem>>, %arg24: memref<1x128xf32, #tpu.memory_space<vmem>>, %arg25: memref<1x1x128xf32, #tpu.memory_space<vmem>>) attributes {dimension_semantics = [#tpu.dimension_semantics<parallel>], iteration_bounds = array<i64: 2>, scalar_prefetch = 0 : i64, scratch_operands = 0 : i64, tpu.core_type = #tpu.core_type<tc>, window_params = [{transform_indices = @transform_0, window_bounds = array<i64: 1, 16, 32>}, {pipeline_mode = #tpu.pipeline_mode<synchronous>, transform_indices = @transform_1, window_bounds = array<i64: 8, 32>}, {pipeline_mode = #tpu.pipeline_mode<synchronous>, transform_indices = @transform_2, window_bounds = array<i64: 1, 32>}, {pipeline_mode = #tpu.pipeline_mode<synchronous>, transform_indices = @transform_3, window_bounds = array<i64: 16, 32>}, {pipeline_mode = #tpu.pipeline_mode<synchronous>, transform_indices = @transform_4, window_bounds = array<i64: 32, 32>}, {pipeline_mode = #tpu.pipeline_mode<synchronous>, transform_indices = @transform_5, window_bounds = array<i64: 1, 32>}, {pipeline_mode = #tpu.pipeline_mode<synchronous>, transform_indices = @transform_6, window_bounds = array<i64: 1, 32>}, {pipeline_mode = #tpu.pipeline_mode<synchronous>, transform_indices = @transform_7, window_bounds = array<i64: 1, 32>}, {pipeline_mode = #tpu.pipeline_mode<synchronous>, transform_indices = @transform_8, window_bounds = array<i64: 32, 96>}, {pipeline_mode = #tpu.pipeline_mode<synchronous>, transform_indices = @transform_9, window_bounds = array<i64: 4, 8, 32>}, {pipeline_mode = #tpu.pipeline_mode<synchronous>, transform_indices = @transform_10, window_bounds = array<i64: 1, 32>}, {pipeline_mode = #tpu.pipeline_mode<synchronous>, transform_indices = @transform_11, window_bounds = array<i64: 1, 32>}, {pipeline_mode = #tpu.pipeline_mode<synchronous>, transform_indices = @transform_12, window_bounds = array<i64: 1, 32>}, {pipeline_mode = #tpu.pipeline_mode<synchronous>, transform_indices = @transform_13, window_bounds = array<i64: 32, 64>}, {pipeline_mode = #tpu.pipeline_mode<synchronous>, transform_indices = @transform_14, window_bounds = array<i64: 1, 64>}, {pipeline_mode = #tpu.pipeline_mode<synchronous>, transform_indices = @transform_15, window_bounds = array<i64: 64, 32>}, {pipeline_mode = #tpu.pipeline_mode<synchronous>, transform_indices = @transform_16, window_bounds = array<i64: 1, 32>}, {pipeline_mode = #tpu.pipeline_mode<synchronous>, transform_indices = @transform_17, window_bounds = array<i64: 1, 32>}, {pipeline_mode = #tpu.pipeline_mode<synchronous>, transform_indices = @transform_18, window_bounds = array<i64: 1, 32>}, {pipeline_mode = #tpu.pipeline_mode<synchronous>, transform_indices = @transform_19, window_bounds = array<i64: 32, 32>}, {pipeline_mode = #tpu.pipeline_mode<synchronous>, transform_indices = @transform_20, window_bounds = array<i64: 32, 32>}, {pipeline_mode = #tpu.pipeline_mode<synchronous>, transform_indices = @transform_21, window_bounds = array<i64: 1, 32>}, {pipeline_mode = #tpu.pipeline_mode<synchronous>, transform_indices = @transform_22, window_bounds = array<i64: 32, 128>}, {pipeline_mode = #tpu.pipeline_mode<synchronous>, transform_indices = @transform_23, window_bounds = array<i64: 1, 128>}, {transform_indices = @transform_24, window_bounds = array<i64: 1, 1, 128>}]} {
    %c0 = arith.constant 0 : index
    %c0_0 = arith.constant 0 : index
    %c0_1 = arith.constant 0 : index
    %0 = vector.load %arg1[%c0, %c0_0, %c0_1] : memref<1x16x32xf32, #tpu.memory_space<vmem>>, vector<1x16x32xf32>
    %1 = vector.shape_cast %0 : vector<1x16x32xf32> to vector<16x32xf32>
    %2 = arith.truncf %1 : vector<16x32xf32> to vector<16x32xbf16>
    %c0_2 = arith.constant 0 : index
    %c0_3 = arith.constant 0 : index
    %3 = vector.load %arg5[%c0_2, %c0_3] : memref<32x32xbf16, #tpu.memory_space<vmem>>, vector<32x32xbf16>
    %cst = arith.constant dense<0.000000e+00> : vector<16x32xf32>
    %4 = tpu.matmul %2, %3, %cst {dimension_numbers = #tpu.dot_dimension_numbers<[1], [0], [0], [1], [0, 0, 1, 1], [], []>} : vector<16x32xbf16>, vector<32x32xbf16>, vector<16x32xf32> -> vector<16x32xf32>
    %c0_4 = arith.constant 0 : index
    %c0_5 = arith.constant 0 : index
    %5 = vector.load %arg6[%c0_4, %c0_5] : memref<1x32xf32, #tpu.memory_space<vmem>>, vector<1x32xf32>
    %6 = vector.broadcast %5 : vector<1x32xf32> to vector<16x32xf32>
    %7 = arith.addf %4, %6 : vector<16x32xf32>
    %8 = tpu.iota {dimensions = array<i32: 0>} : vector<16x1xi32>
    %c0_i32 = arith.constant 0 : i32
    %9 = vector.broadcast %c0_i32 : i32 to vector<16x1xi32>
    %10 = arith.cmpi eq, %8, %9 : vector<16x1xi32>
    %c0_6 = arith.constant 0 : index
    %c0_7 = arith.constant 0 : index
    %11 = vector.load %arg3[%c0_6, %c0_7] : memref<1x32xf32, #tpu.memory_space<vmem>>, vector<1x32xf32>
    %12 = vector.shape_cast %10 : vector<16x1xi1> to vector<16x1xi1>
    %13 = vector.broadcast %12 : vector<16x1xi1> to vector<16x32xi1>
    %14 = vector.shape_cast %11 : vector<1x32xf32> to vector<1x32xf32>
    %15 = vector.broadcast %14 : vector<1x32xf32> to vector<16x32xf32>
    %16 = arith.select %13, %15, %7 : vector<16x32xi1>, vector<16x32xf32>
    %c0_8 = arith.constant 0 : index
    %c0_9 = arith.constant 0 : index
    %17 = vector.load %arg4[%c0_8, %c0_9] : memref<16x32xf32, #tpu.memory_space<vmem>>, vector<16x32xf32>
    %18 = arith.addf %16, %17 : vector<16x32xf32>
    %c0_10 = arith.constant 0 : index
    %c0_11 = arith.constant 0 : index
    %19 = vector.load %arg7[%c0_10, %c0_11] : memref<1x32xf32, #tpu.memory_space<vmem>>, vector<1x32xf32>
    %c0_12 = arith.constant 0 : index
    %c0_13 = arith.constant 0 : index
    %20 = vector.load %arg8[%c0_12, %c0_13] : memref<1x32xf32, #tpu.memory_space<vmem>>, vector<1x32xf32>
    %cst_14 = arith.constant dense<0.000000e+00> : vector<16xf32>
    %21 = vector.multi_reduction <add>, %18, %cst_14 [1] : vector<16x32xf32> to vector<16xf32>
    %22 = vector.shape_cast %21 : vector<16xf32> to vector<16x1xf32>
    %cst_15 = arith.constant 3.200000e+01 : f32
    %23 = vector.broadcast %cst_15 : f32 to vector<16x1xf32>
    %24 = arith.divf %22, %23 : vector<16x1xf32>
    %25 = vector.broadcast %24 : vector<16x1xf32> to vector<16x32xf32>
    %26 = arith.subf %18, %25 : vector<16x32xf32>
    %27 = arith.mulf %26, %26 : vector<16x32xf32>
    %cst_16 = arith.constant dense<0.000000e+00> : vector<16xf32>
    %28 = vector.multi_reduction <add>, %27, %cst_16 [1] : vector<16x32xf32> to vector<16xf32>
    %29 = vector.shape_cast %28 : vector<16xf32> to vector<16x1xf32>
    %cst_17 = arith.constant 3.200000e+01 : f32
    %30 = vector.broadcast %cst_17 : f32 to vector<16x1xf32>
    %31 = arith.divf %29, %30 : vector<16x1xf32>
    %32 = vector.broadcast %24 : vector<16x1xf32> to vector<16x32xf32>
    %33 = arith.subf %18, %32 : vector<16x32xf32>
    %cst_18 = arith.constant 9.99999974E-6 : f32
    %34 = vector.broadcast %cst_18 : f32 to vector<16x1xf32>
    %35 = arith.addf %31, %34 : vector<16x1xf32>
    %36 = math.rsqrt %35 : vector<16x1xf32>
    %37 = vector.broadcast %36 : vector<16x1xf32> to vector<16x32xf32>
    %38 = arith.mulf %33, %37 : vector<16x32xf32>
    %39 = vector.broadcast %19 : vector<1x32xf32> to vector<16x32xf32>
    %40 = arith.mulf %38, %39 : vector<16x32xf32>
    %41 = vector.broadcast %20 : vector<1x32xf32> to vector<16x32xf32>
    %42 = arith.addf %40, %41 : vector<16x32xf32>
    %43 = arith.truncf %42 : vector<16x32xf32> to vector<16x32xbf16>
    %c0_19 = arith.constant 0 : index
    %c0_20 = arith.constant 0 : index
    %44 = vector.load %arg9[%c0_19, %c0_20] : memref<32x96xbf16, #tpu.memory_space<vmem>>, vector<32x96xbf16>
    %cst_21 = arith.constant dense<0.000000e+00> : vector<16x96xf32>
    %45 = tpu.matmul %43, %44, %cst_21 {dimension_numbers = #tpu.dot_dimension_numbers<[1], [0], [0], [1], [0, 0, 1, 1], [], []>} : vector<16x32xbf16>, vector<32x96xbf16>, vector<16x96xf32> -> vector<16x96xf32>
    %46 = arith.truncf %45 : vector<16x96xf32> to vector<16x96xbf16>
    %47 = tpu.iota {dimensions = array<i32: 1>} : vector<1x16xi32>
    %c9_i32 = arith.constant 9 : i32
    %48 = vector.broadcast %c9_i32 : i32 to vector<1x16xi32>
    %49 = arith.cmpi slt, %47, %48 : vector<1x16xi32>
    %50 = vector.extract_strided_slice %46 {offsets = [0, 0], sizes = [16, 8], strides = [1, 1]} : vector<16x96xbf16> to vector<16x8xbf16>
    %51 = vector.extract_strided_slice %46 {offsets = [0, 32], sizes = [16, 8], strides = [1, 1]} : vector<16x96xbf16> to vector<16x8xbf16>
    %52 = vector.extract_strided_slice %46 {offsets = [0, 64], sizes = [16, 8], strides = [1, 1]} : vector<16x96xbf16> to vector<16x8xbf16>
    %cst_22 = arith.constant dense<0.000000e+00> : vector<16x16xf32>
    %53 = tpu.matmul %50, %51, %cst_22 {dimension_numbers = #tpu.dot_dimension_numbers<[1], [1], [0], [0], [0, 0, 1, 0], [], []>} : vector<16x8xbf16>, vector<16x8xbf16>, vector<16x16xf32> -> vector<16x16xf32>
    %cst_23 = arith.constant 0.353553385 : f32
    %54 = vector.broadcast %cst_23 : f32 to vector<16x16xf32>
    %55 = arith.mulf %53, %54 : vector<16x16xf32>
    %cst_24 = arith.constant -1.000000e+30 : f32
    %56 = vector.shape_cast %49 : vector<1x16xi1> to vector<1x16xi1>
    %57 = vector.broadcast %56 : vector<1x16xi1> to vector<16x16xi1>
    %58 = vector.broadcast %cst_24 : f32 to vector<16x16xf32>
    %59 = arith.select %57, %55, %58 : vector<16x16xi1>, vector<16x16xf32>
    %cst_25 = arith.constant dense<0xFF800000> : vector<16xf32>
    %60 = vector.multi_reduction <maximumf>, %59, %cst_25 [1] : vector<16x16xf32> to vector<16xf32>
    %61 = vector.shape_cast %60 : vector<16xf32> to vector<16x1xf32>
    %62 = vector.broadcast %61 : vector<16x1xf32> to vector<16x16xf32>
    %63 = arith.subf %59, %62 : vector<16x16xf32>
    %64 = math.exp %63 : vector<16x16xf32>
    %cst_26 = arith.constant dense<0.000000e+00> : vector<16xf32>
    %65 = vector.multi_reduction <add>, %64, %cst_26 [1] : vector<16x16xf32> to vector<16xf32>
    %66 = vector.shape_cast %65 : vector<16xf32> to vector<16x1xf32>
    %67 = tpu.reciprocal %66 {approx = true} : vector<16x1xf32> -> vector<16x1xf32>
    %68 = vector.broadcast %67 : vector<16x1xf32> to vector<16x16xf32>
    %69 = arith.mulf %64, %68 : vector<16x16xf32>
    %70 = arith.truncf %69 : vector<16x16xf32> to vector<16x16xbf16>
    %cst_27 = arith.constant dense<0.000000e+00> : vector<16x8xf32>
    %71 = tpu.matmul %70, %52, %cst_27 {dimension_numbers = #tpu.dot_dimension_numbers<[1], [0], [0], [1], [0, 0, 1, 1], [], []>} : vector<16x16xbf16>, vector<16x8xbf16>, vector<16x8xf32> -> vector<16x8xf32>
    %72 = arith.truncf %71 : vector<16x8xf32> to vector<16x8xbf16>
    %c0_28 = arith.constant 0 : index
    %c0_29 = arith.constant 0 : index
    %c0_30 = arith.constant 0 : index
    %73 = vector.load %arg10[%c0_28, %c0_29, %c0_30] : memref<4x8x32xbf16, #tpu.memory_space<vmem>>, vector<1x8x32xbf16>
    %74 = vector.shape_cast %73 : vector<1x8x32xbf16> to vector<8x32xbf16>
    %cst_31 = arith.constant dense<0.000000e+00> : vector<16x32xf32>
    %75 = tpu.matmul %72, %74, %cst_31 {dimension_numbers = #tpu.dot_dimension_numbers<[1], [0], [0], [1], [0, 0, 1, 1], [], []>} : vector<16x8xbf16>, vector<8x32xbf16>, vector<16x32xf32> -> vector<16x32xf32>
    %76 = vector.extract_strided_slice %46 {offsets = [0, 8], sizes = [16, 8], strides = [1, 1]} : vector<16x96xbf16> to vector<16x8xbf16>
    %77 = vector.extract_strided_slice %46 {offsets = [0, 40], sizes = [16, 8], strides = [1, 1]} : vector<16x96xbf16> to vector<16x8xbf16>
    %78 = vector.extract_strided_slice %46 {offsets = [0, 72], sizes = [16, 8], strides = [1, 1]} : vector<16x96xbf16> to vector<16x8xbf16>
    %cst_32 = arith.constant dense<0.000000e+00> : vector<16x16xf32>
    %79 = tpu.matmul %76, %77, %cst_32 {dimension_numbers = #tpu.dot_dimension_numbers<[1], [1], [0], [0], [0, 0, 1, 0], [], []>} : vector<16x8xbf16>, vector<16x8xbf16>, vector<16x16xf32> -> vector<16x16xf32>
    %cst_33 = arith.constant 0.353553385 : f32
    %80 = vector.broadcast %cst_33 : f32 to vector<16x16xf32>
    %81 = arith.mulf %79, %80 : vector<16x16xf32>
    %cst_34 = arith.constant -1.000000e+30 : f32
    %82 = vector.shape_cast %49 : vector<1x16xi1> to vector<1x16xi1>
    %83 = vector.broadcast %82 : vector<1x16xi1> to vector<16x16xi1>
    %84 = vector.broadcast %cst_34 : f32 to vector<16x16xf32>
    %85 = arith.select %83, %81, %84 : vector<16x16xi1>, vector<16x16xf32>
    %cst_35 = arith.constant dense<0xFF800000> : vector<16xf32>
    %86 = vector.multi_reduction <maximumf>, %85, %cst_35 [1] : vector<16x16xf32> to vector<16xf32>
    %87 = vector.shape_cast %86 : vector<16xf32> to vector<16x1xf32>
    %88 = vector.broadcast %87 : vector<16x1xf32> to vector<16x16xf32>
    %89 = arith.subf %85, %88 : vector<16x16xf32>
    %90 = math.exp %89 : vector<16x16xf32>
    %cst_36 = arith.constant dense<0.000000e+00> : vector<16xf32>
    %91 = vector.multi_reduction <add>, %90, %cst_36 [1] : vector<16x16xf32> to vector<16xf32>
    %92 = vector.shape_cast %91 : vector<16xf32> to vector<16x1xf32>
    %93 = tpu.reciprocal %92 {approx = true} : vector<16x1xf32> -> vector<16x1xf32>
    %94 = vector.broadcast %93 : vector<16x1xf32> to vector<16x16xf32>
    %95 = arith.mulf %90, %94 : vector<16x16xf32>
    %96 = arith.truncf %95 : vector<16x16xf32> to vector<16x16xbf16>
    %cst_37 = arith.constant dense<0.000000e+00> : vector<16x8xf32>
    %97 = tpu.matmul %96, %78, %cst_37 {dimension_numbers = #tpu.dot_dimension_numbers<[1], [0], [0], [1], [0, 0, 1, 1], [], []>} : vector<16x16xbf16>, vector<16x8xbf16>, vector<16x8xf32> -> vector<16x8xf32>
    %98 = arith.truncf %97 : vector<16x8xf32> to vector<16x8xbf16>
    %c1 = arith.constant 1 : index
    %c0_38 = arith.constant 0 : index
    %c0_39 = arith.constant 0 : index
    %99 = vector.load %arg10[%c1, %c0_38, %c0_39] : memref<4x8x32xbf16, #tpu.memory_space<vmem>>, vector<1x8x32xbf16>
    %100 = vector.shape_cast %99 : vector<1x8x32xbf16> to vector<8x32xbf16>
    %cst_40 = arith.constant dense<0.000000e+00> : vector<16x32xf32>
    %101 = tpu.matmul %98, %100, %cst_40 {dimension_numbers = #tpu.dot_dimension_numbers<[1], [0], [0], [1], [0, 0, 1, 1], [], []>} : vector<16x8xbf16>, vector<8x32xbf16>, vector<16x32xf32> -> vector<16x32xf32>
    %102 = arith.addf %75, %101 : vector<16x32xf32>
    %103 = vector.extract_strided_slice %46 {offsets = [0, 16], sizes = [16, 8], strides = [1, 1]} : vector<16x96xbf16> to vector<16x8xbf16>
    %104 = vector.extract_strided_slice %46 {offsets = [0, 48], sizes = [16, 8], strides = [1, 1]} : vector<16x96xbf16> to vector<16x8xbf16>
    %105 = vector.extract_strided_slice %46 {offsets = [0, 80], sizes = [16, 8], strides = [1, 1]} : vector<16x96xbf16> to vector<16x8xbf16>
    %cst_41 = arith.constant dense<0.000000e+00> : vector<16x16xf32>
    %106 = tpu.matmul %103, %104, %cst_41 {dimension_numbers = #tpu.dot_dimension_numbers<[1], [1], [0], [0], [0, 0, 1, 0], [], []>} : vector<16x8xbf16>, vector<16x8xbf16>, vector<16x16xf32> -> vector<16x16xf32>
    %cst_42 = arith.constant 0.353553385 : f32
    %107 = vector.broadcast %cst_42 : f32 to vector<16x16xf32>
    %108 = arith.mulf %106, %107 : vector<16x16xf32>
    %cst_43 = arith.constant -1.000000e+30 : f32
    %109 = vector.shape_cast %49 : vector<1x16xi1> to vector<1x16xi1>
    %110 = vector.broadcast %109 : vector<1x16xi1> to vector<16x16xi1>
    %111 = vector.broadcast %cst_43 : f32 to vector<16x16xf32>
    %112 = arith.select %110, %108, %111 : vector<16x16xi1>, vector<16x16xf32>
    %cst_44 = arith.constant dense<0xFF800000> : vector<16xf32>
    %113 = vector.multi_reduction <maximumf>, %112, %cst_44 [1] : vector<16x16xf32> to vector<16xf32>
    %114 = vector.shape_cast %113 : vector<16xf32> to vector<16x1xf32>
    %115 = vector.broadcast %114 : vector<16x1xf32> to vector<16x16xf32>
    %116 = arith.subf %112, %115 : vector<16x16xf32>
    %117 = math.exp %116 : vector<16x16xf32>
    %cst_45 = arith.constant dense<0.000000e+00> : vector<16xf32>
    %118 = vector.multi_reduction <add>, %117, %cst_45 [1] : vector<16x16xf32> to vector<16xf32>
    %119 = vector.shape_cast %118 : vector<16xf32> to vector<16x1xf32>
    %120 = tpu.reciprocal %119 {approx = true} : vector<16x1xf32> -> vector<16x1xf32>
    %121 = vector.broadcast %120 : vector<16x1xf32> to vector<16x16xf32>
    %122 = arith.mulf %117, %121 : vector<16x16xf32>
    %123 = arith.truncf %122 : vector<16x16xf32> to vector<16x16xbf16>
    %cst_46 = arith.constant dense<0.000000e+00> : vector<16x8xf32>
    %124 = tpu.matmul %123, %105, %cst_46 {dimension_numbers = #tpu.dot_dimension_numbers<[1], [0], [0], [1], [0, 0, 1, 1], [], []>} : vector<16x16xbf16>, vector<16x8xbf16>, vector<16x8xf32> -> vector<16x8xf32>
    %125 = arith.truncf %124 : vector<16x8xf32> to vector<16x8xbf16>
    %c2 = arith.constant 2 : index
    %c0_47 = arith.constant 0 : index
    %c0_48 = arith.constant 0 : index
    %126 = vector.load %arg10[%c2, %c0_47, %c0_48] : memref<4x8x32xbf16, #tpu.memory_space<vmem>>, vector<1x8x32xbf16>
    %127 = vector.shape_cast %126 : vector<1x8x32xbf16> to vector<8x32xbf16>
    %cst_49 = arith.constant dense<0.000000e+00> : vector<16x32xf32>
    %128 = tpu.matmul %125, %127, %cst_49 {dimension_numbers = #tpu.dot_dimension_numbers<[1], [0], [0], [1], [0, 0, 1, 1], [], []>} : vector<16x8xbf16>, vector<8x32xbf16>, vector<16x32xf32> -> vector<16x32xf32>
    %129 = arith.addf %102, %128 : vector<16x32xf32>
    %130 = vector.extract_strided_slice %46 {offsets = [0, 24], sizes = [16, 8], strides = [1, 1]} : vector<16x96xbf16> to vector<16x8xbf16>
    %131 = vector.extract_strided_slice %46 {offsets = [0, 56], sizes = [16, 8], strides = [1, 1]} : vector<16x96xbf16> to vector<16x8xbf16>
    %132 = vector.extract_strided_slice %46 {offsets = [0, 88], sizes = [16, 8], strides = [1, 1]} : vector<16x96xbf16> to vector<16x8xbf16>
    %cst_50 = arith.constant dense<0.000000e+00> : vector<16x16xf32>
    %133 = tpu.matmul %130, %131, %cst_50 {dimension_numbers = #tpu.dot_dimension_numbers<[1], [1], [0], [0], [0, 0, 1, 0], [], []>} : vector<16x8xbf16>, vector<16x8xbf16>, vector<16x16xf32> -> vector<16x16xf32>
    %cst_51 = arith.constant 0.353553385 : f32
    %134 = vector.broadcast %cst_51 : f32 to vector<16x16xf32>
    %135 = arith.mulf %133, %134 : vector<16x16xf32>
    %cst_52 = arith.constant -1.000000e+30 : f32
    %136 = vector.shape_cast %49 : vector<1x16xi1> to vector<1x16xi1>
    %137 = vector.broadcast %136 : vector<1x16xi1> to vector<16x16xi1>
    %138 = vector.broadcast %cst_52 : f32 to vector<16x16xf32>
    %139 = arith.select %137, %135, %138 : vector<16x16xi1>, vector<16x16xf32>
    %cst_53 = arith.constant dense<0xFF800000> : vector<16xf32>
    %140 = vector.multi_reduction <maximumf>, %139, %cst_53 [1] : vector<16x16xf32> to vector<16xf32>
    %141 = vector.shape_cast %140 : vector<16xf32> to vector<16x1xf32>
    %142 = vector.broadcast %141 : vector<16x1xf32> to vector<16x16xf32>
    %143 = arith.subf %139, %142 : vector<16x16xf32>
    %144 = math.exp %143 : vector<16x16xf32>
    %cst_54 = arith.constant dense<0.000000e+00> : vector<16xf32>
    %145 = vector.multi_reduction <add>, %144, %cst_54 [1] : vector<16x16xf32> to vector<16xf32>
    %146 = vector.shape_cast %145 : vector<16xf32> to vector<16x1xf32>
    %147 = tpu.reciprocal %146 {approx = true} : vector<16x1xf32> -> vector<16x1xf32>
    %148 = vector.broadcast %147 : vector<16x1xf32> to vector<16x16xf32>
    %149 = arith.mulf %144, %148 : vector<16x16xf32>
    %150 = arith.truncf %149 : vector<16x16xf32> to vector<16x16xbf16>
    %cst_55 = arith.constant dense<0.000000e+00> : vector<16x8xf32>
    %151 = tpu.matmul %150, %132, %cst_55 {dimension_numbers = #tpu.dot_dimension_numbers<[1], [0], [0], [1], [0, 0, 1, 1], [], []>} : vector<16x16xbf16>, vector<16x8xbf16>, vector<16x8xf32> -> vector<16x8xf32>
    %152 = arith.truncf %151 : vector<16x8xf32> to vector<16x8xbf16>
    %c3 = arith.constant 3 : index
    %c0_56 = arith.constant 0 : index
    %c0_57 = arith.constant 0 : index
    %153 = vector.load %arg10[%c3, %c0_56, %c0_57] : memref<4x8x32xbf16, #tpu.memory_space<vmem>>, vector<1x8x32xbf16>
    %154 = vector.shape_cast %153 : vector<1x8x32xbf16> to vector<8x32xbf16>
    %cst_58 = arith.constant dense<0.000000e+00> : vector<16x32xf32>
    %155 = tpu.matmul %152, %154, %cst_58 {dimension_numbers = #tpu.dot_dimension_numbers<[1], [0], [0], [1], [0, 0, 1, 1], [], []>} : vector<16x8xbf16>, vector<8x32xbf16>, vector<16x32xf32> -> vector<16x32xf32>
    %156 = arith.addf %129, %155 : vector<16x32xf32>
    %157 = arith.addf %18, %156 : vector<16x32xf32>
    %c0_59 = arith.constant 0 : index
    %c0_60 = arith.constant 0 : index
    %158 = vector.load %arg11[%c0_59, %c0_60] : memref<1x32xf32, #tpu.memory_space<vmem>>, vector<1x32xf32>
    %159 = vector.broadcast %158 : vector<1x32xf32> to vector<16x32xf32>
    %160 = arith.addf %157, %159 : vector<16x32xf32>
    %c0_61 = arith.constant 0 : index
    %c0_62 = arith.constant 0 : index
    %161 = vector.load %arg12[%c0_61, %c0_62] : memref<1x32xf32, #tpu.memory_space<vmem>>, vector<1x32xf32>
    %c0_63 = arith.constant 0 : index
    %c0_64 = arith.constant 0 : index
    %162 = vector.load %arg13[%c0_63, %c0_64] : memref<1x32xf32, #tpu.memory_space<vmem>>, vector<1x32xf32>
    %cst_65 = arith.constant dense<0.000000e+00> : vector<16xf32>
    %163 = vector.multi_reduction <add>, %160, %cst_65 [1] : vector<16x32xf32> to vector<16xf32>
    %164 = vector.shape_cast %163 : vector<16xf32> to vector<16x1xf32>
    %cst_66 = arith.constant 3.200000e+01 : f32
    %165 = vector.broadcast %cst_66 : f32 to vector<16x1xf32>
    %166 = arith.divf %164, %165 : vector<16x1xf32>
    %167 = vector.broadcast %166 : vector<16x1xf32> to vector<16x32xf32>
    %168 = arith.subf %160, %167 : vector<16x32xf32>
    %169 = arith.mulf %168, %168 : vector<16x32xf32>
    %cst_67 = arith.constant dense<0.000000e+00> : vector<16xf32>
    %170 = vector.multi_reduction <add>, %169, %cst_67 [1] : vector<16x32xf32> to vector<16xf32>
    %171 = vector.shape_cast %170 : vector<16xf32> to vector<16x1xf32>
    %cst_68 = arith.constant 3.200000e+01 : f32
    %172 = vector.broadcast %cst_68 : f32 to vector<16x1xf32>
    %173 = arith.divf %171, %172 : vector<16x1xf32>
    %174 = vector.broadcast %166 : vector<16x1xf32> to vector<16x32xf32>
    %175 = arith.subf %160, %174 : vector<16x32xf32>
    %cst_69 = arith.constant 9.99999974E-6 : f32
    %176 = vector.broadcast %cst_69 : f32 to vector<16x1xf32>
    %177 = arith.addf %173, %176 : vector<16x1xf32>
    %178 = math.rsqrt %177 : vector<16x1xf32>
    %179 = vector.broadcast %178 : vector<16x1xf32> to vector<16x32xf32>
    %180 = arith.mulf %175, %179 : vector<16x32xf32>
    %181 = vector.broadcast %161 : vector<1x32xf32> to vector<16x32xf32>
    %182 = arith.mulf %180, %181 : vector<16x32xf32>
    %183 = vector.broadcast %162 : vector<1x32xf32> to vector<16x32xf32>
    %184 = arith.addf %182, %183 : vector<16x32xf32>
    %185 = arith.truncf %184 : vector<16x32xf32> to vector<16x32xbf16>
    %c0_70 = arith.constant 0 : index
    %c0_71 = arith.constant 0 : index
    %186 = vector.load %arg14[%c0_70, %c0_71] : memref<32x64xbf16, #tpu.memory_space<vmem>>, vector<32x64xbf16>
    %cst_72 = arith.constant dense<0.000000e+00> : vector<16x64xf32>
    %187 = tpu.matmul %185, %186, %cst_72 {dimension_numbers = #tpu.dot_dimension_numbers<[1], [0], [0], [1], [0, 0, 1, 1], [], []>} : vector<16x32xbf16>, vector<32x64xbf16>, vector<16x64xf32> -> vector<16x64xf32>
    %c0_73 = arith.constant 0 : index
    %c0_74 = arith.constant 0 : index
    %188 = vector.load %arg15[%c0_73, %c0_74] : memref<1x64xf32, #tpu.memory_space<vmem>>, vector<1x64xf32>
    %189 = vector.broadcast %188 : vector<1x64xf32> to vector<16x64xf32>
    %190 = arith.addf %187, %189 : vector<16x64xf32>
    %191 = arith.mulf %190, %190 : vector<16x64xf32>
    %192 = arith.mulf %190, %191 : vector<16x64xf32>
    %cst_75 = arith.constant 4.471500e-02 : f32
    %193 = vector.broadcast %cst_75 : f32 to vector<16x64xf32>
    %194 = arith.mulf %193, %192 : vector<16x64xf32>
    %195 = arith.addf %190, %194 : vector<16x64xf32>
    %cst_76 = arith.constant 0.797884583 : f32
    %196 = vector.broadcast %cst_76 : f32 to vector<16x64xf32>
    %197 = arith.mulf %196, %195 : vector<16x64xf32>
    %198 = math.tanh %197 : vector<16x64xf32>
    %cst_77 = arith.constant 1.000000e+00 : f32
    %199 = vector.broadcast %cst_77 : f32 to vector<16x64xf32>
    %200 = arith.addf %199, %198 : vector<16x64xf32>
    %cst_78 = arith.constant 5.000000e-01 : f32
    %201 = vector.broadcast %cst_78 : f32 to vector<16x64xf32>
    %202 = arith.mulf %201, %200 : vector<16x64xf32>
    %203 = arith.mulf %190, %202 : vector<16x64xf32>
    %204 = arith.truncf %203 : vector<16x64xf32> to vector<16x64xbf16>
    %c0_79 = arith.constant 0 : index
    %c0_80 = arith.constant 0 : index
    %205 = vector.load %arg16[%c0_79, %c0_80] : memref<64x32xbf16, #tpu.memory_space<vmem>>, vector<64x32xbf16>
    %cst_81 = arith.constant dense<0.000000e+00> : vector<16x32xf32>
    %206 = tpu.matmul %204, %205, %cst_81 {dimension_numbers = #tpu.dot_dimension_numbers<[1], [0], [0], [1], [0, 0, 1, 1], [], []>} : vector<16x64xbf16>, vector<64x32xbf16>, vector<16x32xf32> -> vector<16x32xf32>
    %c0_82 = arith.constant 0 : index
    %c0_83 = arith.constant 0 : index
    %207 = vector.load %arg17[%c0_82, %c0_83] : memref<1x32xf32, #tpu.memory_space<vmem>>, vector<1x32xf32>
    %208 = vector.broadcast %207 : vector<1x32xf32> to vector<16x32xf32>
    %209 = arith.addf %206, %208 : vector<16x32xf32>
    %210 = arith.addf %160, %209 : vector<16x32xf32>
    %c0_84 = arith.constant 0 : index
    %c0_85 = arith.constant 0 : index
    %211 = vector.load %arg18[%c0_84, %c0_85] : memref<1x32xf32, #tpu.memory_space<vmem>>, vector<1x32xf32>
    %c0_86 = arith.constant 0 : index
    %c0_87 = arith.constant 0 : index
    %212 = vector.load %arg19[%c0_86, %c0_87] : memref<1x32xf32, #tpu.memory_space<vmem>>, vector<1x32xf32>
    %cst_88 = arith.constant dense<0.000000e+00> : vector<16xf32>
    %213 = vector.multi_reduction <add>, %210, %cst_88 [1] : vector<16x32xf32> to vector<16xf32>
    %214 = vector.shape_cast %213 : vector<16xf32> to vector<16x1xf32>
    %cst_89 = arith.constant 3.200000e+01 : f32
    %215 = vector.broadcast %cst_89 : f32 to vector<16x1xf32>
    %216 = arith.divf %214, %215 : vector<16x1xf32>
    %217 = vector.broadcast %216 : vector<16x1xf32> to vector<16x32xf32>
    %218 = arith.subf %210, %217 : vector<16x32xf32>
    %219 = arith.mulf %218, %218 : vector<16x32xf32>
    %cst_90 = arith.constant dense<0.000000e+00> : vector<16xf32>
    %220 = vector.multi_reduction <add>, %219, %cst_90 [1] : vector<16x32xf32> to vector<16xf32>
    %221 = vector.shape_cast %220 : vector<16xf32> to vector<16x1xf32>
    %cst_91 = arith.constant 3.200000e+01 : f32
    %222 = vector.broadcast %cst_91 : f32 to vector<16x1xf32>
    %223 = arith.divf %221, %222 : vector<16x1xf32>
    %224 = vector.broadcast %216 : vector<16x1xf32> to vector<16x32xf32>
    %225 = arith.subf %210, %224 : vector<16x32xf32>
    %cst_92 = arith.constant 9.99999974E-6 : f32
    %226 = vector.broadcast %cst_92 : f32 to vector<16x1xf32>
    %227 = arith.addf %223, %226 : vector<16x1xf32>
    %228 = math.rsqrt %227 : vector<16x1xf32>
    %229 = vector.broadcast %228 : vector<16x1xf32> to vector<16x32xf32>
    %230 = arith.mulf %225, %229 : vector<16x32xf32>
    %231 = vector.broadcast %211 : vector<1x32xf32> to vector<16x32xf32>
    %232 = arith.mulf %230, %231 : vector<16x32xf32>
    %233 = vector.broadcast %212 : vector<1x32xf32> to vector<16x32xf32>
    %234 = arith.addf %232, %233 : vector<16x32xf32>
    %c9_i32_93 = arith.constant 9 : i32
    %235 = vector.broadcast %c9_i32_93 : i32 to vector<16x1xi32>
    %236 = arith.cmpi slt, %8, %235 : vector<16x1xi32>
    %237 = arith.extui %236 : vector<16x1xi1> to vector<16x1xi32>
    %238 = arith.sitofp %237 : vector<16x1xi32> to vector<16x1xf32>
    %239 = vector.broadcast %238 : vector<16x1xf32> to vector<16x32xf32>
    %240 = arith.mulf %234, %239 : vector<16x32xf32>
    %cst_94 = arith.constant dense<0.000000e+00> : vector<32xf32>
    %241 = vector.multi_reduction <add>, %240, %cst_94 [0] : vector<16x32xf32> to vector<32xf32>
    %242 = vector.shape_cast %241 : vector<32xf32> to vector<1x32xf32>
    %cst_95 = arith.constant 0.111111112 : f32
    %243 = vector.broadcast %cst_95 : f32 to vector<1x32xf32>
    %244 = arith.mulf %242, %243 : vector<1x32xf32>
    %245 = arith.truncf %244 : vector<1x32xf32> to vector<1x32xbf16>
    %c0_96 = arith.constant 0 : index
    %c0_97 = arith.constant 0 : index
    %246 = vector.load %arg20[%c0_96, %c0_97] : memref<32x32xbf16, #tpu.memory_space<vmem>>, vector<32x32xbf16>
    %cst_98 = arith.constant dense<0.000000e+00> : vector<1x32xf32>
    %247 = tpu.matmul %245, %246, %cst_98 {dimension_numbers = #tpu.dot_dimension_numbers<[1], [0], [0], [1], [0, 0, 1, 1], [], []>} : vector<1x32xbf16>, vector<32x32xbf16>, vector<1x32xf32> -> vector<1x32xf32>
    %c0_99 = arith.constant 0 : index
    %c0_100 = arith.constant 0 : index
    %248 = vector.load %arg2[%c0_99, %c0_100] : memref<8x32xf32, #tpu.memory_space<vmem>>, vector<8x32xf32>
    %249 = arith.truncf %248 : vector<8x32xf32> to vector<8x32xbf16>
    %c0_101 = arith.constant 0 : index
    %c0_102 = arith.constant 0 : index
    %250 = vector.load %arg21[%c0_101, %c0_102] : memref<32x32xbf16, #tpu.memory_space<vmem>>, vector<32x32xbf16>
    %cst_103 = arith.constant dense<0.000000e+00> : vector<8x32xf32>
    %251 = tpu.matmul %249, %250, %cst_103 {dimension_numbers = #tpu.dot_dimension_numbers<[1], [0], [0], [1], [0, 0, 1, 1], [], []>} : vector<8x32xbf16>, vector<32x32xbf16>, vector<8x32xf32> -> vector<8x32xf32>
    %252 = vector.broadcast %247 : vector<1x32xf32> to vector<8x32xf32>
    %253 = arith.addf %252, %251 : vector<8x32xf32>
    %c0_104 = arith.constant 0 : index
    %c0_105 = arith.constant 0 : index
    %254 = vector.load %arg22[%c0_104, %c0_105] : memref<1x32xf32, #tpu.memory_space<vmem>>, vector<1x32xf32>
    %255 = vector.broadcast %254 : vector<1x32xf32> to vector<8x32xf32>
    %256 = arith.addf %253, %255 : vector<8x32xf32>
    %cst_106 = arith.constant 0.000000e+00 : f32
    %257 = vector.broadcast %cst_106 : f32 to vector<8x32xf32>
    %258 = arith.maximumf %256, %257 : vector<8x32xf32>
    %cst_107 = arith.constant dense<0.000000e+00> : vector<32xf32>
    %259 = vector.multi_reduction <add>, %258, %cst_107 [0] : vector<8x32xf32> to vector<32xf32>
    %260 = vector.shape_cast %259 : vector<32xf32> to vector<1x32xf32>
    %cst_108 = arith.constant 1.250000e-01 : f32
    %261 = vector.broadcast %cst_108 : f32 to vector<1x32xf32>
    %262 = arith.mulf %260, %261 : vector<1x32xf32>
    %263 = arith.truncf %262 : vector<1x32xf32> to vector<1x32xbf16>
    %c0_109 = arith.constant 0 : index
    %c0_110 = arith.constant 0 : index
    %264 = vector.load %arg23[%c0_109, %c0_110] : memref<32x128xbf16, #tpu.memory_space<vmem>>, vector<32x128xbf16>
    %cst_111 = arith.constant dense<0.000000e+00> : vector<1x128xf32>
    %265 = tpu.matmul %263, %264, %cst_111 {dimension_numbers = #tpu.dot_dimension_numbers<[1], [0], [0], [1], [0, 0, 1, 1], [], []>} : vector<1x32xbf16>, vector<32x128xbf16>, vector<1x128xf32> -> vector<1x128xf32>
    %c0_112 = arith.constant 0 : index
    %c0_113 = arith.constant 0 : index
    %266 = vector.load %arg24[%c0_112, %c0_113] : memref<1x128xf32, #tpu.memory_space<vmem>>, vector<1x128xf32>
    %267 = arith.addf %265, %266 : vector<1x128xf32>
    %c0_114 = arith.constant 0 : index
    %c0_115 = arith.constant 0 : index
    %c0_116 = arith.constant 0 : index
    %268 = vector.load %arg25[%c0_114, %c0_115, %c0_116] : memref<1x1x128xf32, #tpu.memory_space<vmem>>, vector<1x1x128xf32>
    %269 = vector.shape_cast %268 : vector<1x1x128xf32> to vector<1x128xf32>
    %270 = vector.shape_cast %267 : vector<1x128xf32> to vector<1x1x128xf32>
    tpu.vector_store %arg25[%c0_114, %c0_115, %c0_116], %270 {strides = array<i32>} : memref<1x1x128xf32, #tpu.memory_space<vmem>>, vector<1x1x128xf32>,
    return
  }
  func.func @transform_0(%arg0: i32) -> (i32, i32, i32) {
    %c0_i32 = arith.constant 0 : i32
    %c0_i32_0 = arith.constant 0 : i32
    %c0_i32_1 = arith.constant 0 : i32
    return %arg0, %c0_i32, %c0_i32_0 : i32, i32, i32
  }
  func.func @transform_1(%arg0: i32) -> (i32, i32) {
    %c0_i32 = arith.constant 0 : i32
    %c0_i32_0 = arith.constant 0 : i32
    %c0_i32_1 = arith.constant 0 : i32
    return %c0_i32, %c0_i32_0 : i32, i32
  }
  func.func @transform_2(%arg0: i32) -> (i32, i32) {
    %c0_i32 = arith.constant 0 : i32
    %c0_i32_0 = arith.constant 0 : i32
    %c0_i32_1 = arith.constant 0 : i32
    return %c0_i32, %c0_i32_0 : i32, i32
  }
  func.func @transform_3(%arg0: i32) -> (i32, i32) {
    %c0_i32 = arith.constant 0 : i32
    %c0_i32_0 = arith.constant 0 : i32
    %c0_i32_1 = arith.constant 0 : i32
    return %c0_i32, %c0_i32_0 : i32, i32
  }
  func.func @transform_4(%arg0: i32) -> (i32, i32) {
    %c0_i32 = arith.constant 0 : i32
    %c0_i32_0 = arith.constant 0 : i32
    %c0_i32_1 = arith.constant 0 : i32
    return %c0_i32, %c0_i32_0 : i32, i32
  }
  func.func @transform_5(%arg0: i32) -> (i32, i32) {
    %c0_i32 = arith.constant 0 : i32
    %c0_i32_0 = arith.constant 0 : i32
    %c0_i32_1 = arith.constant 0 : i32
    return %c0_i32, %c0_i32_0 : i32, i32
  }
  func.func @transform_6(%arg0: i32) -> (i32, i32) {
    %c0_i32 = arith.constant 0 : i32
    %c0_i32_0 = arith.constant 0 : i32
    %c0_i32_1 = arith.constant 0 : i32
    return %c0_i32, %c0_i32_0 : i32, i32
  }
  func.func @transform_7(%arg0: i32) -> (i32, i32) {
    %c0_i32 = arith.constant 0 : i32
    %c0_i32_0 = arith.constant 0 : i32
    %c0_i32_1 = arith.constant 0 : i32
    return %c0_i32, %c0_i32_0 : i32, i32
  }
  func.func @transform_8(%arg0: i32) -> (i32, i32) {
    %c0_i32 = arith.constant 0 : i32
    %c0_i32_0 = arith.constant 0 : i32
    %c0_i32_1 = arith.constant 0 : i32
    return %c0_i32, %c0_i32_0 : i32, i32
  }
  func.func @transform_9(%arg0: i32) -> (i32, i32, i32) {
    %c0_i32 = arith.constant 0 : i32
    %c0_i32_0 = arith.constant 0 : i32
    %c0_i32_1 = arith.constant 0 : i32
    %c0_i32_2 = arith.constant 0 : i32
    return %c0_i32, %c0_i32_0, %c0_i32_1 : i32, i32, i32
  }
  func.func @transform_10(%arg0: i32) -> (i32, i32) {
    %c0_i32 = arith.constant 0 : i32
    %c0_i32_0 = arith.constant 0 : i32
    %c0_i32_1 = arith.constant 0 : i32
    return %c0_i32, %c0_i32_0 : i32, i32
  }
  func.func @transform_11(%arg0: i32) -> (i32, i32) {
    %c0_i32 = arith.constant 0 : i32
    %c0_i32_0 = arith.constant 0 : i32
    %c0_i32_1 = arith.constant 0 : i32
    return %c0_i32, %c0_i32_0 : i32, i32
  }
  func.func @transform_12(%arg0: i32) -> (i32, i32) {
    %c0_i32 = arith.constant 0 : i32
    %c0_i32_0 = arith.constant 0 : i32
    %c0_i32_1 = arith.constant 0 : i32
    return %c0_i32, %c0_i32_0 : i32, i32
  }
  func.func @transform_13(%arg0: i32) -> (i32, i32) {
    %c0_i32 = arith.constant 0 : i32
    %c0_i32_0 = arith.constant 0 : i32
    %c0_i32_1 = arith.constant 0 : i32
    return %c0_i32, %c0_i32_0 : i32, i32
  }
  func.func @transform_14(%arg0: i32) -> (i32, i32) {
    %c0_i32 = arith.constant 0 : i32
    %c0_i32_0 = arith.constant 0 : i32
    %c0_i32_1 = arith.constant 0 : i32
    return %c0_i32, %c0_i32_0 : i32, i32
  }
  func.func @transform_15(%arg0: i32) -> (i32, i32) {
    %c0_i32 = arith.constant 0 : i32
    %c0_i32_0 = arith.constant 0 : i32
    %c0_i32_1 = arith.constant 0 : i32
    return %c0_i32, %c0_i32_0 : i32, i32
  }
  func.func @transform_16(%arg0: i32) -> (i32, i32) {
    %c0_i32 = arith.constant 0 : i32
    %c0_i32_0 = arith.constant 0 : i32
    %c0_i32_1 = arith.constant 0 : i32
    return %c0_i32, %c0_i32_0 : i32, i32
  }
  func.func @transform_17(%arg0: i32) -> (i32, i32) {
    %c0_i32 = arith.constant 0 : i32
    %c0_i32_0 = arith.constant 0 : i32
    %c0_i32_1 = arith.constant 0 : i32
    return %c0_i32, %c0_i32_0 : i32, i32
  }
  func.func @transform_18(%arg0: i32) -> (i32, i32) {
    %c0_i32 = arith.constant 0 : i32
    %c0_i32_0 = arith.constant 0 : i32
    %c0_i32_1 = arith.constant 0 : i32
    return %c0_i32, %c0_i32_0 : i32, i32
  }
  func.func @transform_19(%arg0: i32) -> (i32, i32) {
    %c0_i32 = arith.constant 0 : i32
    %c0_i32_0 = arith.constant 0 : i32
    %c0_i32_1 = arith.constant 0 : i32
    return %c0_i32, %c0_i32_0 : i32, i32
  }
  func.func @transform_20(%arg0: i32) -> (i32, i32) {
    %c0_i32 = arith.constant 0 : i32
    %c0_i32_0 = arith.constant 0 : i32
    %c0_i32_1 = arith.constant 0 : i32
    return %c0_i32, %c0_i32_0 : i32, i32
  }
  func.func @transform_21(%arg0: i32) -> (i32, i32) {
    %c0_i32 = arith.constant 0 : i32
    %c0_i32_0 = arith.constant 0 : i32
    %c0_i32_1 = arith.constant 0 : i32
    return %c0_i32, %c0_i32_0 : i32, i32
  }
  func.func @transform_22(%arg0: i32) -> (i32, i32) {
    %c0_i32 = arith.constant 0 : i32
    %c0_i32_0 = arith.constant 0 : i32
    %c0_i32_1 = arith.constant 0 : i32
    return %c0_i32, %c0_i32_0 : i32, i32
  }
  func.func @transform_23(%arg0: i32) -> (i32, i32) {
    %c0_i32 = arith.constant 0 : i32
    %c0_i32_0 = arith.constant 0 : i32
    %c0_i32_1 = arith.constant 0 : i32
    return %c0_i32, %c0_i32_0 : i32, i32
  }
  func.func @transform_24(%arg0: i32) -> (i32, i32, i32) {
    %c0_i32 = arith.constant 0 : i32
    %c0_i32_0 = arith.constant 0 : i32
    %c0_i32_1 = arith.constant 0 : i32
    return %arg0, %c0_i32, %c0_i32_0 : i32, i32, i32
  }
}

</mosaic_0001>

<llo_original>
// kernel: tpu_custom_call.1
$region0: #{tpu_custom_call.1}
  #allocation0 [shape = 'u32[]', space=smem, size = 0x4, offset = 0x4, fixed_abs, tag = 'smem constant byte address 0x4 - core index']
  #allocation1 [shape = 'u32[144,128]{1,0:T(1,128)}', space=vmem, size = 0x12000, scoped, tag = 'internal scratch']
  %s0 = inlined_call_operand.vmem [shape: f32[2,16,32], index: 0, kind: input, shape index: {}]
  %s1 = inlined_call_operand.hbm [shape: f32[8,32], index: 1, kind: input, shape index: {}]
  %s2 = inlined_call_operand.hbm [shape: f32[1,32], index: 2, kind: input, shape index: {}]
  %s3 = inlined_call_operand.vmem [shape: f32[16,32], index: 3, kind: input, shape index: {}]
  %s4 = inlined_call_operand.hbm [shape: bf16[32,32], index: 4, kind: input, shape index: {}]
  %s5 = inlined_call_operand.hbm [shape: f32[1,32], index: 5, kind: input, shape index: {}]
  %s6 = inlined_call_operand.hbm [shape: f32[1,32], index: 6, kind: input, shape index: {}]
  %s7 = inlined_call_operand.hbm [shape: f32[1,32], index: 7, kind: input, shape index: {}]
  %s8 = inlined_call_operand.hbm [shape: bf16[32,96], index: 8, kind: input, shape index: {}]
  %s9 = inlined_call_operand.vmem [shape: bf16[4,8,32], index: 9, kind: input, shape index: {}]
  %s10 = inlined_call_operand.hbm [shape: f32[1,32], index: 10, kind: input, shape index: {}]
  %s11 = inlined_call_operand.hbm [shape: f32[1,32], index: 11, kind: input, shape index: {}]
  %s12 = inlined_call_operand.hbm [shape: f32[1,32], index: 12, kind: input, shape index: {}]
  %s13 = inlined_call_operand.vmem [shape: bf16[32,64], index: 13, kind: input, shape index: {}]
  %s14 = inlined_call_operand.hbm [shape: f32[1,64], index: 14, kind: input, shape index: {}]
  %s15 = inlined_call_operand.vmem [shape: bf16[64,32], index: 15, kind: input, shape index: {}]
  %s16 = inlined_call_operand.hbm [shape: f32[1,32], index: 16, kind: input, shape index: {}]
  %s17 = inlined_call_operand.hbm [shape: f32[1,32], index: 17, kind: input, shape index: {}]
  %s18 = inlined_call_operand.vmem [shape: f32[1,32], index: 18, kind: input, shape index: {}]
  %s19 = inlined_call_operand.vmem [shape: bf16[32,32], index: 19, kind: input, shape index: {}]
  %s20 = inlined_call_operand.hbm [shape: bf16[32,32], index: 20, kind: input, shape index: {}]
  %s21 = inlined_call_operand.vmem [shape: f32[1,32], index: 21, kind: input, shape index: {}]
  %s22 = inlined_call_operand.vmem [shape: bf16[32,128], index: 22, kind: input, shape index: {}]
  %s23 = inlined_call_operand.vmem [shape: f32[1,128], index: 23, kind: input, shape index: {}]
  %s24 = inlined_call_operand.hbm [shape: f32[2,1,128], index: 24, kind: output, shape index: {}]
  %s25 = sld [smem:[#allocation0]]
  $region185: #{tpu_custom_call.1} parent=0
    _
  %s27 = ssub.s32 1, %s25
  %s28 = scalar_select 0, %s27, %s25
  $region1: #{tpu_custom_call.1} parent=0
    #allocation2 [shape = 'u8[4096]{0}', space=vmem, size = 0x1000, scoped, tag = 'input window, operand 1, single buffered']
    #allocation3 [shape = 's32[2]{0}', space=sflag, size = 0x8, scoped, tag = 'scoped memory for tpu_custom_call.1']
    #allocation4 [shape = 's32[2]{0}', space=sflag, size = 0x8, scoped, tag = 'scoped memory for tpu_custom_call.1']
    #allocation5 [shape = 'u8[512]{0}', space=vmem, size = 0x400, scoped, tag = 'input window, operand 2, single buffered']
    #allocation6 [shape = 's32[1]{0}', space=sflag, size = 0x4, scoped, tag = 'scoped memory for tpu_custom_call.1']
    #allocation7 [shape = 'u8[8192]{0}', space=vmem, size = 0x2000, scoped, tag = 'input window, operand 4, single buffered']
    #allocation8 [shape = 'u8[512]{0}', space=vmem, size = 0x400, scoped, tag = 'input window, operand 5, single buffered']
    #allocation9 [shape = 's32[1]{0}', space=sflag, size = 0x4, scoped, tag = 'scoped memory for tpu_custom_call.1']
    #allocation10 [shape = 'u8[512]{0}', space=vmem, size = 0x400, scoped, tag = 'input window, operand 6, single buffered']
    #allocation11 [shape = 'u8[512]{0}', space=vmem, size = 0x400, scoped, tag = 'input window, operand 7, single buffered']
    #allocation12 [shape = 's32[1]{0}', space=sflag, size = 0x4, scoped, tag = 'scoped memory for tpu_custom_call.1']
    #allocation13 [shape = 'u8[8192]{0}', space=vmem, size = 0x2000, scoped, tag = 'input window, operand 8, single buffered']
    #allocation14 [shape = 'u8[512]{0}', space=vmem, size = 0x400, scoped, tag = 'input window, operand 10, single buffered']
    #allocation15 [shape = 's32[1]{0}', space=sflag, size = 0x4, scoped, tag = 'scoped memory for tpu_custom_call.1']
    #allocation16 [shape = 'u8[512]{0}', space=vmem, size = 0x400, scoped, tag = 'input window, operand 11, single buffered']
    #allocation17 [shape = 'u8[512]{0}', space=vmem, size = 0x400, scoped, tag = 'input window, operand 12, single buffered']
    #allocation18 [shape = 's32[1]{0}', space=sflag, size = 0x4, scoped, tag = 'scoped memory for tpu_custom_call.1']
    #allocation19 [shape = 'u8[512]{0}', space=vmem, size = 0x400, scoped, tag = 'input window, operand 14, single buffered']
    #allocation20 [shape = 'u8[512]{0}', space=vmem, size = 0x400, scoped, tag = 'input window, operand 16, single buffered']
    #allocation21 [shape = 's32[1]{0}', space=sflag, size = 0x4, scoped, tag = 'scoped memory for tpu_custom_call.1']
    #allocation22 [shape = 'u8[512]{0}', space=vmem, size = 0x400, scoped, tag = 'input window, operand 17, single buffered']
    #allocation23 [shape = 'u8[8192]{0}', space=vmem, size = 0x2000, scoped, tag = 'input window, operand 20, single buffered']
    #allocation24 [shape = 's32[1]{0}', space=sflag, size = 0x4, scoped, tag = 'scoped memory for tpu_custom_call.1']
    #allocation25 [shape = 'u8[1024]{0}', space=vmem, size = 0x400, scoped, tag = 'output window, operand 0']
    %29 = vsyncpa [#allocation3], 0
    %30 = vsyncpa [#allocation6], 0
    %31 = vsyncpa [#allocation9], 0
    %32 = vsyncpa [#allocation12], 0
    %33 = vsyncpa [#allocation15], 0
    %34 = vsyncpa [#allocation18], 0
    %35 = vsyncpa [#allocation21], 0
    %36 = vsyncpa [#allocation24], 0
    %37 = vsyncpa [#allocation4], 0
    %s38 = scalar_lea.sflag [#allocation4], 1
    %39 = vsyncpa %s38, 0
    loop: start=0, step=1, limit=4
    $region2: #{tpu_custom_call.1} parent=1 // loop_pre_header
      _
    $region3: #{tpu_custom_call.1} parent=1 // loop_header
      %s41 = sphi 0, %s45
      %p42 = scmp.ge.s32.totalorder %s41, 4
      %s51 = sphi 0, %s53
      %s54 = sphi 0, %s51
      %s55 = sphi 0, %s54
      %s71 = sphi 0, %s55
      %s75 = sphi 0, %s75
      %s77 = sphi 0, %s75
      %s78 = sphi 0, %s77
      %s92 = sphi 0, %s78
      %s96 = sphi 0, %s96
      %s98 = sphi 0, %s96
      %s99 = sphi 0, %s98
      %s113 = sphi 0, %s99
      %s117 = sphi 0, %s117
      %s119 = sphi 0, %s117
      %s120 = sphi 0, %s119
      %s134 = sphi 0, %s120
      %s138 = sphi 0, %s138
      %s140 = sphi 0, %s138
      %s141 = sphi 0, %s140
      %s155 = sphi 0, %s141
      %s159 = sphi 0, %s159
      %s161 = sphi 0, %s159
      %s162 = sphi 0, %s161
      %s176 = sphi 0, %s162
      %s180 = sphi 0, %s180
      %s182 = sphi 0, %s180
      %s183 = sphi 0, %s182
      %s197 = sphi 0, %s183
      %s201 = sphi 0, %s201
      %s203 = sphi 0, %s201
      %s204 = sphi 0, %s203
      %s218 = sphi 0, %s204
      %s222 = sphi 0, %s222
      %s224 = sphi 0, %s222
      %s225 = sphi 0, %s224
      %s239 = sphi 0, %s225
      %s243 = sphi 0, %s243
      %s245 = sphi 0, %s243
      %s246 = sphi 0, %s245
      %s260 = sphi 0, %s246
      %s264 = sphi 0, %s264
      %s266 = sphi 0, %s264
      %s267 = sphi 0, %s266
      %s281 = sphi 0, %s267
      %s285 = sphi 0, %s285
      %s287 = sphi 0, %s285
      %s288 = sphi 0, %s287
      %s302 = sphi 0, %s288
      %s306 = sphi 0, %s306
      %s308 = sphi 0, %s306
      %s309 = sphi 0, %s308
      %s323 = sphi 0, %s309
      %s327 = sphi 0, %s327
      %s329 = sphi 0, %s327
      %s330 = sphi 0, %s329
      %s344 = sphi 0, %s330
      %s348 = sphi 0, %s348
      %s350 = sphi 0, %s348
      %s351 = sphi 0, %s350
      %s365 = sphi 0, %s351
      %s369 = sphi 0, %s369
      %s371 = sphi 0, %s369
      %s372 = sphi 0, %s371
      %s386 = sphi 0, %s372
      %s390 = sphi 0, %s390
      %s392 = sphi 0, %s390
      %s393 = sphi 0, %s392
      %s407 = sphi 0, %s393
      %s411 = sphi 0, %s411
      %s413 = sphi 0, %s411
      %s414 = sphi 0, %s413
      %s428 = sphi 0, %s414
      %s432 = sphi 0, %s432
      %s434 = sphi 0, %s432
      %s435 = sphi 0, %s434
      %s449 = sphi 0, %s435
      %s453 = sphi 0, %s453
      %s455 = sphi 0, %s453
      %s456 = sphi 0, %s455
      %s470 = sphi 0, %s456
      %s474 = sphi 0, %s474
      %s476 = sphi 0, %s474
      %s477 = sphi 0, %s476
      %s491 = sphi 0, %s477
      %s495 = sphi 0, %s495
      %s497 = sphi 0, %s495
      %s498 = sphi 0, %s497
      %s512 = sphi 0, %s498
      %s516 = sphi 0, %s516
      %s518 = sphi 0, %s516
      %s519 = sphi 0, %s518
      %s533 = sphi 0, %s519
      %s537 = sphi 0, %s537
      %s539 = sphi 0, %s537
      %s540 = sphi 0, %s539
      %s554 = sphi 0, %s540
      %s560 = sphi 0, %s562
      %s563 = sphi 0, %s560
      %s564 = sphi 0, %s563
      %s580 = sphi 0, %s564
    $region4: #{tpu_custom_call.1} parent=1 // loop_header_branch
      %44 = sbr.rel (%p42) target = $region8
    $region5: #{tpu_custom_call.1} parent=1 // loop_body
      %s46 = ssub.s32 %s41, 1
      %s47 = ssub.s32 %s41, 2
      %s48 = sadd.s32 %s41, 1
      %s49 = ssub.s32 %s41, %s48
      %p50 = scmp.eq.s32.totalorder %s49, 0
      %s52 = sadd.s32 %s51, 1
      %s53 = scalar_select %p50, %s51, %s52
      %p56 = pneg %p50
      %p57 = scmp.eq.s32.totalorder %s41, 1
      %p58 = por %p56, %p57
      %p59 = scmp.ne.s32.totalorder %s51, %s54
      %p60 = scmp.eq.s32.totalorder %s41, 0
      %p61 = por %p59, %p60
      %p62 = scmp.ne.s32.totalorder %s51, %s54
      %p63 = scmp.eq.s32.totalorder %s46, 1
      %p64 = por %p62, %p63
      %p65 = scmp.ne.s32.totalorder %s54, %s55
      %p66 = scmp.eq.s32.totalorder %s46, 0
      %p67 = por %p65, %p66
      %p68 = scmp.ne.s32.totalorder %s54, %s55
      %p69 = scmp.eq.s32.totalorder %s47, 1
      %p70 = por %p68, %p69
      %p72 = scmp.ne.s32.totalorder %s55, %s71
      %p73 = scmp.eq.s32.totalorder %s47, 0
      %p74 = por %p72, %p73
      %s76 = sadd.s32 %s75, 1
      %p79 = scmp.eq.s32.totalorder %s41, 1
      %p80 = scmp.ne.s32.totalorder %s75, %s77
      %p81 = scmp.eq.s32.totalorder %s41, 0
      %p82 = por %p80, %p81
      %p83 = scmp.ne.s32.totalorder %s75, %s77
      %p84 = scmp.eq.s32.totalorder %s46, 1
      %p85 = por %p83, %p84
      %p86 = scmp.ne.s32.totalorder %s77, %s78
      %p87 = scmp.eq.s32.totalorder %s46, 0
      %p88 = por %p86, %p87
      %p89 = scmp.ne.s32.totalorder %s77, %s78
      %p90 = scmp.eq.s32.totalorder %s47, 1
      %p91 = por %p89, %p90
      %p93 = scmp.ne.s32.totalorder %s78, %s92
      %p94 = scmp.eq.s32.totalorder %s47, 0
      %p95 = por %p93, %p94
      %s97 = sadd.s32 %s96, 1
      %p100 = scmp.eq.s32.totalorder %s41, 1
      %p101 = scmp.ne.s32.totalorder %s96, %s98
      %p102 = scmp.eq.s32.totalorder %s41, 0
      %p103 = por %p101, %p102
      %p104 = scmp.ne.s32.totalorder %s96, %s98
      %p105 = scmp.eq.s32.totalorder %s46, 1
      %p106 = por %p104, %p105
      %p107 = scmp.ne.s32.totalorder %s98, %s99
      %p108 = scmp.eq.s32.totalorder %s46, 0
      %p109 = por %p107, %p108
      %p110 = scmp.ne.s32.totalorder %s98, %s99
      %p111 = scmp.eq.s32.totalorder %s47, 1
      %p112 = por %p110, %p111
      %p114 = scmp.ne.s32.totalorder %s99, %s113
      %p115 = scmp.eq.s32.totalorder %s47, 0
      %p116 = por %p114, %p115
      %s118 = sadd.s32 %s117, 1
      %p121 = scmp.eq.s32.totalorder %s41, 1
      %p122 = scmp.ne.s32.totalorder %s117, %s119
      %p123 = scmp.eq.s32.totalorder %s41, 0
      %p124 = por %p122, %p123
      %p125 = scmp.ne.s32.totalorder %s117, %s119
      %p126 = scmp.eq.s32.totalorder %s46, 1
      %p127 = por %p125, %p126
      %p128 = scmp.ne.s32.totalorder %s119, %s120
      %p129 = scmp.eq.s32.totalorder %s46, 0
      %p130 = por %p128, %p129
      %p131 = scmp.ne.s32.totalorder %s119, %s120
      %p132 = scmp.eq.s32.totalorder %s47, 1
      %p133 = por %p131, %p132
      %p135 = scmp.ne.s32.totalorder %s120, %s134
      %p136 = scmp.eq.s32.totalorder %s47, 0
      %p137 = por %p135, %p136
      %s139 = sadd.s32 %s138, 1
      %p142 = scmp.eq.s32.totalorder %s41, 1
      %p143 = scmp.ne.s32.totalorder %s138, %s140
      %p144 = scmp.eq.s32.totalorder %s41, 0
      %p145 = por %p143, %p144
      %p146 = scmp.ne.s32.totalorder %s138, %s140
      %p147 = scmp.eq.s32.totalorder %s46, 1
      %p148 = por %p146, %p147
      %p149 = scmp.ne.s32.totalorder %s140, %s141
      %p150 = scmp.eq.s32.totalorder %s46, 0
      %p151 = por %p149, %p150
      %p152 = scmp.ne.s32.totalorder %s140, %s141
      %p153 = scmp.eq.s32.totalorder %s47, 1
      %p154 = por %p152, %p153
      %p156 = scmp.ne.s32.totalorder %s141, %s155
      %p157 = scmp.eq.s32.totalorder %s47, 0
      %p158 = por %p156, %p157
      %s160 = sadd.s32 %s159, 1
      %p163 = scmp.eq.s32.totalorder %s41, 1
      %p164 = scmp.ne.s32.totalorder %s159, %s161
      %p165 = scmp.eq.s32.totalorder %s41, 0
      %p166 = por %p164, %p165
      %p167 = scmp.ne.s32.totalorder %s159, %s161
      %p168 = scmp.eq.s32.totalorder %s46, 1
      %p169 = por %p167, %p168
      %p170 = scmp.ne.s32.totalorder %s161, %s162
      %p171 = scmp.eq.s32.totalorder %s46, 0
      %p172 = por %p170, %p171
      %p173 = scmp.ne.s32.totalorder %s161, %s162
      %p174 = scmp.eq.s32.totalorder %s47, 1
      %p175 = por %p173, %p174
      %p177 = scmp.ne.s32.totalorder %s162, %s176
      %p178 = scmp.eq.s32.totalorder %s47, 0
      %p179 = por %p177, %p178
      %s181 = sadd.s32 %s180, 1
      %p184 = scmp.eq.s32.totalorder %s41, 1
      %p185 = scmp.ne.s32.totalorder %s180, %s182
      %p186 = scmp.eq.s32.totalorder %s41, 0
      %p187 = por %p185, %p186
      %p188 = scmp.ne.s32.totalorder %s180, %s182
      %p189 = scmp.eq.s32.totalorder %s46, 1
      %p190 = por %p188, %p189
      %p191 = scmp.ne.s32.totalorder %s182, %s183
      %p192 = scmp.eq.s32.totalorder %s46, 0
      %p193 = por %p191, %p192
      %p194 = scmp.ne.s32.totalorder %s182, %s183
      %p195 = scmp.eq.s32.totalorder %s47, 1
      %p196 = por %p194, %p195
      %p198 = scmp.ne.s32.totalorder %s183, %s197
      %p199 = scmp.eq.s32.totalorder %s47, 0
      %p200 = por %p198, %p199
      %s202 = sadd.s32 %s201, 1
      %p205 = scmp.eq.s32.totalorder %s41, 1
      %p206 = scmp.ne.s32.totalorder %s201, %s203
      %p207 = scmp.eq.s32.totalorder %s41, 0
      %p208 = por %p206, %p207
      %p209 = scmp.ne.s32.totalorder %s201, %s203
      %p210 = scmp.eq.s32.totalorder %s46, 1
      %p211 = por %p209, %p210
      %p212 = scmp.ne.s32.totalorder %s203, %s204
      %p213 = scmp.eq.s32.totalorder %s46, 0
      %p214 = por %p212, %p213
      %p215 = scmp.ne.s32.totalorder %s203, %s204
      %p216 = scmp.eq.s32.totalorder %s47, 1
      %p217 = por %p215, %p216
      %p219 = scmp.ne.s32.totalorder %s204, %s218
      %p220 = scmp.eq.s32.totalorder %s47, 0
      %p221 = por %p219, %p220
      %s223 = sadd.s32 %s222, 1
      %p226 = scmp.eq.s32.totalorder %s41, 1
      %p227 = scmp.ne.s32.totalorder %s222, %s224
      %p228 = scmp.eq.s32.totalorder %s41, 0
      %p229 = por %p227, %p228
      %p230 = scmp.ne.s32.totalorder %s222, %s224
      %p231 = scmp.eq.s32.totalorder %s46, 1
      %p232 = por %p230, %p231
      %p233 = scmp.ne.s32.totalorder %s224, %s225
      %p234 = scmp.eq.s32.totalorder %s46, 0
      %p235 = por %p233, %p234
      %p236 = scmp.ne.s32.totalorder %s224, %s225
      %p237 = scmp.eq.s32.totalorder %s47, 1
      %p238 = por %p236, %p237
      %p240 = scmp.ne.s32.totalorder %s225, %s239
      %p241 = scmp.eq.s32.totalorder %s47, 0
      %p242 = por %p240, %p241
      %s244 = sadd.s32 %s243, 1
      %p247 = scmp.eq.s32.totalorder %s41, 1
      %p248 = scmp.ne.s32.totalorder %s243, %s245
      %p249 = scmp.eq.s32.totalorder %s41, 0
      %p250 = por %p248, %p249
      %p251 = scmp.ne.s32.totalorder %s243, %s245
      %p252 = scmp.eq.s32.totalorder %s46, 1
      %p253 = por %p251, %p252
      %p254 = scmp.ne.s32.totalorder %s245, %s246
      %p255 = scmp.eq.s32.totalorder %s46, 0
      %p256 = por %p254, %p255
      %p257 = scmp.ne.s32.totalorder %s245, %s246
      %p258 = scmp.eq.s32.totalorder %s47, 1
      %p259 = por %p257, %p258
      %p261 = scmp.ne.s32.totalorder %s246, %s260
      %p262 = scmp.eq.s32.totalorder %s47, 0
      %p263 = por %p261, %p262
      %s265 = sadd.s32 %s264, 1
      %p268 = scmp.eq.s32.totalorder %s41, 1
      %p269 = scmp.ne.s32.totalorder %s264, %s266
      %p270 = scmp.eq.s32.totalorder %s41, 0
      %p271 = por %p269, %p270
      %p272 = scmp.ne.s32.totalorder %s264, %s266
      %p273 = scmp.eq.s32.totalorder %s46, 1
      %p274 = por %p272, %p273
      %p275 = scmp.ne.s32.totalorder %s266, %s267
      %p276 = scmp.eq.s32.totalorder %s46, 0
      %p277 = por %p275, %p276
      %p278 = scmp.ne.s32.totalorder %s266, %s267
      %p279 = scmp.eq.s32.totalorder %s47, 1
      %p280 = por %p278, %p279
      %p282 = scmp.ne.s32.totalorder %s267, %s281
      %p283 = scmp.eq.s32.totalorder %s47, 0
      %p284 = por %p282, %p283
      %s286 = sadd.s32 %s285, 1
      %p289 = scmp.eq.s32.totalorder %s41, 1
      %p290 = scmp.ne.s32.totalorder %s285, %s287
      %p291 = scmp.eq.s32.totalorder %s41, 0
      %p292 = por %p290, %p291
      %p293 = scmp.ne.s32.totalorder %s285, %s287
      %p294 = scmp.eq.s32.totalorder %s46, 1
      %p295 = por %p293, %p294
      %p296 = scmp.ne.s32.totalorder %s287, %s288
      %p297 = scmp.eq.s32.totalorder %s46, 0
      %p298 = por %p296, %p297
      %p299 = scmp.ne.s32.totalorder %s287, %s288
      %p300 = scmp.eq.s32.totalorder %s47, 1
      %p301 = por %p299, %p300
      %p303 = scmp.ne.s32.totalorder %s288, %s302
      %p304 = scmp.eq.s32.totalorder %s47, 0
      %p305 = por %p303, %p304
      %s307 = sadd.s32 %s306, 1
      %p310 = scmp.eq.s32.totalorder %s41, 1
      %p311 = scmp.ne.s32.totalorder %s306, %s308
      %p312 = scmp.eq.s32.totalorder %s41, 0
      %p313 = por %p311, %p312
      %p314 = scmp.ne.s32.totalorder %s306, %s308
      %p315 = scmp.eq.s32.totalorder %s46, 1
      %p316 = por %p314, %p315
      %p317 = scmp.ne.s32.totalorder %s308, %s309
      %p318 = scmp.eq.s32.totalorder %s46, 0
      %p319 = por %p317, %p318
      %p320 = scmp.ne.s32.totalorder %s308, %s309
      %p321 = scmp.eq.s32.totalorder %s47, 1
      %p322 = por %p320, %p321
      %p324 = scmp.ne.s32.totalorder %s309, %s323
      %p325 = scmp.eq.s32.totalorder %s47, 0
      %p326 = por %p324, %p325
      %s328 = sadd.s32 %s327, 1
      %p331 = scmp.eq.s32.totalorder %s41, 1
      %p332 = scmp.ne.s32.totalorder %s327, %s329
      %p333 = scmp.eq.s32.totalorder %s41, 0
      %p334 = por %p332, %p333
      %p335 = scmp.ne.s32.totalorder %s327, %s329
      %p336 = scmp.eq.s32.totalorder %s46, 1
      %p337 = por %p335, %p336
      %p338 = scmp.ne.s32.totalorder %s329, %s330
      %p339 = scmp.eq.s32.totalorder %s46, 0
      %p340 = por %p338, %p339
      %p341 = scmp.ne.s32.totalorder %s329, %s330
      %p342 = scmp.eq.s32.totalorder %s47, 1
      %p343 = por %p341, %p342
      %p345 = scmp.ne.s32.totalorder %s330, %s344
      %p346 = scmp.eq.s32.totalorder %s47, 0
      %p347 = por %p345, %p346
      %s349 = sadd.s32 %s348, 1
      %p352 = scmp.eq.s32.totalorder %s41, 1
      %p353 = scmp.ne.s32.totalorder %s348, %s350
      %p354 = scmp.eq.s32.totalorder %s41, 0
      %p355 = por %p353, %p354
      %p356 = scmp.ne.s32.totalorder %s348, %s350
      %p357 = scmp.eq.s32.totalorder %s46, 1
      %p358 = por %p356, %p357
      %p359 = scmp.ne.s32.totalorder %s350, %s351
      %p360 = scmp.eq.s32.totalorder %s46, 0
      %p361 = por %p359, %p360
      %p362 = scmp.ne.s32.totalorder %s350, %s351
      %p363 = scmp.eq.s32.totalorder %s47, 1
      %p364 = por %p362, %p363
      %p366 = scmp.ne.s32.totalorder %s351, %s365
      %p367 = scmp.eq.s32.totalorder %s47, 0
      %p368 = por %p366, %p367
      %s370 = sadd.s32 %s369, 1
      %p373 = scmp.eq.s32.totalorder %s41, 1
      %p374 = scmp.ne.s32.totalorder %s369, %s371
      %p375 = scmp.eq.s32.totalorder %s41, 0
      %p376 = por %p374, %p375
      %p377 = scmp.ne.s32.totalorder %s369, %s371
      %p378 = scmp.eq.s32.totalorder %s46, 1
      %p379 = por %p377, %p378
      %p380 = scmp.ne.s32.totalorder %s371, %s372
      %p381 = scmp.eq.s32.totalorder %s46, 0
      %p382 = por %p380, %p381
      %p383 = scmp.ne.s32.totalorder %s371, %s372
      %p384 = scmp.eq.s32.totalorder %s47, 1
      %p385 = por %p383, %p384
      %p387 = scmp.ne.s32.totalorder %s372, %s386
      %p388 = scmp.eq.s32.totalorder %s47, 0
      %p389 = por %p387, %p388
      %s391 = sadd.s32 %s390, 1
      %p394 = scmp.eq.s32.totalorder %s41, 1
      %p395 = scmp.ne.s32.totalorder %s390, %s392
      %p396 = scmp.eq.s32.totalorder %s41, 0
      %p397 = por %p395, %p396
      %p398 = scmp.ne.s32.totalorder %s390, %s392
      %p399 = scmp.eq.s32.totalorder %s46, 1
      %p400 = por %p398, %p399
      %p401 = scmp.ne.s32.totalorder %s392, %s393
      %p402 = scmp.eq.s32.totalorder %s46, 0
      %p403 = por %p401, %p402
      %p404 = scmp.ne.s32.totalorder %s392, %s393
      %p405 = scmp.eq.s32.totalorder %s47, 1
      %p406 = por %p404, %p405
      %p408 = scmp.ne.s32.totalorder %s393, %s407
      %p409 = scmp.eq.s32.totalorder %s47, 0
      %p410 = por %p408, %p409
      %s412 = sadd.s32 %s411, 1
      %p415 = scmp.eq.s32.totalorder %s41, 1
      %p416 = scmp.ne.s32.totalorder %s411, %s413
      %p417 = scmp.eq.s32.totalorder %s41, 0
      %p418 = por %p416, %p417
      %p419 = scmp.ne.s32.totalorder %s411, %s413
      %p420 = scmp.eq.s32.totalorder %s46, 1
      %p421 = por %p419, %p420
      %p422 = scmp.ne.s32.totalorder %s413, %s414
      %p423 = scmp.eq.s32.totalorder %s46, 0
      %p424 = por %p422, %p423
      %p425 = scmp.ne.s32.totalorder %s413, %s414
      %p426 = scmp.eq.s32.totalorder %s47, 1
      %p427 = por %p425, %p426
      %p429 = scmp.ne.s32.totalorder %s414, %s428
      %p430 = scmp.eq.s32.totalorder %s47, 0
      %p431 = por %p429, %p430
      %s433 = sadd.s32 %s432, 1
      %p436 = scmp.eq.s32.totalorder %s41, 1
      %p437 = scmp.ne.s32.totalorder %s432, %s434
      %p438 = scmp.eq.s32.totalorder %s41, 0
      %p439 = por %p437, %p438
      %p440 = scmp.ne.s32.totalorder %s432, %s434
      %p441 = scmp.eq.s32.totalorder %s46, 1
      %p442 = por %p440, %p441
      %p443 = scmp.ne.s32.totalorder %s434, %s435
      %p444 = scmp.eq.s32.totalorder %s46, 0
      %p445 = por %p443, %p444
      %p446 = scmp.ne.s32.totalorder %s434, %s435
      %p447 = scmp.eq.s32.totalorder %s47, 1
      %p448 = por %p446, %p447
      %p450 = scmp.ne.s32.totalorder %s435, %s449
      %p451 = scmp.eq.s32.totalorder %s47, 0
      %p452 = por %p450, %p451
      %s454 = sadd.s32 %s453, 1
      %p457 = scmp.eq.s32.totalorder %s41, 1
      %p458 = scmp.ne.s32.totalorder %s453, %s455
      %p459 = scmp.eq.s32.totalorder %s41, 0
      %p460 = por %p458, %p459
      %p461 = scmp.ne.s32.totalorder %s453, %s455
      %p462 = scmp.eq.s32.totalorder %s46, 1
      %p463 = por %p461, %p462
      %p464 = scmp.ne.s32.totalorder %s455, %s456
      %p465 = scmp.eq.s32.totalorder %s46, 0
      %p466 = por %p464, %p465
      %p467 = scmp.ne.s32.totalorder %s455, %s456
      %p468 = scmp.eq.s32.totalorder %s47, 1
      %p469 = por %p467, %p468
      %p471 = scmp.ne.s32.totalorder %s456, %s470
      %p472 = scmp.eq.s32.totalorder %s47, 0
      %p473 = por %p471, %p472
      %s475 = sadd.s32 %s474, 1
      %p478 = scmp.eq.s32.totalorder %s41, 1
      %p479 = scmp.ne.s32.totalorder %s474, %s476
      %p480 = scmp.eq.s32.totalorder %s41, 0
      %p481 = por %p479, %p480
      %p482 = scmp.ne.s32.totalorder %s474, %s476
      %p483 = scmp.eq.s32.totalorder %s46, 1
      %p484 = por %p482, %p483
      %p485 = scmp.ne.s32.totalorder %s476, %s477
      %p486 = scmp.eq.s32.totalorder %s46, 0
      %p487 = por %p485, %p486
      %p488 = scmp.ne.s32.totalorder %s476, %s477
      %p489 = scmp.eq.s32.totalorder %s47, 1
      %p490 = por %p488, %p489
      %p492 = scmp.ne.s32.totalorder %s477, %s491
      %p493 = scmp.eq.s32.totalorder %s47, 0
      %p494 = por %p492, %p493
      %s496 = sadd.s32 %s495, 1
      %p499 = scmp.eq.s32.totalorder %s41, 1
      %p500 = scmp.ne.s32.totalorder %s495, %s497
      %p501 = scmp.eq.s32.totalorder %s41, 0
      %p502 = por %p500, %p501
      %p503 = scmp.ne.s32.totalorder %s495, %s497
      %p504 = scmp.eq.s32.totalorder %s46, 1
      %p505 = por %p503, %p504
      %p506 = scmp.ne.s32.totalorder %s497, %s498
      %p507 = scmp.eq.s32.totalorder %s46, 0
      %p508 = por %p506, %p507
      %p509 = scmp.ne.s32.totalorder %s497, %s498
      %p510 = scmp.eq.s32.totalorder %s47, 1
      %p511 = por %p509, %p510
      %p513 = scmp.ne.s32.totalorder %s498, %s512
      %p514 = scmp.eq.s32.totalorder %s47, 0
      %p515 = por %p513, %p514
      %s517 = sadd.s32 %s516, 1
      %p520 = scmp.eq.s32.totalorder %s41, 1
      %p521 = scmp.ne.s32.totalorder %s516, %s518
      %p522 = scmp.eq.s32.totalorder %s41, 0
      %p523 = por %p521, %p522
      %p524 = scmp.ne.s32.totalorder %s516, %s518
      %p525 = scmp.eq.s32.totalorder %s46, 1
      %p526 = por %p524, %p525
      %p527 = scmp.ne.s32.totalorder %s518, %s519
      %p528 = scmp.eq.s32.totalorder %s46, 0
      %p529 = por %p527, %p528
      %p530 = scmp.ne.s32.totalorder %s518, %s519
      %p531 = scmp.eq.s32.totalorder %s47, 1
      %p532 = por %p530, %p531
      %p534 = scmp.ne.s32.totalorder %s519, %s533
      %p535 = scmp.eq.s32.totalorder %s47, 0
      %p536 = por %p534, %p535
      %s538 = sadd.s32 %s537, 1
      %p541 = scmp.eq.s32.totalorder %s41, 1
      %p542 = scmp.ne.s32.totalorder %s537, %s539
      %p543 = scmp.eq.s32.totalorder %s41, 0
      %p544 = por %p542, %p543
      %p545 = scmp.ne.s32.totalorder %s537, %s539
      %p546 = scmp.eq.s32.totalorder %s46, 1
      %p547 = por %p545, %p546
      %p548 = scmp.ne.s32.totalorder %s539, %s540
      %p549 = scmp.eq.s32.totalorder %s46, 0
      %p550 = por %p548, %p549
      %p551 = scmp.ne.s32.totalorder %s539, %s540
      %p552 = scmp.eq.s32.totalorder %s47, 1
      %p553 = por %p551, %p552
      %p555 = scmp.ne.s32.totalorder %s540, %s554
      %p556 = scmp.eq.s32.totalorder %s47, 0
      %p557 = por %p555, %p556
      %s558 = ssub.s32 %s41, %s48
      %p559 = scmp.eq.s32.totalorder %s558, 0
      %s561 = sadd.s32 %s560, 1
      %s562 = scalar_select %p559, %s560, %s561
      %p565 = pneg %p559
      %p566 = scmp.eq.s32.totalorder %s41, 1
      %p567 = por %p565, %p566
      %p568 = scmp.ne.s32.totalorder %s560, %s563
      %p569 = scmp.eq.s32.totalorder %s41, 0
      %p570 = por %p568, %p569
      %p571 = scmp.ne.s32.totalorder %s560, %s563
      %p572 = scmp.eq.s32.totalorder %s46, 1
      %p573 = por %p571, %p572
      %p574 = scmp.ne.s32.totalorder %s563, %s564
      %p575 = scmp.eq.s32.totalorder %s46, 0
      %p576 = por %p574, %p575
      %p577 = scmp.ne.s32.totalorder %s563, %s564
      %p578 = scmp.eq.s32.totalorder %s47, 1
      %p579 = por %p577, %p578
      %p581 = scmp.ne.s32.totalorder %s564, %s580
      %p582 = scmp.eq.s32.totalorder %s47, 0
      %p583 = por %p581, %p582
      %p584 = scmp.le.s32.totalorder 1, %s41
      %p585 = scmp.lt.s32.totalorder %s41, 3
      %p586 = pnand %p584, %p585
      %p587 = pneg %p586
      // Predicated region
      $region9: #{tpu_custom_call.1} parent=5 // pred_check
        _
      $region10: #{tpu_custom_call.1} parent=5 // pred_check_branch
        %589 = sbr.rel (%p586) target = $region12
      $region11: #{tpu_custom_call.1} parent=5 // pred_region
        %s590 = ssub.s32 %s41, 1
        // Predicated region
        $region13: #{tpu_custom_call.1} parent=11 // pred_check
          %p591 = pneg %p88
        $region14: #{tpu_custom_call.1} parent=11 // pred_check_branch
          %593 = sbr.rel (%p591) target = $region16
        $region15: #{tpu_custom_call.1} parent=11 // pred_region
          %s595 = ssub.s32 128, 128
          %596 = vsyncadd [#allocation3], %s595
          %s598 = sshll.u32 [#allocation2], 4
          %s599 = int_to_ptr.vmem [resolvable:$true] %s598
          %601 = dma.hbm_to_vmem [thread:$0]  %s1, 128, %s599, [#allocation3]
        $region16: #{tpu_custom_call.1} parent=11 // pred_fallthru
          _
        // Predicated region
        $region17: #{tpu_custom_call.1} parent=11 // pred_check
          %p602 = pneg %p109
        $region18: #{tpu_custom_call.1} parent=11 // pred_check_branch
          %604 = sbr.rel (%p602) target = $region20
        $region19: #{tpu_custom_call.1} parent=11 // pred_region
          %s606 = ssub.s32 16, 16
          %607 = vsyncadd [#allocation6], %s606
          %s609 = sshll.u32 [#allocation5], 4
          %s610 = int_to_ptr.vmem [resolvable:$true] %s609
          %612 = dma.hbm_to_vmem [thread:$0]  %s2, 16, %s610, [#allocation6]
        $region20: #{tpu_custom_call.1} parent=11 // pred_fallthru
          _
        // Predicated region
        $region21: #{tpu_custom_call.1} parent=11 // pred_check
          %p613 = pneg %p130
        $region22: #{tpu_custom_call.1} parent=11 // pred_check_branch
          %615 = sbr.rel (%p613) target = $region24
        $region23: #{tpu_custom_call.1} parent=11 // pred_region
          _
        $region24: #{tpu_custom_call.1} parent=11 // pred_fallthru
          _
        // Predicated region
        $region25: #{tpu_custom_call.1} parent=11 // pred_check
          %p616 = pneg %p151
        $region26: #{tpu_custom_call.1} parent=11 // pred_check_branch
          %618 = sbr.rel (%p616) target = $region28
        $region27: #{tpu_custom_call.1} parent=11 // pred_region
          %s620 = ssub.s32 256, 256
          %621 = vsyncadd [#allocation6], %s620
          %s622 = sshll.u32 [#allocation7], 4
          %s623 = int_to_ptr.vmem [resolvable:$true] %s622
          %628 = dma.hbm_to_vmem [thread:$0]  %s4, 256, %s623, [#allocation6], 64, 64, 4
        $region28: #{tpu_custom_call.1} parent=11 // pred_fallthru
          _
        // Predicated region
        $region29: #{tpu_custom_call.1} parent=11 // pred_check
          %p629 = pneg %p172
        $region30: #{tpu_custom_call.1} parent=11 // pred_check_branch
          %631 = sbr.rel (%p629) target = $region32
        $region31: #{tpu_custom_call.1} parent=11 // pred_region
          %s633 = ssub.s32 16, 16
          %634 = vsyncadd [#allocation9], %s633
          %s636 = sshll.u32 [#allocation8], 4
          %s637 = int_to_ptr.vmem [resolvable:$true] %s636
          %639 = dma.hbm_to_vmem [thread:$0]  %s5, 16, %s637, [#allocation9]
        $region32: #{tpu_custom_call.1} parent=11 // pred_fallthru
          _
        // Predicated region
        $region33: #{tpu_custom_call.1} parent=11 // pred_check
          %p640 = pneg %p193
        $region34: #{tpu_custom_call.1} parent=11 // pred_check_branch
          %642 = sbr.rel (%p640) target = $region36
        $region35: #{tpu_custom_call.1} parent=11 // pred_region
          %s644 = ssub.s32 16, 16
          %645 = vsyncadd [#allocation9], %s644
          %s647 = sshll.u32 [#allocation10], 4
          %s648 = int_to_ptr.vmem [resolvable:$true] %s647
          %650 = dma.hbm_to_vmem [thread:$0]  %s6, 16, %s648, [#allocation9]
        $region36: #{tpu_custom_call.1} parent=11 // pred_fallthru
          _
        // Predicated region
        $region37: #{tpu_custom_call.1} parent=11 // pred_check
          %p651 = pneg %p214
        $region38: #{tpu_custom_call.1} parent=11 // pred_check_branch
          %653 = sbr.rel (%p651) target = $region40
        $region39: #{tpu_custom_call.1} parent=11 // pred_region
          %s655 = ssub.s32 16, 16
          %656 = vsyncadd [#allocation12], %s655
          %s658 = sshll.u32 [#allocation11], 4
          %s659 = int_to_ptr.vmem [resolvable:$true] %s658
          %661 = dma.hbm_to_vmem [thread:$0]  %s7, 16, %s659, [#allocation12]
        $region40: #{tpu_custom_call.1} parent=11 // pred_fallthru
          _
        // Predicated region
        $region41: #{tpu_custom_call.1} parent=11 // pred_check
          %p662 = pneg %p235
        $region42: #{tpu_custom_call.1} parent=11 // pred_check_branch
          %664 = sbr.rel (%p662) target = $region44
        $region43: #{tpu_custom_call.1} parent=11 // pred_region
          %s666 = ssub.s32 256, 256
          %667 = vsyncadd [#allocation12], %s666
          %s668 = sshll.u32 [#allocation13], 4
          %s669 = int_to_ptr.vmem [resolvable:$true] %s668
          %674 = dma.hbm_to_vmem [thread:$0]  %s8, 256, %s669, [#allocation12], 64, 64, 4
        $region44: #{tpu_custom_call.1} parent=11 // pred_fallthru
          _
        // Predicated region
        $region45: #{tpu_custom_call.1} parent=11 // pred_check
          %p675 = pneg %p256
        $region46: #{tpu_custom_call.1} parent=11 // pred_check_branch
          %677 = sbr.rel (%p675) target = $region48
        $region47: #{tpu_custom_call.1} parent=11 // pred_region
          _
        $region48: #{tpu_custom_call.1} parent=11 // pred_fallthru
          _
        // Predicated region
        $region49: #{tpu_custom_call.1} parent=11 // pred_check
          %p678 = pneg %p277
        $region50: #{tpu_custom_call.1} parent=11 // pred_check_branch
          %680 = sbr.rel (%p678) target = $region52
        $region51: #{tpu_custom_call.1} parent=11 // pred_region
          %s682 = ssub.s32 16, 16
          %683 = vsyncadd [#allocation15], %s682
          %s685 = sshll.u32 [#allocation14], 4
          %s686 = int_to_ptr.vmem [resolvable:$true] %s685
          %688 = dma.hbm_to_vmem [thread:$0]  %s10, 16, %s686, [#allocation15]
        $region52: #{tpu_custom_call.1} parent=11 // pred_fallthru
          _
        // Predicated region
        $region53: #{tpu_custom_call.1} parent=11 // pred_check
          %p689 = pneg %p298
        $region54: #{tpu_custom_call.1} parent=11 // pred_check_branch
          %691 = sbr.rel (%p689) target = $region56
        $region55: #{tpu_custom_call.1} parent=11 // pred_region
          %s693 = ssub.s32 16, 16
          %694 = vsyncadd [#allocation15], %s693
          %s696 = sshll.u32 [#allocation16], 4
          %s697 = int_to_ptr.vmem [resolvable:$true] %s696
          %699 = dma.hbm_to_vmem [thread:$0]  %s11, 16, %s697, [#allocation15]
        $region56: #{tpu_custom_call.1} parent=11 // pred_fallthru
          _
        // Predicated region
        $region57: #{tpu_custom_call.1} parent=11 // pred_check
          %p700 = pneg %p319
        $region58: #{tpu_custom_call.1} parent=11 // pred_check_branch
          %702 = sbr.rel (%p700) target = $region60
        $region59: #{tpu_custom_call.1} parent=11 // pred_region
          %s704 = ssub.s32 16, 16
          %705 = vsyncadd [#allocation18], %s704
          %s707 = sshll.u32 [#allocation17], 4
          %s708 = int_to_ptr.vmem [resolvable:$true] %s707
          %710 = dma.hbm_to_vmem [thread:$0]  %s12, 16, %s708, [#allocation18]
        $region60: #{tpu_custom_call.1} parent=11 // pred_fallthru
          _
        // Predicated region
        $region61: #{tpu_custom_call.1} parent=11 // pred_check
          %p711 = pneg %p340
        $region62: #{tpu_custom_call.1} parent=11 // pred_check_branch
          %713 = sbr.rel (%p711) target = $region64
        $region63: #{tpu_custom_call.1} parent=11 // pred_region
          _
        $region64: #{tpu_custom_call.1} parent=11 // pred_fallthru
          _
        // Predicated region
        $region65: #{tpu_custom_call.1} parent=11 // pred_check
          %p714 = pneg %p361
        $region66: #{tpu_custom_call.1} parent=11 // pred_check_branch
          %716 = sbr.rel (%p714) target = $region68
        $region67: #{tpu_custom_call.1} parent=11 // pred_region
          %s718 = ssub.s32 16, 16
          %719 = vsyncadd [#allocation18], %s718
          %s721 = sshll.u32 [#allocation19], 4
          %s722 = int_to_ptr.vmem [resolvable:$true] %s721
          %724 = dma.hbm_to_vmem [thread:$0]  %s14, 16, %s722, [#allocation18]
        $region68: #{tpu_custom_call.1} parent=11 // pred_fallthru
          _
        // Predicated region
        $region69: #{tpu_custom_call.1} parent=11 // pred_check
          %p725 = pneg %p382
        $region70: #{tpu_custom_call.1} parent=11 // pred_check_branch
          %727 = sbr.rel (%p725) target = $region72
        $region71: #{tpu_custom_call.1} parent=11 // pred_region
          _
        $region72: #{tpu_custom_call.1} parent=11 // pred_fallthru
          _
        // Predicated region
        $region73: #{tpu_custom_call.1} parent=11 // pred_check
          %p728 = pneg %p403
        $region74: #{tpu_custom_call.1} parent=11 // pred_check_branch
          %730 = sbr.rel (%p728) target = $region76
        $region75: #{tpu_custom_call.1} parent=11 // pred_region
          %s732 = ssub.s32 16, 16
          %733 = vsyncadd [#allocation21], %s732
          %s735 = sshll.u32 [#allocation20], 4
          %s736 = int_to_ptr.vmem [resolvable:$true] %s735
          %738 = dma.hbm_to_vmem [thread:$0]  %s16, 16, %s736, [#allocation21]
        $region76: #{tpu_custom_call.1} parent=11 // pred_fallthru
          _
        // Predicated region
        $region77: #{tpu_custom_call.1} parent=11 // pred_check
          %p739 = pneg %p424
        $region78: #{tpu_custom_call.1} parent=11 // pred_check_branch
          %741 = sbr.rel (%p739) target = $region80
        $region79: #{tpu_custom_call.1} parent=11 // pred_region
          %s743 = ssub.s32 16, 16
          %744 = vsyncadd [#allocation21], %s743
          %s746 = sshll.u32 [#allocation22], 4
          %s747 = int_to_ptr.vmem [resolvable:$true] %s746
          %749 = dma.hbm_to_vmem [thread:$0]  %s17, 16, %s747, [#allocation21]
        $region80: #{tpu_custom_call.1} parent=11 // pred_fallthru
          _
        // Predicated region
        $region81: #{tpu_custom_call.1} parent=11 // pred_check
          %p750 = pneg %p445
        $region82: #{tpu_custom_call.1} parent=11 // pred_check_branch
          %752 = sbr.rel (%p750) target = $region84
        $region83: #{tpu_custom_call.1} parent=11 // pred_region
          _
        $region84: #{tpu_custom_call.1} parent=11 // pred_fallthru
          _
        // Predicated region
        $region85: #{tpu_custom_call.1} parent=11 // pred_check
          %p753 = pneg %p466
        $region86: #{tpu_custom_call.1} parent=11 // pred_check_branch
          %755 = sbr.rel (%p753) target = $region88
        $region87: #{tpu_custom_call.1} parent=11 // pred_region
          _
        $region88: #{tpu_custom_call.1} parent=11 // pred_fallthru
          _
        // Predicated region
        $region89: #{tpu_custom_call.1} parent=11 // pred_check
          %p756 = pneg %p487
        $region90: #{tpu_custom_call.1} parent=11 // pred_check_branch
          %758 = sbr.rel (%p756) target = $region92
        $region91: #{tpu_custom_call.1} parent=11 // pred_region
          %s760 = ssub.s32 256, 256
          %761 = vsyncadd [#allocation24], %s760
          %s762 = sshll.u32 [#allocation23], 4
          %s763 = int_to_ptr.vmem [resolvable:$true] %s762
          %768 = dma.hbm_to_vmem [thread:$0]  %s20, 256, %s763, [#allocation24], 64, 64, 4
        $region92: #{tpu_custom_call.1} parent=11 // pred_fallthru
          _
        // Predicated region
        $region93: #{tpu_custom_call.1} parent=11 // pred_check
          %p769 = pneg %p508
        $region94: #{tpu_custom_call.1} parent=11 // pred_check_branch
          %771 = sbr.rel (%p769) target = $region96
        $region95: #{tpu_custom_call.1} parent=11 // pred_region
          _
        $region96: #{tpu_custom_call.1} parent=11 // pred_fallthru
          _
        // Predicated region
        $region97: #{tpu_custom_call.1} parent=11 // pred_check
          %p772 = pneg %p529
        $region98: #{tpu_custom_call.1} parent=11 // pred_check_branch
          %774 = sbr.rel (%p772) target = $region100
        $region99: #{tpu_custom_call.1} parent=11 // pred_region
          _
        $region100: #{tpu_custom_call.1} parent=11 // pred_fallthru
          _
        // Predicated region
        $region101: #{tpu_custom_call.1} parent=11 // pred_check
          %p775 = pneg %p550
        $region102: #{tpu_custom_call.1} parent=11 // pred_check_branch
          %777 = sbr.rel (%p775) target = $region104
        $region103: #{tpu_custom_call.1} parent=11 // pred_region
          _
        $region104: #{tpu_custom_call.1} parent=11 // pred_fallthru
          _
      $region12: #{tpu_custom_call.1} parent=5 // pred_fallthru
        _
      %p778 = scmp.lt.s32.totalorder %s41, 2
      // Predicated region
      $region105: #{tpu_custom_call.1} parent=5 // pred_check
        %p779 = pneg %p778
      $region106: #{tpu_custom_call.1} parent=5 // pred_check_branch
        %781 = sbr.rel (%p779) target = $region108
      $region107: #{tpu_custom_call.1} parent=5 // pred_region
        // Predicated region
        $region109: #{tpu_custom_call.1} parent=107 // pred_check
          %p782 = pneg %p61
        $region110: #{tpu_custom_call.1} parent=107 // pred_check_branch
          %784 = sbr.rel (%p782) target = $region112
        $region111: #{tpu_custom_call.1} parent=107 // pred_region
          %p785 = scmp.lt.s32.totalorder %s41, 1
          %s786 = scalar_select %p785, %s41, 1
          %s787 = smul.addr %s786, 2
          %s788 = smul.addr %s787, 8
          %s789 = scalar_lea.vmem %s0, %s788
        $region112: #{tpu_custom_call.1} parent=107 // pred_fallthru
          _
      $region108: #{tpu_custom_call.1} parent=5 // pred_fallthru
        _
      %p790 = scmp.le.s32.totalorder 1, %s41
      %p791 = scmp.lt.s32.totalorder %s41, 3
      %p792 = pnand %p790, %p791
      %p793 = pneg %p792
      // Predicated region
      $region113: #{tpu_custom_call.1} parent=5 // pred_check
        _
      $region114: #{tpu_custom_call.1} parent=5 // pred_check_branch
        %795 = sbr.rel (%p792) target = $region116
      $region115: #{tpu_custom_call.1} parent=5 // pred_region
        %s796 = ssub.s32 %s41, 1
        // Predicated region
        $region117: #{tpu_custom_call.1} parent=115 // pred_check
          %p797 = pneg %p88
        $region118: #{tpu_custom_call.1} parent=115 // pred_check_branch
          %799 = sbr.rel (%p797) target = $region120
        $region119: #{tpu_custom_call.1} parent=115 // pred_region
          %800 = dma.done [#allocation3], 128
        $region120: #{tpu_custom_call.1} parent=115 // pred_fallthru
          _
        // Predicated region
        $region121: #{tpu_custom_call.1} parent=115 // pred_check
          %p801 = pneg %p109
        $region122: #{tpu_custom_call.1} parent=115 // pred_check_branch
          %803 = sbr.rel (%p801) target = $region124
        $region123: #{tpu_custom_call.1} parent=115 // pred_region
          %804 = dma.done [#allocation6], 16
        $region124: #{tpu_custom_call.1} parent=115 // pred_fallthru
          _
        // Predicated region
        $region125: #{tpu_custom_call.1} parent=115 // pred_check
          %p805 = pneg %p151
        $region126: #{tpu_custom_call.1} parent=115 // pred_check_branch
          %807 = sbr.rel (%p805) target = $region128
        $region127: #{tpu_custom_call.1} parent=115 // pred_region
          %808 = dma.done [#allocation6], 256
        $region128: #{tpu_custom_call.1} parent=115 // pred_fallthru
          _
        // Predicated region
        $region129: #{tpu_custom_call.1} parent=115 // pred_check
          %p809 = pneg %p172
        $region130: #{tpu_custom_call.1} parent=115 // pred_check_branch
          %811 = sbr.rel (%p809) target = $region132
        $region131: #{tpu_custom_call.1} parent=115 // pred_region
          %812 = dma.done [#allocation9], 16
        $region132: #{tpu_custom_call.1} parent=115 // pred_fallthru
          _
        // Predicated region
        $region133: #{tpu_custom_call.1} parent=115 // pred_check
          %p813 = pneg %p193
        $region134: #{tpu_custom_call.1} parent=115 // pred_check_branch
          %815 = sbr.rel (%p813) target = $region136
        $region135: #{tpu_custom_call.1} parent=115 // pred_region
          %816 = dma.done [#allocation9], 16
        $region136: #{tpu_custom_call.1} parent=115 // pred_fallthru
          _
        // Predicated region
        $region137: #{tpu_custom_call.1} parent=115 // pred_check
          %p817 = pneg %p214
        $region138: #{tpu_custom_call.1} parent=115 // pred_check_branch
          %819 = sbr.rel (%p817) target = $region140
        $region139: #{tpu_custom_call.1} parent=115 // pred_region
          %820 = dma.done [#allocation12], 16
        $region140: #{tpu_custom_call.1} parent=115 // pred_fallthru
          _
        // Predicated region
        $region141: #{tpu_custom_call.1} parent=115 // pred_check
          %p821 = pneg %p235
        $region142: #{tpu_custom_call.1} parent=115 // pred_check_branch
          %823 = sbr.rel (%p821) target = $region144
        $region143: #{tpu_custom_call.1} parent=115 // pred_region
          %824 = dma.done [#allocation12], 256
        $region144: #{tpu_custom_call.1} parent=115 // pred_fallthru
          _
        // Predicated region
        $region145: #{tpu_custom_call.1} parent=115 // pred_check
          %p825 = pneg %p277
        $region146: #{tpu_custom_call.1} parent=115 // pred_check_branch
          %827 = sbr.rel (%p825) target = $region148
        $region147: #{tpu_custom_call.1} parent=115 // pred_region
          %828 = dma.done [#allocation15], 16
        $region148: #{tpu_custom_call.1} parent=115 // pred_fallthru
          _
        // Predicated region
        $region149: #{tpu_custom_call.1} parent=115 // pred_check
          %p829 = pneg %p298
        $region150: #{tpu_custom_call.1} parent=115 // pred_check_branch
          %831 = sbr.rel (%p829) target = $region152
        $region151: #{tpu_custom_call.1} parent=115 // pred_region
          %832 = dma.done [#allocation15], 16
        $region152: #{tpu_custom_call.1} parent=115 // pred_fallthru
          _
        // Predicated region
        $region153: #{tpu_custom_call.1} parent=115 // pred_check
          %p833 = pneg %p319
        $region154: #{tpu_custom_call.1} parent=115 // pred_check_branch
          %835 = sbr.rel (%p833) target = $region156
        $region155: #{tpu_custom_call.1} parent=115 // pred_region
          %836 = dma.done [#allocation18], 16
        $region156: #{tpu_custom_call.1} parent=115 // pred_fallthru
          _
        // Predicated region
        $region157: #{tpu_custom_call.1} parent=115 // pred_check
          %p837 = pneg %p361
        $region158: #{tpu_custom_call.1} parent=115 // pred_check_branch
          %839 = sbr.rel (%p837) target = $region160
        $region159: #{tpu_custom_call.1} parent=115 // pred_region
          %840 = dma.done [#allocation18], 16
        $region160: #{tpu_custom_call.1} parent=115 // pred_fallthru
          _
        // Predicated region
        $region161: #{tpu_custom_call.1} parent=115 // pred_check
          %p841 = pneg %p403
        $region162: #{tpu_custom_call.1} parent=115 // pred_check_branch
          %843 = sbr.rel (%p841) target = $region164
        $region163: #{tpu_custom_call.1} parent=115 // pred_region
          %844 = dma.done [#allocation21], 16
        $region164: #{tpu_custom_call.1} parent=115 // pred_fallthru
          _
        // Predicated region
        $region165: #{tpu_custom_call.1} parent=115 // pred_check
          %p845 = pneg %p424
        $region166: #{tpu_custom_call.1} parent=115 // pred_check_branch
          %847 = sbr.rel (%p845) target = $region168
        $region167: #{tpu_custom_call.1} parent=115 // pred_region
          %848 = dma.done [#allocation21], 16
        $region168: #{tpu_custom_call.1} parent=115 // pred_fallthru
          _
        // Predicated region
        $region169: #{tpu_custom_call.1} parent=115 // pred_check
          %p849 = pneg %p487
        $region170: #{tpu_custom_call.1} parent=115 // pred_check_branch
          %851 = sbr.rel (%p849) target = $region172
        $region171: #{tpu_custom_call.1} parent=115 // pred_region
          %852 = dma.done [#allocation24], 256
        $region172: #{tpu_custom_call.1} parent=115 // pred_fallthru
          _
        %p853 = scmp.lt.s32.totalorder %s46, 1
        %s854 = scalar_select %p853, %s46, 1
        %s855 = smul.addr %s854, 2
        %s856 = smul.addr %s855, 8
        %s857 = scalar_lea.vmem %s0, %s856
        %p858 = pneg %p67
        %p859 = pneg %p64
        %p860 = pneg %p88
        %p861 = pneg %p85
        %p862 = pneg %p109
        %p863 = pneg %p106
        %p864 = pneg %p130
        %p865 = pneg %p127
        %p866 = pneg %p151
        %p867 = pneg %p148
        %p868 = pneg %p172
        %p869 = pneg %p169
        %p870 = pneg %p193
        %p871 = pneg %p190
        %p872 = pneg %p214
        %p873 = pneg %p211
        %p874 = pneg %p235
        %p875 = pneg %p232
        %p876 = pneg %p256
        %p877 = pneg %p253
        %p878 = pneg %p277
        %p879 = pneg %p274
        %p880 = pneg %p298
        %p881 = pneg %p295
        %p882 = pneg %p319
        %p883 = pneg %p316
        %p884 = pneg %p340
        %p885 = pneg %p337
        %p886 = pneg %p361
        %p887 = pneg %p358
        %p888 = pneg %p382
        %p889 = pneg %p379
        %p890 = pneg %p403
        %p891 = pneg %p400
        %p892 = pneg %p424
        %p893 = pneg %p421
        %p894 = pneg %p445
        %p895 = pneg %p442
        %p896 = pneg %p466
        %p897 = pneg %p463
        %p898 = pneg %p487
        %p899 = pneg %p484
        %p900 = pneg %p508
        %p901 = pneg %p505
        %p902 = pneg %p529
        %p903 = pneg %p526
        %p904 = pneg %p550
        %p905 = pneg %p547
        %p906 = pneg %p576
        %p907 = pneg %p573
        %s908 = sand.u32 %s563, 1
        %s909 = scalar_lea.sflag [#allocation4], %s908
        %s910 = sand.u32 %s563, 1
        %s911 = scalar_lea.vmem [#allocation25], %s910
        %p912 = scmp.lt.s32.totalorder %s46, 1
        %s913 = scalar_select %p912, %s46, 1
        %s914 = smul.addr %s913, 2
        %s915 = smul.addr %s914, 8
        %s916 = scalar_lea.vmem %s0, %s915
        %v918 = vld [vmem:[%s916] sm:$0xff]
        %v919 = vld [vmem:[%s916 + $0x8] sm:$0xff]
        %v920 = vpack.c.bf16 %v919, %v918
        %v921 = vld [vmem:[#allocation7] sm:$0xf]
        %v922 = vld [vmem:[#allocation7 + $0x4] sm:$0xf]
        %v923 = vld [vmem:[#allocation7 + $0x8] sm:$0xf]
        %v924 = vld [vmem:[#allocation7 + $0xc] sm:$0xf]
        %v925 = vld [vmem:[#allocation8] sm:$0x1]
        %v927 = vlaneseq
        %v928 = vshrl.u32 %v927, 7
        %v929 = vsub.s32 0, %v928
        %v930 = vrot.slane %v925, %v929
        %v936 = vunpack.c.l.b16 %v921
        %v937 = vunpack.c.l.b16 %v922
        %v938 = vunpack.c.l.b16 %v923
        %v939 = vunpack.c.l.b16 %v924
        %v940 = vpack.c.b16 %v937, %v936
        %v941 = vpack.c.b16 %v939, %v938
        %vm944 = vcmask 261120
        %v946 = vsel %vm944, %v920, 0
        %948 = vmatprep.subr.bf16.mxu0 0
        %949 = vmatpush1.bf16.msra.mxu0 %v940
        %950 = vmatprep.subr.bf16.mxu0 0
        %951 = vmatpush1.bf16.msra.mxu0 %v941
        %952 = vmatprep.subr.bf16.mxu0 0
        %953 = vmatpush1.bf16.msra.mxu0 0
        %954 = vmatprep.subr.bf16.mxu0 0
        %955 = vmatpush1.bf16.msra.mxu0 0
        %956 = vmatprep.subr.bf16.mxu0 0
        %957 = vmatpush1.bf16.msra.mxu0 0
        %958 = vmatprep.subr.bf16.mxu0 0
        %959 = vmatpush1.bf16.msra.mxu0 0
        %960 = vmatprep.subr.bf16.mxu0 0
        %961 = vmatpush1.bf16.msra.mxu0 0
        %962 = vmatprep.subr.bf16.mxu0 0
        %963 = vmatpush1.bf16.msra.mxu0 0
        %964 = vmatprep.subr.bf16.mxu0 0
        %965 = vmatpush1.bf16.msra.mxu0 0
        %966 = vmatprep.subr.bf16.mxu0 0
        %967 = vmatpush1.bf16.msra.mxu0 0
        %968 = vmatprep.subr.bf16.mxu0 0
        %969 = vmatpush1.bf16.msra.mxu0 0
        %970 = vmatprep.subr.bf16.mxu0 0
        %971 = vmatpush1.bf16.msra.mxu0 0
        %972 = vmatprep.subr.bf16.mxu0 0
        %973 = vmatpush1.bf16.msra.mxu0 0
        %974 = vmatprep.subr.bf16.mxu0 0
        %975 = vmatpush1.bf16.msra.mxu0 0
        %976 = vmatprep.subr.bf16.mxu0 0
        %977 = vmatpush1.bf16.msra.mxu0 0
        %978 = vmatprep.subr.bf16.mxu0 0
        %979 = vmatpush1.bf16.msra.mxu0 0
        %980 = vmatprep.mubr.bf16.mxu0 0
        %981 = vmatmul.mubr.bf16.gmra.mrb[0].mxu0 %v946
        %v982 = vpop.f32.mrb[0].mxu0
        %v983 = vadd.f32 %v930, %v982
        %v984 = vpop.f32.mrb[0].mxu0
        %v985 = vpop.f32.mrb[0].mxu0
        %v986 = vadd.f32 %v930, %v985
        %v987 = vpop.f32.mrb[0].mxu0
        %988 = vdwg.mxu0
        %v989 = vlaneseq
        %v990 = vshrl.u32 %v989, 7
        %v991 = vadd.s32 %v990, 8
        %vm992 = vcmp.eq.s32.totalorder %v990, 0
        %vm993 = vcmp.eq.s32.totalorder %v991, 0
        %v994 = vld [vmem:[#allocation5] sm:$0x1]
        %v995 = vsel %vm992, 1, 0
        %v996 = vsel %vm993, 1, 0
        %vm997 = vcmp.eq.s32.totalorder %v995, 1
        %vm998 = vcmp.eq.s32.totalorder %v996, 1
        %v1000 = vlaneseq
        %v1001 = vshrl.u32 %v1000, 7
        %v1002 = vsub.s32 0, %v1001
        %v1003 = vrot.slane %v994, %v1002
        %v1005 = vsel %vm997, %v1003, %v983
        %v1006 = vsel %vm998, %v1003, %v986
        %v1007 = vld [vmem:[%s3] sm:$0xff]
        %v1008 = vld [vmem:[%s3 + $0x8] sm:$0xff]
        %v1009 = vadd.f32 %v1005, %v1007
        %v1010 = vadd.f32 %v1006, %v1008
        %v1011 = vld [vmem:[#allocation10] sm:$0x1]
        %v1012 = vld [vmem:[#allocation11] sm:$0x1]
        %v1013 = vsel %vm944, %v1009, 0.0
        %1014 = vadd.xlane.f32.xlu0 %v1013
        %v1015 = vpop.xlane.xlu0 %1014
        %v1016 = vsel %vm944, %v1010, 0.0
        %1017 = vadd.xlane.f32.xlu0 %v1016
        %v1018 = vpop.xlane.xlu0 %1017
        %v1019 = vrcp.pop 32.0
        %v1020 = vmul.f32 %v1015, %v1019
        %v1021 = vmul.f32 %v1018, %v1019
        %v1022 = vsub.f32 %v1009, %v1020
        %v1023 = vsub.f32 %v1010, %v1021
        %v1024 = vmul.f32 %v1022, %v1022
        %v1025 = vmul.f32 %v1023, %v1023
        %v1026 = vsel %vm944, %v1024, 0.0
        %1027 = vadd.xlane.f32.xlu0 %v1026
        %v1028 = vpop.xlane.xlu0 %1027
        %v1029 = vsel %vm944, %v1025, 0.0
        %1030 = vadd.xlane.f32.xlu0 %v1029
        %v1031 = vpop.xlane.xlu0 %1030
        %v1032 = vmul.f32 %v1028, %v1019
        %v1033 = vmul.f32 %v1031, %v1019
        %v1034 = vadd.f32 %v1032, 1e-05
        %v1035 = vadd.f32 %v1033, 1e-05
        %v1036 = vrsqrt.pop %v1034
        %v1037 = vrsqrt.pop %v1035
        %v1038 = vmul.f32 %v1022, %v1036
        %v1039 = vmul.f32 %v1023, %v1037
        %v1041 = vlaneseq
        %v1042 = vshrl.u32 %v1041, 7
        %v1043 = vsub.s32 0, %v1042
        %v1044 = vrot.slane %v1011, %v1043
        %v1046 = vmul.f32 %v1038, %v1044
        %v1047 = vmul.f32 %v1039, %v1044
        %v1049 = vlaneseq
        %v1050 = vshrl.u32 %v1049, 7
        %v1051 = vsub.s32 0, %v1050
        %v1052 = vrot.slane %v1012, %v1051
        %v1054 = vadd.f32 %v1046, %v1052
        %v1055 = vadd.f32 %v1047, %v1052
        %v1056 = vpack.c.bf16 %v1055, %v1054
        %v1057 = vld [vmem:[#allocation13] sm:$0xf]
        %v1058 = vld [vmem:[#allocation13 + $0x4] sm:$0xf]
        %v1059 = vld [vmem:[#allocation13 + $0x8] sm:$0xf]
        %v1060 = vld [vmem:[#allocation13 + $0xc] sm:$0xf]
        %v1065 = vunpack.c.l.b16 %v1057
        %v1066 = vunpack.c.l.b16 %v1058
        %v1067 = vunpack.c.l.b16 %v1059
        %v1068 = vunpack.c.l.b16 %v1060
        %v1069 = vpack.c.b16 %v1066, %v1065
        %v1070 = vpack.c.b16 %v1068, %v1067
        %v1074 = vsel %vm944, %v1056, 0
        %1076 = vmatprep.subr.bf16.mxu0 0
        %1077 = vmatpush1.bf16.msra.mxu0 %v1069
        %1078 = vmatprep.subr.bf16.mxu0 0
        %1079 = vmatpush1.bf16.msra.mxu0 %v1070
        %1080 = vmatprep.subr.bf16.mxu0 0
        %1081 = vmatpush1.bf16.msra.mxu0 0
        %1082 = vmatprep.subr.bf16.mxu0 0
        %1083 = vmatpush1.bf16.msra.mxu0 0
        %1084 = vmatprep.subr.bf16.mxu0 0
        %1085 = vmatpush1.bf16.msra.mxu0 0
        %1086 = vmatprep.subr.bf16.mxu0 0
        %1087 = vmatpush1.bf16.msra.mxu0 0
        %1088 = vmatprep.subr.bf16.mxu0 0
        %1089 = vmatpush1.bf16.msra.mxu0 0
        %1090 = vmatprep.subr.bf16.mxu0 0
        %1091 = vmatpush1.bf16.msra.mxu0 0
        %1092 = vmatprep.subr.bf16.mxu0 0
        %1093 = vmatpush1.bf16.msra.mxu0 0
        %1094 = vmatprep.subr.bf16.mxu0 0
        %1095 = vmatpush1.bf16.msra.mxu0 0
        %1096 = vmatprep.subr.bf16.mxu0 0
        %1097 = vmatpush1.bf16.msra.mxu0 0
        %1098 = vmatprep.subr.bf16.mxu0 0
        %1099 = vmatpush1.bf16.msra.mxu0 0
        %1100 = vmatprep.subr.bf16.mxu0 0
        %1101 = vmatpush1.bf16.msra.mxu0 0
        %1102 = vmatprep.subr.bf16.mxu0 0
        %1103 = vmatpush1.bf16.msra.mxu0 0
        %1104 = vmatprep.subr.bf16.mxu0 0
        %1105 = vmatpush1.bf16.msra.mxu0 0
        %1106 = vmatprep.subr.bf16.mxu0 0
        %1107 = vmatpush1.bf16.msra.mxu0 0
        %1108 = vmatprep.mubr.bf16.mxu0 0
        %1109 = vmatmul.mubr.bf16.gmra.mrb[0].mxu0 %v1074
        %v1110 = vpop.f32.mrb[0].mxu0
        %v1111 = vadd.f32 0.0, %v1110
        %v1112 = vpop.f32.mrb[0].mxu0
        %v1113 = vpop.f32.mrb[0].mxu0
        %v1114 = vadd.f32 0.0, %v1113
        %v1115 = vpop.f32.mrb[0].mxu0
        %1116 = vdwg.mxu0
        %v1117 = vpack.c.bf16 %v1114, %v1111
        %v1118 = vlaneseq
        %v1119 = vand.u32 %v1118, 127
        %vm1120 = vcmp.lt.s32.totalorder %v1119, 9
        %1122 = vrot.lane.b32.xlu0 %v1117, 96
        %v1123 = vpop.permute.xlu0 %1122
        %vm1124 = vcmask 64512
        %v1126 = vsel %vm1124, %v1117, 0
        %v1129 = vsel %vm1124, %v1123, 0
        %1131 = vmatprep.subr.bf16.mxu0 0
        %1132 = vmatpush1.bf16.xpose.msra.mxu0 %v1129
        %1133 = vmatprep.subr.bf16.mxu0 0
        %1134 = vmatpush1.bf16.xpose.msra.mxu0 0
        %1135 = vmatprep.subr.bf16.mxu0 0
        %1136 = vmatpush1.bf16.xpose.msra.mxu0 0
        %1137 = vmatprep.subr.bf16.mxu0 0
        %1138 = vmatpush1.bf16.xpose.msra.mxu0 0
        %1139 = vmatprep.subr.bf16.mxu0 0
        %1140 = vmatpush1.bf16.xpose.msra.mxu0 0
        %1141 = vmatprep.subr.bf16.mxu0 0
        %1142 = vmatpush1.bf16.xpose.msra.mxu0 0
        %1143 = vmatprep.subr.bf16.mxu0 0
        %1144 = vmatpush1.bf16.xpose.msra.mxu0 0
        %1145 = vmatprep.subr.bf16.mxu0 0
        %1146 = vmatpush1.bf16.xpose.msra.mxu0 0
        %1147 = vmatprep.subr.bf16.mxu0 0
        %1148 = vmatpush1.bf16.xpose.msra.mxu0 0
        %1149 = vmatprep.subr.bf16.mxu0 0
        %1150 = vmatpush1.bf16.xpose.msra.mxu0 0
        %1151 = vmatprep.subr.bf16.mxu0 0
        %1152 = vmatpush1.bf16.xpose.msra.mxu0 0
        %1153 = vmatprep.subr.bf16.mxu0 0
        %1154 = vmatpush1.bf16.xpose.msra.mxu0 0
        %1155 = vmatprep.subr.bf16.mxu0 0
        %1156 = vmatpush1.bf16.xpose.msra.mxu0 0
        %1157 = vmatprep.subr.bf16.mxu0 0
        %1158 = vmatpush1.bf16.xpose.msra.mxu0 0
        %1159 = vmatprep.subr.bf16.mxu0 0
        %1160 = vmatpush1.bf16.xpose.msra.mxu0 0
        %1161 = vmatprep.subr.bf16.mxu0 0
        %1162 = vmatpush1.bf16.xpose.msra.mxu0 0
        %1163 = vmatprep.mubr.bf16.mxu0 0
        %1164 = vmatmul.mubr.bf16.gmra.mrb[0].mxu0 %v1126
        %v1165 = vpop.f32.mrb[0].mxu0
        %v1166 = vadd.f32 0.0, %v1165
        %v1167 = vpop.f32.mrb[0].mxu0
        %v1168 = vpop.f32.mrb[0].mxu0
        %v1169 = vadd.f32 0.0, %v1168
        %v1170 = vpop.f32.mrb[0].mxu0
        %1171 = vdwg.mxu0
        %v1172 = vmul.f32 %v1166, 0.35355338
        %v1173 = vmul.f32 %v1169, 0.35355338
        %v1174 = vsel %vm1120, 1, 0
        %vm1175 = vcmp.eq.s32.totalorder %v1174, 1
        %v1176 = vsel %vm1175, %v1172, -1e+30
        %v1177 = vsel %vm1175, %v1173, -1e+30
        %vm1178 = vcmask 130048
        %v1179 = vsel %vm1178, %v1176, -inf
        %1180 = vmax.xlane.f32.xlu0 %v1179
        %v1181 = vpop.xlane.xlu0 %1180
        %v1182 = vsel %vm1178, %v1177, -inf
        %1183 = vmax.xlane.f32.xlu0 %v1182
        %v1184 = vpop.xlane.xlu0 %1183
        %v1185 = vsub.f32 %v1176, %v1181
        %v1186 = vsub.f32 %v1177, %v1184
        %v1187 = vmul.f32 %v1185, 1.442695
        %v1188 = vpow.pop %v1187
        %v1189 = vmul.f32 %v1186, 1.442695
        %v1190 = vpow.pop %v1189
        %v1191 = vsel %vm1178, %v1188, 0.0
        %1192 = vadd.xlane.f32.xlu0 %v1191
        %v1193 = vpop.xlane.xlu0 %1192
        %v1194 = vsel %vm1178, %v1190, 0.0
        %1195 = vadd.xlane.f32.xlu0 %v1194
        %v1196 = vpop.xlane.xlu0 %1195
        %v1197 = vrcp.pop %v1193
        %v1198 = vrcp.pop %v1196
        %v1199 = vmul.f32 %v1188, %v1197
        %v1200 = vmul.f32 %v1190, %v1198
        %v1201 = vpack.c.bf16 %v1200, %v1199
        %1202 = vrot.lane.b32.xlu0 %v1117, 64
        %v1203 = vpop.permute.xlu0 %1202
        %v1206 = vsel %vm1178, %v1201, 0
        %1208 = vmatprep.subr.bf16.mxu0 0
        %1209 = vmatpush1.bf16.msra.mxu0 %v1203
        %1210 = vmatprep.subr.bf16.mxu0 0
        %1211 = vmatpush1.bf16.msra.mxu0 0
        %1212 = vmatprep.subr.bf16.mxu0 0
        %1213 = vmatpush1.bf16.msra.mxu0 0
        %1214 = vmatprep.subr.bf16.mxu0 0
        %1215 = vmatpush1.bf16.msra.mxu0 0
        %1216 = vmatprep.subr.bf16.mxu0 0
        %1217 = vmatpush1.bf16.msra.mxu0 0
        %1218 = vmatprep.subr.bf16.mxu0 0
        %1219 = vmatpush1.bf16.msra.mxu0 0
        %1220 = vmatprep.subr.bf16.mxu0 0
        %1221 = vmatpush1.bf16.msra.mxu0 0
        %1222 = vmatprep.subr.bf16.mxu0 0
        %1223 = vmatpush1.bf16.msra.mxu0 0
        %1224 = vmatprep.subr.bf16.mxu0 0
        %1225 = vmatpush1.bf16.msra.mxu0 0
        %1226 = vmatprep.subr.bf16.mxu0 0
        %1227 = vmatpush1.bf16.msra.mxu0 0
        %1228 = vmatprep.subr.bf16.mxu0 0
        %1229 = vmatpush1.bf16.msra.mxu0 0
        %1230 = vmatprep.subr.bf16.mxu0 0
        %1231 = vmatpush1.bf16.msra.mxu0 0
        %1232 = vmatprep.subr.bf16.mxu0 0
        %1233 = vmatpush1.bf16.msra.mxu0 0
        %1234 = vmatprep.subr.bf16.mxu0 0
        %1235 = vmatpush1.bf16.msra.mxu0 0
        %1236 = vmatprep.subr.bf16.mxu0 0
        %1237 = vmatpush1.bf16.msra.mxu0 0
        %1238 = vmatprep.subr.bf16.mxu0 0
        %1239 = vmatpush1.bf16.msra.mxu0 0
        %1240 = vmatprep.mubr.bf16.mxu0 0
        %1241 = vmatmul.mubr.bf16.gmra.mrb[0].mxu0 %v1206
        %v1242 = vpop.f32.mrb[0].mxu0
        %v1243 = vadd.f32 0.0, %v1242
        %v1244 = vpop.f32.mrb[0].mxu0
        %v1245 = vpop.f32.mrb[0].mxu0
        %v1246 = vadd.f32 0.0, %v1245
        %v1247 = vpop.f32.mrb[0].mxu0
        %1248 = vdwg.mxu0
        %v1249 = vpack.c.bf16 %v1246, %v1243
        %v1250 = vld [vmem:[%s9] sm:$0xf]
        %1251 = vrot.lane.b32.xlu0 %v1117, 120
        %v1252 = vpop.permute.xlu0 %1251
        %1253 = vrot.lane.b32.xlu0 %v1117, 88
        %v1254 = vpop.permute.xlu0 %1253
        %v1256 = vsel %vm1124, %v1252, 0
        %v1259 = vsel %vm1124, %v1254, 0
        %1261 = vmatprep.subr.bf16.mxu0 0
        %1262 = vmatpush1.bf16.xpose.msra.mxu0 %v1259
        %1263 = vmatprep.subr.bf16.mxu0 0
        %1264 = vmatpush1.bf16.xpose.msra.mxu0 0
        %1265 = vmatprep.subr.bf16.mxu0 0
        %1266 = vmatpush1.bf16.xpose.msra.mxu0 0
        %1267 = vmatprep.subr.bf16.mxu0 0
        %1268 = vmatpush1.bf16.xpose.msra.mxu0 0
        %1269 = vmatprep.subr.bf16.mxu0 0
        %1270 = vmatpush1.bf16.xpose.msra.mxu0 0
        %1271 = vmatprep.subr.bf16.mxu0 0
        %1272 = vmatpush1.bf16.xpose.msra.mxu0 0
        %1273 = vmatprep.subr.bf16.mxu0 0
        %1274 = vmatpush1.bf16.xpose.msra.mxu0 0
        %1275 = vmatprep.subr.bf16.mxu0 0
        %1276 = vmatpush1.bf16.xpose.msra.mxu0 0
        %1277 = vmatprep.subr.bf16.mxu0 0
        %1278 = vmatpush1.bf16.xpose.msra.mxu0 0
        %1279 = vmatprep.subr.bf16.mxu0 0
        %1280 = vmatpush1.bf16.xpose.msra.mxu0 0
        %1281 = vmatprep.subr.bf16.mxu0 0
        %1282 = vmatpush1.bf16.xpose.msra.mxu0 0
        %1283 = vmatprep.subr.bf16.mxu0 0
        %1284 = vmatpush1.bf16.xpose.msra.mxu0 0
        %1285 = vmatprep.subr.bf16.mxu0 0
        %1286 = vmatpush1.bf16.xpose.msra.mxu0 0
        %1287 = vmatprep.subr.bf16.mxu0 0
        %1288 = vmatpush1.bf16.xpose.msra.mxu0 0
        %1289 = vmatprep.subr.bf16.mxu0 0
        %1290 = vmatpush1.bf16.xpose.msra.mxu0 0
        %1291 = vmatprep.subr.bf16.mxu0 0
        %1292 = vmatpush1.bf16.xpose.msra.mxu0 0
        %1293 = vmatprep.mubr.bf16.mxu0 0
        %1294 = vmatmul.mubr.bf16.gmra.mrb[0].mxu0 %v1256
        %v1295 = vpop.f32.mrb[0].mxu0
        %v1296 = vadd.f32 0.0, %v1295
        %v1297 = vpop.f32.mrb[0].mxu0
        %v1298 = vpop.f32.mrb[0].mxu0
        %v1299 = vadd.f32 0.0, %v1298
        %v1300 = vpop.f32.mrb[0].mxu0
        %1301 = vdwg.mxu0
        %v1302 = vmul.f32 %v1296, 0.35355338
        %v1303 = vmul.f32 %v1299, 0.35355338
        %v1304 = vsel %vm1175, %v1302, -1e+30
        %v1305 = vsel %vm1175, %v1303, -1e+30
        %v1306 = vsel %vm1178, %v1304, -inf
        %1307 = vmax.xlane.f32.xlu0 %v1306
        %v1308 = vpop.xlane.xlu0 %1307
        %v1309 = vsel %vm1178, %v1305, -inf
        %1310 = vmax.xlane.f32.xlu0 %v1309
        %v1311 = vpop.xlane.xlu0 %1310
        %v1312 = vsub.f32 %v1304, %v1308
        %v1313 = vsub.f32 %v1305, %v1311
        %v1314 = vmul.f32 %v1312, 1.442695
        %v1315 = vpow.pop %v1314
        %v1316 = vmul.f32 %v1313, 1.442695
        %v1317 = vpow.pop %v1316
        %v1318 = vsel %vm1178, %v1315, 0.0
        %1319 = vadd.xlane.f32.xlu0 %v1318
        %v1320 = vpop.xlane.xlu0 %1319
        %v1321 = vsel %vm1178, %v1317, 0.0
        %1322 = vadd.xlane.f32.xlu0 %v1321
        %v1323 = vpop.xlane.xlu0 %1322
        %v1324 = vrcp.pop %v1320
        %v1325 = vrcp.pop %v1323
        %v1326 = vmul.f32 %v1315, %v1324
        %v1327 = vmul.f32 %v1317, %v1325
        %v1328 = vpack.c.bf16 %v1327, %v1326
        %1329 = vrot.lane.b32.xlu0 %v1117, 56
        %v1330 = vpop.permute.xlu0 %1329
        %v1333 = vsel %vm1178, %v1328, 0
        %1335 = vmatprep.subr.bf16.mxu0 0
        %1336 = vmatpush1.bf16.msra.mxu0 %v1330
        %1337 = vmatprep.subr.bf16.mxu0 0
        %1338 = vmatpush1.bf16.msra.mxu0 0
        %1339 = vmatprep.subr.bf16.mxu0 0
        %1340 = vmatpush1.bf16.msra.mxu0 0
        %1341 = vmatprep.subr.bf16.mxu0 0
        %1342 = vmatpush1.bf16.msra.mxu0 0
        %1343 = vmatprep.subr.bf16.mxu0 0
        %1344 = vmatpush1.bf16.msra.mxu0 0
        %1345 = vmatprep.subr.bf16.mxu0 0
        %1346 = vmatpush1.bf16.msra.mxu0 0
        %1347 = vmatprep.subr.bf16.mxu0 0
        %1348 = vmatpush1.bf16.msra.mxu0 0
        %1349 = vmatprep.subr.bf16.mxu0 0
        %1350 = vmatpush1.bf16.msra.mxu0 0
        %1351 = vmatprep.subr.bf16.mxu0 0
        %1352 = vmatpush1.bf16.msra.mxu0 0
        %1353 = vmatprep.subr.bf16.mxu0 0
        %1354 = vmatpush1.bf16.msra.mxu0 0
        %1355 = vmatprep.subr.bf16.mxu0 0
        %1356 = vmatpush1.bf16.msra.mxu0 0
        %1357 = vmatprep.subr.bf16.mxu0 0
        %1358 = vmatpush1.bf16.msra.mxu0 0
        %1359 = vmatprep.subr.bf16.mxu0 0
        %1360 = vmatpush1.bf16.msra.mxu0 0
        %1361 = vmatprep.subr.bf16.mxu0 0
        %1362 = vmatpush1.bf16.msra.mxu0 0
        %1363 = vmatprep.subr.bf16.mxu0 0
        %1364 = vmatpush1.bf16.msra.mxu0 0
        %1365 = vmatprep.subr.bf16.mxu0 0
        %1366 = vmatpush1.bf16.msra.mxu0 0
        %1367 = vmatprep.mubr.bf16.mxu0 0
        %1368 = vmatmul.mubr.bf16.gmra.mrb[0].mxu0 %v1333
        %v1369 = vpop.f32.mrb[0].mxu0
        %v1370 = vadd.f32 0.0, %v1369
        %v1371 = vpop.f32.mrb[0].mxu0
        %v1372 = vpop.f32.mrb[0].mxu0
        %v1373 = vadd.f32 0.0, %v1372
        %v1374 = vpop.f32.mrb[0].mxu0
        %1375 = vdwg.mxu0
        %v1376 = vpack.c.bf16 %v1373, %v1370
        %s1377 = scalar_lea.vmem %s9, 4
        %v1378 = vld [vmem:[%s1377] sm:$0xf]
        %v1380 = vsel %vm1124, %v1376, 0
        %vm1382 = vcmask 1043456
        %v1384 = vsel %vm1382, %v1378, 0
        %1386 = vmatprep.subr.bf16.mxu0 0
        %1387 = vmatpush1.bf16.msra.mxu0 %v1384
        %1388 = vmatprep.subr.bf16.mxu0 0
        %1389 = vmatpush1.bf16.msra.mxu0 0
        %1390 = vmatprep.subr.bf16.mxu0 0
        %1391 = vmatpush1.bf16.msra.mxu0 0
        %1392 = vmatprep.subr.bf16.mxu0 0
        %1393 = vmatpush1.bf16.msra.mxu0 0
        %1394 = vmatprep.subr.bf16.mxu0 0
        %1395 = vmatpush1.bf16.msra.mxu0 0
        %1396 = vmatprep.subr.bf16.mxu0 0
        %1397 = vmatpush1.bf16.msra.mxu0 0
        %1398 = vmatprep.subr.bf16.mxu0 0
        %1399 = vmatpush1.bf16.msra.mxu0 0
        %1400 = vmatprep.subr.bf16.mxu0 0
        %1401 = vmatpush1.bf16.msra.mxu0 0
        %1402 = vmatprep.subr.bf16.mxu0 0
        %1403 = vmatpush1.bf16.msra.mxu0 0
        %1404 = vmatprep.subr.bf16.mxu0 0
        %1405 = vmatpush1.bf16.msra.mxu0 0
        %1406 = vmatprep.subr.bf16.mxu0 0
        %1407 = vmatpush1.bf16.msra.mxu0 0
        %1408 = vmatprep.subr.bf16.mxu0 0
        %1409 = vmatpush1.bf16.msra.mxu0 0
        %1410 = vmatprep.subr.bf16.mxu0 0
        %1411 = vmatpush1.bf16.msra.mxu0 0
        %1412 = vmatprep.subr.bf16.mxu0 0
        %1413 = vmatpush1.bf16.msra.mxu0 0
        %1414 = vmatprep.subr.bf16.mxu0 0
        %1415 = vmatpush1.bf16.msra.mxu0 0
        %1416 = vmatprep.subr.bf16.mxu0 0
        %1417 = vmatpush1.bf16.msra.mxu0 0
        %1418 = vmatprep.mubr.bf16.mxu0 0
        %1419 = vmatmul.mubr.bf16.gmra.mrb[0].mxu0 %v1380
        %v1420 = vpop.f32.mrb[0].mxu0
        %v1421 = vadd.f32 0.0, %v1420
        %v1422 = vpop.f32.mrb[0].mxu0
        %v1423 = vpop.f32.mrb[0].mxu0
        %v1424 = vadd.f32 0.0, %v1423
        %v1425 = vpop.f32.mrb[0].mxu0
        %1426 = vdwg.mxu0
        %v1428 = vsel %vm1124, %v1249, 0
        %v1431 = vsel %vm1382, %v1250, 0
        %1433 = vmatprep.subr.bf16.mxu0 0
        %1434 = vmatpush1.bf16.msra.mxu0 %v1431
        %1435 = vmatprep.subr.bf16.mxu0 0
        %1436 = vmatpush1.bf16.msra.mxu0 0
        %1437 = vmatprep.subr.bf16.mxu0 0
        %1438 = vmatpush1.bf16.msra.mxu0 0
        %1439 = vmatprep.subr.bf16.mxu0 0
        %1440 = vmatpush1.bf16.msra.mxu0 0
        %1441 = vmatprep.subr.bf16.mxu0 0
        %1442 = vmatpush1.bf16.msra.mxu0 0
        %1443 = vmatprep.subr.bf16.mxu0 0
        %1444 = vmatpush1.bf16.msra.mxu0 0
        %1445 = vmatprep.subr.bf16.mxu0 0
        %1446 = vmatpush1.bf16.msra.mxu0 0
        %1447 = vmatprep.subr.bf16.mxu0 0
        %1448 = vmatpush1.bf16.msra.mxu0 0
        %1449 = vmatprep.subr.bf16.mxu0 0
        %1450 = vmatpush1.bf16.msra.mxu0 0
        %1451 = vmatprep.subr.bf16.mxu0 0
        %1452 = vmatpush1.bf16.msra.mxu0 0
        %1453 = vmatprep.subr.bf16.mxu0 0
        %1454 = vmatpush1.bf16.msra.mxu0 0
        %1455 = vmatprep.subr.bf16.mxu0 0
        %1456 = vmatpush1.bf16.msra.mxu0 0
        %1457 = vmatprep.subr.bf16.mxu0 0
        %1458 = vmatpush1.bf16.msra.mxu0 0
        %1459 = vmatprep.subr.bf16.mxu0 0
        %1460 = vmatpush1.bf16.msra.mxu0 0
        %1461 = vmatprep.subr.bf16.mxu0 0
        %1462 = vmatpush1.bf16.msra.mxu0 0
        %1463 = vmatprep.subr.bf16.mxu0 0
        %1464 = vmatpush1.bf16.msra.mxu0 0
        %1465 = vmatprep.mubr.bf16.mxu0 0
        %1466 = vmatmul.mubr.bf16.gmra.mrb[0].mxu0 %v1428
        %v1467 = vpop.f32.mrb[0].mxu0
        %v1468 = vadd.f32 %v1421, %v1467
        %v1469 = vpop.f32.mrb[0].mxu0
        %v1470 = vpop.f32.mrb[0].mxu0
        %v1471 = vadd.f32 %v1424, %v1470
        %v1472 = vpop.f32.mrb[0].mxu0
        %1473 = vdwg.mxu0
        %1474 = vrot.lane.b32.xlu0 %v1117, 112
        %v1475 = vpop.permute.xlu0 %1474
        %1476 = vrot.lane.b32.xlu0 %v1117, 80
        %v1477 = vpop.permute.xlu0 %1476
        %v1479 = vsel %vm1124, %v1475, 0
        %v1482 = vsel %vm1124, %v1477, 0
        %1484 = vmatprep.subr.bf16.mxu0 0
        %1485 = vmatpush1.bf16.xpose.msra.mxu0 %v1482
        %1486 = vmatprep.subr.bf16.mxu0 0
        %1487 = vmatpush1.bf16.xpose.msra.mxu0 0
        %1488 = vmatprep.subr.bf16.mxu0 0
        %1489 = vmatpush1.bf16.xpose.msra.mxu0 0
        %1490 = vmatprep.subr.bf16.mxu0 0
        %1491 = vmatpush1.bf16.xpose.msra.mxu0 0
        %1492 = vmatprep.subr.bf16.mxu0 0
        %1493 = vmatpush1.bf16.xpose.msra.mxu0 0
        %1494 = vmatprep.subr.bf16.mxu0 0
        %1495 = vmatpush1.bf16.xpose.msra.mxu0 0
        %1496 = vmatprep.subr.bf16.mxu0 0
        %1497 = vmatpush1.bf16.xpose.msra.mxu0 0
        %1498 = vmatprep.subr.bf16.mxu0 0
        %1499 = vmatpush1.bf16.xpose.msra.mxu0 0
        %1500 = vmatprep.subr.bf16.mxu0 0
        %1501 = vmatpush1.bf16.xpose.msra.mxu0 0
        %1502 = vmatprep.subr.bf16.mxu0 0
        %1503 = vmatpush1.bf16.xpose.msra.mxu0 0
        %1504 = vmatprep.subr.bf16.mxu0 0
        %1505 = vmatpush1.bf16.xpose.msra.mxu0 0
        %1506 = vmatprep.subr.bf16.mxu0 0
        %1507 = vmatpush1.bf16.xpose.msra.mxu0 0
        %1508 = vmatprep.subr.bf16.mxu0 0
        %1509 = vmatpush1.bf16.xpose.msra.mxu0 0
        %1510 = vmatprep.subr.bf16.mxu0 0
        %1511 = vmatpush1.bf16.xpose.msra.mxu0 0
        %1512 = vmatprep.subr.bf16.mxu0 0
        %1513 = vmatpush1.bf16.xpose.msra.mxu0 0
        %1514 = vmatprep.subr.bf16.mxu0 0
        %1515 = vmatpush1.bf16.xpose.msra.mxu0 0
        %1516 = vmatprep.mubr.bf16.mxu0 0
        %1517 = vmatmul.mubr.bf16.gmra.mrb[0].mxu0 %v1479
        %v1518 = vpop.f32.mrb[0].mxu0
        %v1519 = vadd.f32 0.0, %v1518
        %v1520 = vpop.f32.mrb[0].mxu0
        %v1521 = vpop.f32.mrb[0].mxu0
        %v1522 = vadd.f32 0.0, %v1521
        %v1523 = vpop.f32.mrb[0].mxu0
        %1524 = vdwg.mxu0
        %v1525 = vmul.f32 %v1519, 0.35355338
        %v1526 = vmul.f32 %v1522, 0.35355338
        %v1527 = vsel %vm1175, %v1525, -1e+30
        %v1528 = vsel %vm1175, %v1526, -1e+30
        %v1529 = vsel %vm1178, %v1527, -inf
        %1530 = vmax.xlane.f32.xlu0 %v1529
        %v1531 = vpop.xlane.xlu0 %1530
        %v1532 = vsel %vm1178, %v1528, -inf
        %1533 = vmax.xlane.f32.xlu0 %v1532
        %v1534 = vpop.xlane.xlu0 %1533
        %v1535 = vsub.f32 %v1527, %v1531
        %v1536 = vsub.f32 %v1528, %v1534
        %v1537 = vmul.f32 %v1535, 1.442695
        %v1538 = vpow.pop %v1537
        %v1539 = vmul.f32 %v1536, 1.442695
        %v1540 = vpow.pop %v1539
        %v1541 = vsel %vm1178, %v1538, 0.0
        %1542 = vadd.xlane.f32.xlu0 %v1541
        %v1543 = vpop.xlane.xlu0 %1542
        %v1544 = vsel %vm1178, %v1540, 0.0
        %1545 = vadd.xlane.f32.xlu0 %v1544
        %v1546 = vpop.xlane.xlu0 %1545
        %v1547 = vrcp.pop %v1543
        %v1548 = vrcp.pop %v1546
        %v1549 = vmul.f32 %v1538, %v1547
        %v1550 = vmul.f32 %v1540, %v1548
        %v1551 = vpack.c.bf16 %v1550, %v1549
        %1552 = vrot.lane.b32.xlu0 %v1117, 48
        %v1553 = vpop.permute.xlu0 %1552
        %v1556 = vsel %vm1178, %v1551, 0
        %1558 = vmatprep.subr.bf16.mxu0 0
        %1559 = vmatpush1.bf16.msra.mxu0 %v1553
        %1560 = vmatprep.subr.bf16.mxu0 0
        %1561 = vmatpush1.bf16.msra.mxu0 0
        %1562 = vmatprep.subr.bf16.mxu0 0
        %1563 = vmatpush1.bf16.msra.mxu0 0
        %1564 = vmatprep.subr.bf16.mxu0 0
        %1565 = vmatpush1.bf16.msra.mxu0 0
        %1566 = vmatprep.subr.bf16.mxu0 0
        %1567 = vmatpush1.bf16.msra.mxu0 0
        %1568 = vmatprep.subr.bf16.mxu0 0
        %1569 = vmatpush1.bf16.msra.mxu0 0
        %1570 = vmatprep.subr.bf16.mxu0 0
        %1571 = vmatpush1.bf16.msra.mxu0 0
        %1572 = vmatprep.subr.bf16.mxu0 0
        %1573 = vmatpush1.bf16.msra.mxu0 0
        %1574 = vmatprep.subr.bf16.mxu0 0
        %1575 = vmatpush1.bf16.msra.mxu0 0
        %1576 = vmatprep.subr.bf16.mxu0 0
        %1577 = vmatpush1.bf16.msra.mxu0 0
        %1578 = vmatprep.subr.bf16.mxu0 0
        %1579 = vmatpush1.bf16.msra.mxu0 0
        %1580 = vmatprep.subr.bf16.mxu0 0
        %1581 = vmatpush1.bf16.msra.mxu0 0
        %1582 = vmatprep.subr.bf16.mxu0 0
        %1583 = vmatpush1.bf16.msra.mxu0 0
        %1584 = vmatprep.subr.bf16.mxu0 0
        %1585 = vmatpush1.bf16.msra.mxu0 0
        %1586 = vmatprep.subr.bf16.mxu0 0
        %1587 = vmatpush1.bf16.msra.mxu0 0
        %1588 = vmatprep.subr.bf16.mxu0 0
        %1589 = vmatpush1.bf16.msra.mxu0 0
        %1590 = vmatprep.mubr.bf16.mxu0 0
        %1591 = vmatmul.mubr.bf16.gmra.mrb[0].mxu0 %v1556
        %v1592 = vpop.f32.mrb[0].mxu0
        %v1593 = vadd.f32 0.0, %v1592
        %v1594 = vpop.f32.mrb[0].mxu0
        %v1595 = vpop.f32.mrb[0].mxu0
        %v1596 = vadd.f32 0.0, %v1595
        %v1597 = vpop.f32.mrb[0].mxu0
        %1598 = vdwg.mxu0
        %v1599 = vpack.c.bf16 %v1596, %v1593
        %s1600 = scalar_lea.vmem %s9, 8
        %v1601 = vld [vmem:[%s1600] sm:$0xf]
        %v1603 = vsel %vm1124, %v1599, 0
        %v1606 = vsel %vm1382, %v1601, 0
        %1608 = vmatprep.subr.bf16.mxu0 0
        %1609 = vmatpush1.bf16.msra.mxu0 %v1606
        %1610 = vmatprep.subr.bf16.mxu0 0
        %1611 = vmatpush1.bf16.msra.mxu0 0
        %1612 = vmatprep.subr.bf16.mxu0 0
        %1613 = vmatpush1.bf16.msra.mxu0 0
        %1614 = vmatprep.subr.bf16.mxu0 0
        %1615 = vmatpush1.bf16.msra.mxu0 0
        %1616 = vmatprep.subr.bf16.mxu0 0
        %1617 = vmatpush1.bf16.msra.mxu0 0
        %1618 = vmatprep.subr.bf16.mxu0 0
        %1619 = vmatpush1.bf16.msra.mxu0 0
        %1620 = vmatprep.subr.bf16.mxu0 0
        %1621 = vmatpush1.bf16.msra.mxu0 0
        %1622 = vmatprep.subr.bf16.mxu0 0
        %1623 = vmatpush1.bf16.msra.mxu0 0
        %1624 = vmatprep.subr.bf16.mxu0 0
        %1625 = vmatpush1.bf16.msra.mxu0 0
        %1626 = vmatprep.subr.bf16.mxu0 0
        %1627 = vmatpush1.bf16.msra.mxu0 0
        %1628 = vmatprep.subr.bf16.mxu0 0
        %1629 = vmatpush1.bf16.msra.mxu0 0
        %1630 = vmatprep.subr.bf16.mxu0 0
        %1631 = vmatpush1.bf16.msra.mxu0 0
        %1632 = vmatprep.subr.bf16.mxu0 0
        %1633 = vmatpush1.bf16.msra.mxu0 0
        %1634 = vmatprep.subr.bf16.mxu0 0
        %1635 = vmatpush1.bf16.msra.mxu0 0
        %1636 = vmatprep.subr.bf16.mxu0 0
        %1637 = vmatpush1.bf16.msra.mxu0 0
        %1638 = vmatprep.subr.bf16.mxu0 0
        %1639 = vmatpush1.bf16.msra.mxu0 0
        %1640 = vmatprep.mubr.bf16.mxu0 0
        %1641 = vmatmul.mubr.bf16.gmra.mrb[0].mxu0 %v1603
        %v1642 = vpop.f32.mrb[0].mxu0
        %v1643 = vadd.f32 0.0, %v1642
        %v1644 = vpop.f32.mrb[0].mxu0
        %v1645 = vpop.f32.mrb[0].mxu0
        %v1646 = vadd.f32 0.0, %v1645
        %v1647 = vpop.f32.mrb[0].mxu0
        %1648 = vdwg.mxu0
        %v1649 = vadd.f32 %v1468, %v1643
        %v1650 = vadd.f32 %v1471, %v1646
        %1651 = vrot.lane.b32.xlu0 %v1117, 104
        %v1652 = vpop.permute.xlu0 %1651
        %1653 = vrot.lane.b32.xlu0 %v1117, 72
        %v1654 = vpop.permute.xlu0 %1653
        %v1656 = vsel %vm1124, %v1652, 0
        %v1659 = vsel %vm1124, %v1654, 0
        %1661 = vmatprep.subr.bf16.mxu0 0
        %1662 = vmatpush1.bf16.xpose.msra.mxu0 %v1659
        %1663 = vmatprep.subr.bf16.mxu0 0
        %1664 = vmatpush1.bf16.xpose.msra.mxu0 0
        %1665 = vmatprep.subr.bf16.mxu0 0
        %1666 = vmatpush1.bf16.xpose.msra.mxu0 0
        %1667 = vmatprep.subr.bf16.mxu0 0
        %1668 = vmatpush1.bf16.xpose.msra.mxu0 0
        %1669 = vmatprep.subr.bf16.mxu0 0
        %1670 = vmatpush1.bf16.xpose.msra.mxu0 0
        %1671 = vmatprep.subr.bf16.mxu0 0
        %1672 = vmatpush1.bf16.xpose.msra.mxu0 0
        %1673 = vmatprep.subr.bf16.mxu0 0
        %1674 = vmatpush1.bf16.xpose.msra.mxu0 0
        %1675 = vmatprep.subr.bf16.mxu0 0
        %1676 = vmatpush1.bf16.xpose.msra.mxu0 0
        %1677 = vmatprep.subr.bf16.mxu0 0
        %1678 = vmatpush1.bf16.xpose.msra.mxu0 0
        %1679 = vmatprep.subr.bf16.mxu0 0
        %1680 = vmatpush1.bf16.xpose.msra.mxu0 0
        %1681 = vmatprep.subr.bf16.mxu0 0
        %1682 = vmatpush1.bf16.xpose.msra.mxu0 0
        %1683 = vmatprep.subr.bf16.mxu0 0
        %1684 = vmatpush1.bf16.xpose.msra.mxu0 0
        %1685 = vmatprep.subr.bf16.mxu0 0
        %1686 = vmatpush1.bf16.xpose.msra.mxu0 0
        %1687 = vmatprep.subr.bf16.mxu0 0
        %1688 = vmatpush1.bf16.xpose.msra.mxu0 0
        %1689 = vmatprep.subr.bf16.mxu0 0
        %1690 = vmatpush1.bf16.xpose.msra.mxu0 0
        %1691 = vmatprep.subr.bf16.mxu0 0
        %1692 = vmatpush1.bf16.xpose.msra.mxu0 0
        %1693 = vmatprep.mubr.bf16.mxu0 0
        %1694 = vmatmul.mubr.bf16.gmra.mrb[0].mxu0 %v1656
        %v1695 = vpop.f32.mrb[0].mxu0
        %v1696 = vadd.f32 0.0, %v1695
        %v1697 = vpop.f32.mrb[0].mxu0
        %v1698 = vpop.f32.mrb[0].mxu0
        %v1699 = vadd.f32 0.0, %v1698
        %v1700 = vpop.f32.mrb[0].mxu0
        %1701 = vdwg.mxu0
        %v1702 = vmul.f32 %v1696, 0.35355338
        %v1703 = vmul.f32 %v1699, 0.35355338
        %v1704 = vsel %vm1175, %v1702, -1e+30
        %v1705 = vsel %vm1175, %v1703, -1e+30
        %v1706 = vsel %vm1178, %v1704, -inf
        %1707 = vmax.xlane.f32.xlu0 %v1706
        %v1708 = vpop.xlane.xlu0 %1707
        %v1709 = vsel %vm1178, %v1705, -inf
        %1710 = vmax.xlane.f32.xlu0 %v1709
        %v1711 = vpop.xlane.xlu0 %1710
        %v1712 = vsub.f32 %v1704, %v1708
        %v1713 = vsub.f32 %v1705, %v1711
        %v1714 = vmul.f32 %v1712, 1.442695
        %v1715 = vpow.pop %v1714
        %v1716 = vmul.f32 %v1713, 1.442695
        %v1717 = vpow.pop %v1716
        %v1718 = vsel %vm1178, %v1715, 0.0
        %1719 = vadd.xlane.f32.xlu0 %v1718
        %v1720 = vpop.xlane.xlu0 %1719
        %v1721 = vsel %vm1178, %v1717, 0.0
        %1722 = vadd.xlane.f32.xlu0 %v1721
        %v1723 = vpop.xlane.xlu0 %1722
        %v1724 = vrcp.pop %v1720
        %v1725 = vrcp.pop %v1723
        %v1726 = vmul.f32 %v1715, %v1724
        %v1727 = vmul.f32 %v1717, %v1725
        %v1728 = vpack.c.bf16 %v1727, %v1726
        %1729 = vrot.lane.b32.xlu0 %v1117, 40
        %v1730 = vpop.permute.xlu0 %1729
        %v1733 = vsel %vm1178, %v1728, 0
        %1735 = vmatprep.subr.bf16.mxu0 0
        %1736 = vmatpush1.bf16.msra.mxu0 %v1730
        %1737 = vmatprep.subr.bf16.mxu0 0
        %1738 = vmatpush1.bf16.msra.mxu0 0
        %1739 = vmatprep.subr.bf16.mxu0 0
        %1740 = vmatpush1.bf16.msra.mxu0 0
        %1741 = vmatprep.subr.bf16.mxu0 0
        %1742 = vmatpush1.bf16.msra.mxu0 0
        %1743 = vmatprep.subr.bf16.mxu0 0
        %1744 = vmatpush1.bf16.msra.mxu0 0
        %1745 = vmatprep.subr.bf16.mxu0 0
        %1746 = vmatpush1.bf16.msra.mxu0 0
        %1747 = vmatprep.subr.bf16.mxu0 0
        %1748 = vmatpush1.bf16.msra.mxu0 0
        %1749 = vmatprep.subr.bf16.mxu0 0
        %1750 = vmatpush1.bf16.msra.mxu0 0
        %1751 = vmatprep.subr.bf16.mxu0 0
        %1752 = vmatpush1.bf16.msra.mxu0 0
        %1753 = vmatprep.subr.bf16.mxu0 0
        %1754 = vmatpush1.bf16.msra.mxu0 0
        %1755 = vmatprep.subr.bf16.mxu0 0
        %1756 = vmatpush1.bf16.msra.mxu0 0
        %1757 = vmatprep.subr.bf16.mxu0 0
        %1758 = vmatpush1.bf16.msra.mxu0 0
        %1759 = vmatprep.subr.bf16.mxu0 0
        %1760 = vmatpush1.bf16.msra.mxu0 0
        %1761 = vmatprep.subr.bf16.mxu0 0
        %1762 = vmatpush1.bf16.msra.mxu0 0
        %1763 = vmatprep.subr.bf16.mxu0 0
        %1764 = vmatpush1.bf16.msra.mxu0 0
        %1765 = vmatprep.subr.bf16.mxu0 0
        %1766 = vmatpush1.bf16.msra.mxu0 0
        %1767 = vmatprep.mubr.bf16.mxu0 0
        %1768 = vmatmul.mubr.bf16.gmra.mrb[0].mxu0 %v1733
        %v1769 = vpop.f32.mrb[0].mxu0
        %v1770 = vadd.f32 0.0, %v1769
        %v1771 = vpop.f32.mrb[0].mxu0
        %v1772 = vpop.f32.mrb[0].mxu0
        %v1773 = vadd.f32 0.0, %v1772
        %v1774 = vpop.f32.mrb[0].mxu0
        %1775 = vdwg.mxu0
        %v1776 = vpack.c.bf16 %v1773, %v1770
        %s1777 = scalar_lea.vmem %s9, 12
        %v1778 = vld [vmem:[%s1777] sm:$0xf]
        %v1780 = vsel %vm1124, %v1776, 0
        %v1783 = vsel %vm1382, %v1778, 0
        %1785 = vmatprep.subr.bf16.mxu0 0
        %1786 = vmatpush1.bf16.msra.mxu0 %v1783
        %1787 = vmatprep.subr.bf16.mxu0 0
        %1788 = vmatpush1.bf16.msra.mxu0 0
        %1789 = vmatprep.subr.bf16.mxu0 0
        %1790 = vmatpush1.bf16.msra.mxu0 0
        %1791 = vmatprep.subr.bf16.mxu0 0
        %1792 = vmatpush1.bf16.msra.mxu0 0
        %1793 = vmatprep.subr.bf16.mxu0 0
        %1794 = vmatpush1.bf16.msra.mxu0 0
        %1795 = vmatprep.subr.bf16.mxu0 0
        %1796 = vmatpush1.bf16.msra.mxu0 0
        %1797 = vmatprep.subr.bf16.mxu0 0
        %1798 = vmatpush1.bf16.msra.mxu0 0
        %1799 = vmatprep.subr.bf16.mxu0 0
        %1800 = vmatpush1.bf16.msra.mxu0 0
        %1801 = vmatprep.subr.bf16.mxu0 0
        %1802 = vmatpush1.bf16.msra.mxu0 0
        %1803 = vmatprep.subr.bf16.mxu0 0
        %1804 = vmatpush1.bf16.msra.mxu0 0
        %1805 = vmatprep.subr.bf16.mxu0 0
        %1806 = vmatpush1.bf16.msra.mxu0 0
        %1807 = vmatprep.subr.bf16.mxu0 0
        %1808 = vmatpush1.bf16.msra.mxu0 0
        %1809 = vmatprep.subr.bf16.mxu0 0
        %1810 = vmatpush1.bf16.msra.mxu0 0
        %1811 = vmatprep.subr.bf16.mxu0 0
        %1812 = vmatpush1.bf16.msra.mxu0 0
        %1813 = vmatprep.subr.bf16.mxu0 0
        %1814 = vmatpush1.bf16.msra.mxu0 0
        %1815 = vmatprep.subr.bf16.mxu0 0
        %1816 = vmatpush1.bf16.msra.mxu0 0
        %1817 = vmatprep.mubr.bf16.mxu0 0
        %1818 = vmatmul.mubr.bf16.gmra.mrb[0].mxu0 %v1780
        %v1819 = vpop.f32.mrb[0].mxu0
        %v1820 = vadd.f32 0.0, %v1819
        %v1821 = vpop.f32.mrb[0].mxu0
        %v1822 = vpop.f32.mrb[0].mxu0
        %v1823 = vadd.f32 0.0, %v1822
        %v1824 = vpop.f32.mrb[0].mxu0
        %1825 = vdwg.mxu0
        %v1826 = vadd.f32 %v1649, %v1820
        %v1827 = vadd.f32 %v1650, %v1823
        %v1828 = vadd.f32 %v1009, %v1826
        %v1829 = vadd.f32 %v1010, %v1827
        %v1830 = vld [vmem:[#allocation14] sm:$0x1]
        %v1832 = vlaneseq
        %v1833 = vshrl.u32 %v1832, 7
        %v1834 = vsub.s32 0, %v1833
        %v1835 = vrot.slane %v1830, %v1834
        %v1837 = vadd.f32 %v1828, %v1835
        %v1838 = vadd.f32 %v1829, %v1835
        %v1839 = vld [vmem:[#allocation16] sm:$0x1]
        %v1840 = vld [vmem:[#allocation17] sm:$0x1]
        %v1841 = vsel %vm944, %v1837, 0.0
        %1842 = vadd.xlane.f32.xlu0 %v1841
        %v1843 = vpop.xlane.xlu0 %1842
        %v1844 = vsel %vm944, %v1838, 0.0
        %1845 = vadd.xlane.f32.xlu0 %v1844
        %v1846 = vpop.xlane.xlu0 %1845
        %v1847 = vmul.f32 %v1843, %v1019
        %v1848 = vmul.f32 %v1846, %v1019
        %v1849 = vsub.f32 %v1837, %v1847
        %v1850 = vsub.f32 %v1838, %v1848
        %v1851 = vmul.f32 %v1849, %v1849
        %v1852 = vmul.f32 %v1850, %v1850
        %v1853 = vsel %vm944, %v1851, 0.0
        %1854 = vadd.xlane.f32.xlu0 %v1853
        %v1855 = vpop.xlane.xlu0 %1854
        %v1856 = vsel %vm944, %v1852, 0.0
        %1857 = vadd.xlane.f32.xlu0 %v1856
        %v1858 = vpop.xlane.xlu0 %1857
        %v1859 = vmul.f32 %v1855, %v1019
        %v1860 = vmul.f32 %v1858, %v1019
        %v1861 = vadd.f32 %v1859, 1e-05
        %v1862 = vadd.f32 %v1860, 1e-05
        %v1863 = vrsqrt.pop %v1861
        %v1864 = vrsqrt.pop %v1862
        %v1865 = vmul.f32 %v1849, %v1863
        %v1866 = vmul.f32 %v1850, %v1864
        %v1868 = vlaneseq
        %v1869 = vshrl.u32 %v1868, 7
        %v1870 = vsub.s32 0, %v1869
        %v1871 = vrot.slane %v1839, %v1870
        %v1873 = vmul.f32 %v1865, %v1871
        %v1874 = vmul.f32 %v1866, %v1871
        %v1876 = vlaneseq
        %v1877 = vshrl.u32 %v1876, 7
        %v1878 = vsub.s32 0, %v1877
        %v1879 = vrot.slane %v1840, %v1878
        %v1881 = vadd.f32 %v1873, %v1879
        %v1882 = vadd.f32 %v1874, %v1879
        %v1883 = vpack.c.bf16 %v1882, %v1881
        %v1884 = vld [vmem:[%s13] sm:$0xf]
        %v1885 = vld [vmem:[%s13 + $0x4] sm:$0xf]
        %v1886 = vld [vmem:[%s13 + $0x8] sm:$0xf]
        %v1887 = vld [vmem:[%s13 + $0xc] sm:$0xf]
        %v1888 = vld [vmem:[#allocation19] sm:$0x1]
        %v1890 = vlaneseq
        %v1891 = vshrl.u32 %v1890, 7
        %v1892 = vsub.s32 0, %v1891
        %v1893 = vrot.slane %v1888, %v1892
        %v1899 = vunpack.c.l.b16 %v1884
        %v1900 = vunpack.c.l.b16 %v1885
        %v1901 = vunpack.c.l.b16 %v1886
        %v1902 = vunpack.c.l.b16 %v1887
        %v1903 = vpack.c.b16 %v1900, %v1899
        %v1904 = vpack.c.b16 %v1902, %v1901
        %v1908 = vsel %vm944, %v1883, 0
        %1910 = vmatprep.subr.bf16.mxu0 0
        %1911 = vmatpush1.bf16.msra.mxu0 %v1903
        %1912 = vmatprep.subr.bf16.mxu0 0
        %1913 = vmatpush1.bf16.msra.mxu0 %v1904
        %1914 = vmatprep.subr.bf16.mxu0 0
        %1915 = vmatpush1.bf16.msra.mxu0 0
        %1916 = vmatprep.subr.bf16.mxu0 0
        %1917 = vmatpush1.bf16.msra.mxu0 0
        %1918 = vmatprep.subr.bf16.mxu0 0
        %1919 = vmatpush1.bf16.msra.mxu0 0
        %1920 = vmatprep.subr.bf16.mxu0 0
        %1921 = vmatpush1.bf16.msra.mxu0 0
        %1922 = vmatprep.subr.bf16.mxu0 0
        %1923 = vmatpush1.bf16.msra.mxu0 0
        %1924 = vmatprep.subr.bf16.mxu0 0
        %1925 = vmatpush1.bf16.msra.mxu0 0
        %1926 = vmatprep.subr.bf16.mxu0 0
        %1927 = vmatpush1.bf16.msra.mxu0 0
        %1928 = vmatprep.subr.bf16.mxu0 0
        %1929 = vmatpush1.bf16.msra.mxu0 0
        %1930 = vmatprep.subr.bf16.mxu0 0
        %1931 = vmatpush1.bf16.msra.mxu0 0
        %1932 = vmatprep.subr.bf16.mxu0 0
        %1933 = vmatpush1.bf16.msra.mxu0 0
        %1934 = vmatprep.subr.bf16.mxu0 0
        %1935 = vmatpush1.bf16.msra.mxu0 0
        %1936 = vmatprep.subr.bf16.mxu0 0
        %1937 = vmatpush1.bf16.msra.mxu0 0
        %1938 = vmatprep.subr.bf16.mxu0 0
        %1939 = vmatpush1.bf16.msra.mxu0 0
        %1940 = vmatprep.subr.bf16.mxu0 0
        %1941 = vmatpush1.bf16.msra.mxu0 0
        %1942 = vmatprep.mubr.bf16.mxu0 0
        %1943 = vmatmul.mubr.bf16.gmra.mrb[0].mxu0 %v1908
        %v1944 = vpop.f32.mrb[0].mxu0
        %v1945 = vadd.f32 %v1893, %v1944
        %v1946 = vpop.f32.mrb[0].mxu0
        %v1947 = vpop.f32.mrb[0].mxu0
        %v1948 = vadd.f32 %v1893, %v1947
        %v1949 = vpop.f32.mrb[0].mxu0
        %1950 = vdwg.mxu0
        %v1951 = vmul.f32 %v1945, %v1945
        %v1952 = vmul.f32 %v1948, %v1948
        %v1953 = vmul.f32 %v1945, %v1951
        %v1954 = vmul.f32 %v1948, %v1952
        %v1955 = vmul.f32 %v1953, 0.044715
        %v1956 = vmul.f32 %v1954, 0.044715
        %v1957 = vadd.f32 %v1945, %v1955
        %v1958 = vadd.f32 %v1948, %v1956
        %v1959 = vmul.f32 %v1957, 0.7978846
        %v1960 = vmul.f32 %v1958, 0.7978846
        %v1961 = vtanh.pop %v1959
        %v1962 = vtanh.pop %v1960
        %v1963 = vadd.f32 %v1961, 1.0
        %v1964 = vadd.f32 %v1962, 1.0
        %v1965 = vmul.f32 %v1963, 0.5
        %v1966 = vmul.f32 %v1964, 0.5
        %v1967 = vmul.f32 %v1945, %v1965
        %v1968 = vmul.f32 %v1948, %v1966
        %v1969 = vpack.c.bf16 %v1968, %v1967
        %v1970 = vld [vmem:[%s15] sm:$0xf]
        %v1971 = vld [vmem:[%s15 + $0x4] sm:$0xf]
        %v1972 = vld [vmem:[%s15 + $0x8] sm:$0xf]
        %v1973 = vld [vmem:[%s15 + $0xc] sm:$0xf]
        %v1974 = vld [vmem:[%s15 + $0x10] sm:$0xf]
        %v1975 = vld [vmem:[%s15 + $0x14] sm:$0xf]
        %v1976 = vld [vmem:[%s15 + $0x18] sm:$0xf]
        %v1977 = vld [vmem:[%s15 + $0x1c] sm:$0xf]
        %v1978 = vld [vmem:[#allocation20] sm:$0x1]
        %v1980 = vlaneseq
        %v1981 = vshrl.u32 %v1980, 7
        %v1982 = vsub.s32 0, %v1981
        %v1983 = vrot.slane %v1978, %v1982
        %v1993 = vunpack.c.l.b16 %v1970
        %v1994 = vunpack.c.l.b16 %v1971
        %v1995 = vunpack.c.l.b16 %v1972
        %v1996 = vunpack.c.l.b16 %v1973
        %v1997 = vunpack.c.l.b16 %v1974
        %v1998 = vunpack.c.l.b16 %v1975
        %v1999 = vunpack.c.l.b16 %v1976
        %v2000 = vunpack.c.l.b16 %v1977
        %v2001 = vpack.c.b16 %v1994, %v1993
        %v2002 = vpack.c.b16 %v1996, %v1995
        %v2003 = vpack.c.b16 %v1998, %v1997
        %v2004 = vpack.c.b16 %v2000, %v1999
        %vm2009 = vcmask 523264
        %v2011 = vsel %vm2009, %v1969, 0
        %2013 = vmatprep.subr.bf16.mxu0 0
        %2014 = vmatpush1.bf16.msra.mxu0 %v2001
        %2015 = vmatprep.subr.bf16.mxu0 0
        %2016 = vmatpush1.bf16.msra.mxu0 %v2002
        %2017 = vmatprep.subr.bf16.mxu0 0
        %2018 = vmatpush1.bf16.msra.mxu0 %v2003
        %2019 = vmatprep.subr.bf16.mxu0 0
        %2020 = vmatpush1.bf16.msra.mxu0 %v2004
        %2021 = vmatprep.subr.bf16.mxu0 0
        %2022 = vmatpush1.bf16.msra.mxu0 0
        %2023 = vmatprep.subr.bf16.mxu0 0
        %2024 = vmatpush1.bf16.msra.mxu0 0
        %2025 = vmatprep.subr.bf16.mxu0 0
        %2026 = vmatpush1.bf16.msra.mxu0 0
        %2027 = vmatprep.subr.bf16.mxu0 0
        %2028 = vmatpush1.bf16.msra.mxu0 0
        %2029 = vmatprep.subr.bf16.mxu0 0
        %2030 = vmatpush1.bf16.msra.mxu0 0
        %2031 = vmatprep.subr.bf16.mxu0 0
        %2032 = vmatpush1.bf16.msra.mxu0 0
        %2033 = vmatprep.subr.bf16.mxu0 0
        %2034 = vmatpush1.bf16.msra.mxu0 0
        %2035 = vmatprep.subr.bf16.mxu0 0
        %2036 = vmatpush1.bf16.msra.mxu0 0
        %2037 = vmatprep.subr.bf16.mxu0 0
        %2038 = vmatpush1.bf16.msra.mxu0 0
        %2039 = vmatprep.subr.bf16.mxu0 0
        %2040 = vmatpush1.bf16.msra.mxu0 0
        %2041 = vmatprep.subr.bf16.mxu0 0
        %2042 = vmatpush1.bf16.msra.mxu0 0
        %2043 = vmatprep.subr.bf16.mxu0 0
        %2044 = vmatpush1.bf16.msra.mxu0 0
        %2045 = vmatprep.mubr.bf16.mxu0 0
        %2046 = vmatmul.mubr.bf16.gmra.mrb[0].mxu0 %v2011
        %v2047 = vpop.f32.mrb[0].mxu0
        %v2048 = vadd.f32 %v1983, %v2047
        %v2049 = vpop.f32.mrb[0].mxu0
        %v2050 = vpop.f32.mrb[0].mxu0
        %v2051 = vadd.f32 %v1983, %v2050
        %v2052 = vpop.f32.mrb[0].mxu0
        %2053 = vdwg.mxu0
        %v2054 = vadd.f32 %v1837, %v2048
        %v2055 = vadd.f32 %v1838, %v2051
        %v2056 = vld [vmem:[#allocation22] sm:$0x1]
        %v2057 = vld [vmem:[%s18] sm:$0x1]
        %v2058 = vsel %vm944, %v2054, 0.0
        %2059 = vadd.xlane.f32.xlu0 %v2058
        %v2060 = vpop.xlane.xlu0 %2059
        %v2061 = vsel %vm944, %v2055, 0.0
        %2062 = vadd.xlane.f32.xlu0 %v2061
        %v2063 = vpop.xlane.xlu0 %2062
        %v2064 = vmul.f32 %v2060, %v1019
        %v2065 = vmul.f32 %v2063, %v1019
        %v2066 = vsub.f32 %v2054, %v2064
        %v2067 = vsub.f32 %v2055, %v2065
        %v2068 = vmul.f32 %v2066, %v2066
        %v2069 = vmul.f32 %v2067, %v2067
        %v2070 = vsel %vm944, %v2068, 0.0
        %2071 = vadd.xlane.f32.xlu0 %v2070
        %v2072 = vpop.xlane.xlu0 %2071
        %v2073 = vsel %vm944, %v2069, 0.0
        %2074 = vadd.xlane.f32.xlu0 %v2073
        %v2075 = vpop.xlane.xlu0 %2074
        %v2076 = vmul.f32 %v2072, %v1019
        %v2077 = vmul.f32 %v2075, %v1019
        %v2078 = vadd.f32 %v2076, 1e-05
        %v2079 = vadd.f32 %v2077, 1e-05
        %v2080 = vrsqrt.pop %v2078
        %v2081 = vrsqrt.pop %v2079
        %v2082 = vmul.f32 %v2066, %v2080
        %v2083 = vmul.f32 %v2067, %v2081
        %v2085 = vlaneseq
        %v2086 = vshrl.u32 %v2085, 7
        %v2087 = vsub.s32 0, %v2086
        %v2088 = vrot.slane %v2056, %v2087
        %v2090 = vmul.f32 %v2082, %v2088
        %v2091 = vmul.f32 %v2083, %v2088
        %v2093 = vlaneseq
        %v2094 = vshrl.u32 %v2093, 7
        %v2095 = vsub.s32 0, %v2094
        %v2096 = vrot.slane %v2057, %v2095
        %v2098 = vadd.f32 %v2090, %v2096
        %v2099 = vadd.f32 %v2091, %v2096
        %vm2100 = vcmp.lt.s32.totalorder %v990, 9
        %vm2101 = vcmp.lt.s32.totalorder %v991, 9
        %v2102 = vsel %vm2100, 1, 0
        %v2103 = vsel %vm2101, 1, 0
        %v2104 = vcvt.s32.f32 %v2102
        %v2105 = vcvt.s32.f32 %v2103
        %v2106 = vmul.f32 %v2098, %v2104
        %v2107 = vmul.f32 %v2099, %v2105
        %v2108 = vsel %vm944, %v2106, 0.0
        %v2109 = vsel %vm944, %v2107, 0.0
        %v2110 = vadd.f32 %v2108, %v2109
        %v2111 = vrot.slane %v2110, 4
        %v2112 = vadd.f32 %v2110, %v2111
        %v2113 = vrot.slane %v2112, 2
        %v2114 = vadd.f32 %v2112, %v2113
        %v2115 = vrot.slane %v2114, 1
        %v2116 = vadd.f32 %v2114, %v2115
        %v2117 = vmul.f32 %v2116, 0.11111111
        %v2118 = vpack.c.bf16 %v2117, %v2117
        %v2119 = vld [vmem:[%s19] sm:$0xf]
        %v2120 = vld [vmem:[%s19 + $0x4] sm:$0xf]
        %v2121 = vld [vmem:[%s19 + $0x8] sm:$0xf]
        %v2122 = vld [vmem:[%s19 + $0xc] sm:$0xf]
        %v2127 = vunpack.c.l.b16 %v2119
        %v2128 = vunpack.c.l.b16 %v2120
        %v2129 = vunpack.c.l.b16 %v2121
        %v2130 = vunpack.c.l.b16 %v2122
        %v2131 = vpack.c.b16 %v2128, %v2127
        %v2132 = vpack.c.b16 %v2130, %v2129
        %v2136 = vsel %vm944, %v2118, 0
        %2138 = vmatprep.subr.bf16.mxu0 0
        %2139 = vmatpush1.bf16.msra.mxu0 %v2131
        %2140 = vmatprep.subr.bf16.mxu0 0
        %2141 = vmatpush1.bf16.msra.mxu0 %v2132
        %2142 = vmatprep.subr.bf16.mxu0 0
        %2143 = vmatpush1.bf16.msra.mxu0 0
        %2144 = vmatprep.subr.bf16.mxu0 0
        %2145 = vmatpush1.bf16.msra.mxu0 0
        %2146 = vmatprep.subr.bf16.mxu0 0
        %2147 = vmatpush1.bf16.msra.mxu0 0
        %2148 = vmatprep.subr.bf16.mxu0 0
        %2149 = vmatpush1.bf16.msra.mxu0 0
        %2150 = vmatprep.subr.bf16.mxu0 0
        %2151 = vmatpush1.bf16.msra.mxu0 0
        %2152 = vmatprep.subr.bf16.mxu0 0
        %2153 = vmatpush1.bf16.msra.mxu0 0
        %2154 = vmatprep.subr.bf16.mxu0 0
        %2155 = vmatpush1.bf16.msra.mxu0 0
        %2156 = vmatprep.subr.bf16.mxu0 0
        %2157 = vmatpush1.bf16.msra.mxu0 0
        %2158 = vmatprep.subr.bf16.mxu0 0
        %2159 = vmatpush1.bf16.msra.mxu0 0
        %2160 = vmatprep.subr.bf16.mxu0 0
        %2161 = vmatpush1.bf16.msra.mxu0 0
        %2162 = vmatprep.subr.bf16.mxu0 0
        %2163 = vmatpush1.bf16.msra.mxu0 0
        %2164 = vmatprep.subr.bf16.mxu0 0
        %2165 = vmatpush1.bf16.msra.mxu0 0
        %2166 = vmatprep.subr.bf16.mxu0 0
        %2167 = vmatpush1.bf16.msra.mxu0 0
        %2168 = vmatprep.subr.bf16.mxu0 0
        %2169 = vmatpush1.bf16.msra.mxu0 0
        %2170 = vmatprep.mubr.bf16.mxu0 0
        %2171 = vmatmul.mubr.bf16.gmra.mrb[0].mxu0 %v2136
        %v2172 = vpop.f32.mrb[0].mxu0
        %v2173 = vadd.f32 0.0, %v2172
        %v2174 = vpop.f32.mrb[0].mxu0
        %v2175 = vpop.f32.mrb[0].mxu0
        %v2176 = vpop.f32.mrb[0].mxu0
        %2177 = vdwg.mxu0
        %v2178 = vld [vmem:[#allocation2] sm:$0xff]
        %v2179 = vpack.c.bf16 %v2178, %v2178
        %v2180 = vld [vmem:[#allocation23] sm:$0xf]
        %v2181 = vld [vmem:[#allocation23 + $0x4] sm:$0xf]
        %v2182 = vld [vmem:[#allocation23 + $0x8] sm:$0xf]
        %v2183 = vld [vmem:[#allocation23 + $0xc] sm:$0xf]
        %v2188 = vunpack.c.l.b16 %v2180
        %v2189 = vunpack.c.l.b16 %v2181
        %v2190 = vunpack.c.l.b16 %v2182
        %v2191 = vunpack.c.l.b16 %v2183
        %v2192 = vpack.c.b16 %v2189, %v2188
        %v2193 = vpack.c.b16 %v2191, %v2190
        %v2197 = vsel %vm944, %v2179, 0
        %2199 = vmatprep.subr.bf16.mxu0 0
        %2200 = vmatpush1.bf16.msra.mxu0 %v2192
        %2201 = vmatprep.subr.bf16.mxu0 0
        %2202 = vmatpush1.bf16.msra.mxu0 %v2193
        %2203 = vmatprep.subr.bf16.mxu0 0
        %2204 = vmatpush1.bf16.msra.mxu0 0
        %2205 = vmatprep.subr.bf16.mxu0 0
        %2206 = vmatpush1.bf16.msra.mxu0 0
        %2207 = vmatprep.subr.bf16.mxu0 0
        %2208 = vmatpush1.bf16.msra.mxu0 0
        %2209 = vmatprep.subr.bf16.mxu0 0
        %2210 = vmatpush1.bf16.msra.mxu0 0
        %2211 = vmatprep.subr.bf16.mxu0 0
        %2212 = vmatpush1.bf16.msra.mxu0 0
        %2213 = vmatprep.subr.bf16.mxu0 0
        %2214 = vmatpush1.bf16.msra.mxu0 0
        %2215 = vmatprep.subr.bf16.mxu0 0
        %2216 = vmatpush1.bf16.msra.mxu0 0
        %2217 = vmatprep.subr.bf16.mxu0 0
        %2218 = vmatpush1.bf16.msra.mxu0 0
        %2219 = vmatprep.subr.bf16.mxu0 0
        %2220 = vmatpush1.bf16.msra.mxu0 0
        %2221 = vmatprep.subr.bf16.mxu0 0
        %2222 = vmatpush1.bf16.msra.mxu0 0
        %2223 = vmatprep.subr.bf16.mxu0 0
        %2224 = vmatpush1.bf16.msra.mxu0 0
        %2225 = vmatprep.subr.bf16.mxu0 0
        %2226 = vmatpush1.bf16.msra.mxu0 0
        %2227 = vmatprep.subr.bf16.mxu0 0
        %2228 = vmatpush1.bf16.msra.mxu0 0
        %2229 = vmatprep.subr.bf16.mxu0 0
        %2230 = vmatpush1.bf16.msra.mxu0 0
        %2231 = vmatprep.mubr.bf16.mxu0 0
        %2232 = vmatmul.mubr.bf16.gmra.mrb[0].mxu0 %v2197
        %v2233 = vpop.f32.mrb[0].mxu0
        %v2234 = vadd.f32 0.0, %v2233
        %v2235 = vpop.f32.mrb[0].mxu0
        %v2236 = vpop.f32.mrb[0].mxu0
        %v2237 = vpop.f32.mrb[0].mxu0
        %2238 = vdwg.mxu0
        %v2239 = vlaneseq
        %v2240 = vshrl.u32 %v2239, 7
        %v2241 = vsub.s32 0, %v2240
        %v2242 = vrot.slane %v2173, %v2241
        %v2243 = vadd.f32 %v2242, %v2234
        %v2244 = vld [vmem:[%s21] sm:$0x1]
        %v2246 = vlaneseq
        %v2247 = vshrl.u32 %v2246, 7
        %v2248 = vsub.s32 0, %v2247
        %v2249 = vrot.slane %v2244, %v2248
        %v2251 = vadd.f32 %v2243, %v2249
        %v2252 = vmax.f32 %v2251, 0.0
        %v2253 = vsel %vm944, %v2252, 0.0
        %v2254 = vrot.slane %v2253, 4
        %v2255 = vadd.f32 %v2253, %v2254
        %v2256 = vrot.slane %v2255, 2
        %v2257 = vadd.f32 %v2255, %v2256
        %v2258 = vrot.slane %v2257, 1
        %v2259 = vadd.f32 %v2257, %v2258
        %v2260 = vmul.f32 %v2259, 0.125
        %v2261 = vpack.c.bf16 %v2260, %v2260
        %v2262 = vld [vmem:[%s22] sm:$0xf]
        %v2263 = vld [vmem:[%s22 + $0x4] sm:$0xf]
        %v2264 = vld [vmem:[%s22 + $0x8] sm:$0xf]
        %v2265 = vld [vmem:[%s22 + $0xc] sm:$0xf]
        %v2266 = vld [vmem:[%s23] sm:$0x1]
        %v2271 = vunpack.c.l.b16 %v2262
        %v2272 = vunpack.c.l.b16 %v2263
        %v2273 = vunpack.c.l.b16 %v2264
        %v2274 = vunpack.c.l.b16 %v2265
        %v2275 = vpack.c.b16 %v2272, %v2271
        %v2276 = vpack.c.b16 %v2274, %v2273
        %v2280 = vsel %vm944, %v2261, 0
        %2282 = vmatprep.subr.bf16.mxu0 0
        %2283 = vmatpush1.bf16.msra.mxu0 %v2275
        %2284 = vmatprep.subr.bf16.mxu0 0
        %2285 = vmatpush1.bf16.msra.mxu0 %v2276
        %2286 = vmatprep.subr.bf16.mxu0 0
        %2287 = vmatpush1.bf16.msra.mxu0 0
        %2288 = vmatprep.subr.bf16.mxu0 0
        %2289 = vmatpush1.bf16.msra.mxu0 0
        %2290 = vmatprep.subr.bf16.mxu0 0
        %2291 = vmatpush1.bf16.msra.mxu0 0
        %2292 = vmatprep.subr.bf16.mxu0 0
        %2293 = vmatpush1.bf16.msra.mxu0 0
        %2294 = vmatprep.subr.bf16.mxu0 0
        %2295 = vmatpush1.bf16.msra.mxu0 0
        %2296 = vmatprep.subr.bf16.mxu0 0
        %2297 = vmatpush1.bf16.msra.mxu0 0
        %2298 = vmatprep.subr.bf16.mxu0 0
        %2299 = vmatpush1.bf16.msra.mxu0 0
        %2300 = vmatprep.subr.bf16.mxu0 0
        %2301 = vmatpush1.bf16.msra.mxu0 0
        %2302 = vmatprep.subr.bf16.mxu0 0
        %2303 = vmatpush1.bf16.msra.mxu0 0
        %2304 = vmatprep.subr.bf16.mxu0 0
        %2305 = vmatpush1.bf16.msra.mxu0 0
        %2306 = vmatprep.subr.bf16.mxu0 0
        %2307 = vmatpush1.bf16.msra.mxu0 0
        %2308 = vmatprep.subr.bf16.mxu0 0
        %2309 = vmatpush1.bf16.msra.mxu0 0
        %2310 = vmatprep.subr.bf16.mxu0 0
        %2311 = vmatpush1.bf16.msra.mxu0 0
        %2312 = vmatprep.subr.bf16.mxu0 0
        %2313 = vmatpush1.bf16.msra.mxu0 0
        %2314 = vmatprep.mubr.bf16.mxu0 0
        %2315 = vmatmul.mubr.bf16.gmra.mrb[0].mxu0 %v2280
        %v2316 = vpop.f32.mrb[0].mxu0
        %v2317 = vadd.f32 %v2266, %v2316
        %v2318 = vpop.f32.mrb[0].mxu0
        %v2319 = vpop.f32.mrb[0].mxu0
        %v2320 = vpop.f32.mrb[0].mxu0
        %2321 = vdwg.mxu0
        %2322 = vst [vmem:[%s911] sm:$0x1] %v2317
        %s2323 = sand.u32 %s563, 1
        %s2324 = scalar_lea.sflag [#allocation4], %s2323
        %s2325 = sand.u32 %s563, 1
        %s2326 = scalar_lea.vmem [#allocation25], %s2325
        // Predicated region
        $region173: #{tpu_custom_call.1} parent=115 // pred_check
          %p2327 = pneg %p573
        $region174: #{tpu_custom_call.1} parent=115 // pred_check_branch
          %2329 = sbr.rel (%p2327) target = $region176
        $region175: #{tpu_custom_call.1} parent=115 // pred_region
          %s2331 = ssub.s32 16, 16
          %2332 = vsyncadd %s2324, %s2331
          %s2333 = smul.addr %s46, 16
          %s2334 = scalar_lea.hbm %s24, %s2333
          %s2336 = sshll.u32 %s2326, 4
          %s2337 = int_to_ptr.vmem [resolvable:$true] %s2336
          %2339 = dma.vmem_to_hbm [thread:$0]  %s2337, 16, %s2334, %s2324
        $region176: #{tpu_custom_call.1} parent=115 // pred_fallthru
          _
      $region116: #{tpu_custom_call.1} parent=5 // pred_fallthru
        _
      %p2340 = scmp.le.s32.totalorder 2, %s41
      // Predicated region
      $region177: #{tpu_custom_call.1} parent=5 // pred_check
        %p2341 = pneg %p2340
      $region178: #{tpu_custom_call.1} parent=5 // pred_check_branch
        %2343 = sbr.rel (%p2341) target = $region180
      $region179: #{tpu_custom_call.1} parent=5 // pred_region
        %s2344 = ssub.s32 %s41, 2
        // Predicated region
        $region181: #{tpu_custom_call.1} parent=179 // pred_check
          %p2345 = pneg %p579
        $region182: #{tpu_custom_call.1} parent=179 // pred_check_branch
          %2347 = sbr.rel (%p2345) target = $region184
        $region183: #{tpu_custom_call.1} parent=179 // pred_region
          %s2348 = sand.u32 %s564, 1
          %s2349 = scalar_lea.sflag [#allocation4], %s2348
          %s2350 = sand.u32 %s564, 1
          %s2351 = scalar_lea.vmem [#allocation25], %s2350
          %2352 = dma.done %s2349, 16
        $region184: #{tpu_custom_call.1} parent=179 // pred_fallthru
          _
      $region180: #{tpu_custom_call.1} parent=5 // pred_fallthru
        _
    $region6: #{tpu_custom_call.1} parent=1 // loop_footer
      %s45 = sadd.s32 1, %s41
    $region7: #{tpu_custom_call.1} parent=1 // loop_footer_branch
      %40 = sbr.rel target = $region3
    $region8: #{tpu_custom_call.1} parent=1 // loop_exit
      _
    %2353 = vsyncpa [#allocation3], 1
    %s2354 = scalar_lea.sflag [#allocation3], 1
    %2355 = vsyncpa %s2354, 1
    %2356 = vsyncpa [#allocation6], 1
    %2357 = vsyncpa [#allocation9], 1
    %2358 = vsyncpa [#allocation12], 1
    %2359 = vsyncpa [#allocation15], 1
    %2360 = vsyncpa [#allocation18], 1
    %2361 = vsyncpa [#allocation21], 1
    %2362 = vsyncpa [#allocation24], 1
    %2363 = vsyncpa [#allocation4], 1
    %s2364 = scalar_lea.sflag [#allocation4], 1
    %2365 = vsyncpa %s2364, 1

</llo_original>
